<compile_context>
chip_gen: v7x
topology: tpu7x:2x2x1
jax: 0.10.0
libtpu: 0.0.40
codegen_flags: <defaults>
</compile_context>

<pallas_src>
import functools
import math

import jax
import jax.numpy as jnp
from jax import lax
from jax.experimental import pallas as pl
from jax.experimental.pallas import tpu as pltpu

HIDDEN = 128          # hidden_size  (multiple of 128 -> lane-dense)
FFN = 512             # ffn_size     (multiple of 128 -> lane-aligned bias slices)
MAX_ROW_TILE = 512    # upper bound on rows (tokens) per grid step
MIN_ROW_TILE = 128
INV_SQRT2 = 1.0 / math.sqrt(2.0)


def _choose_row_tile(n, max_tile=MAX_ROW_TILE, min_tile=MIN_ROW_TILE, target_steps=4):
    """Largest power-of-two-ish tile <= max_tile keeping >= target_steps grid steps."""
    tile = max_tile
    while tile > min_tile and pl.cdiv(n, tile) < target_steps:
        tile //= 2
    return max(tile, min_tile)


def ffn_kernel(x_ref, w1_ref, w2_ref, b_ref, out_ref, *, approximate_gelu=False):
    # x_ref: [row_tile, H] (f32)   w1_ref: [H, F]   w2_ref: [F, H]  (MXU dtype)
    # b_ref: [1, F+H] (f32)        out_ref: [row_tile, H]
    F = w1_ref.shape[1]

    # layer 1 (+ bias): bf16 operands, f32 accumulation on the MXU.
    x = x_ref[...].astype(w1_ref.dtype)
    z = jnp.dot(x, w1_ref[...], preferred_element_type=jnp.float32) + b_ref[:, :F]

    if approximate_gelu:
        # tanh approximation -> EUP slot (use only if the erf VALU polynomial binds)
        z = jax.nn.gelu(z, approximate=True)
    else:
        # exact erf GELU: matches torch.nn.GELU() default
        z = 0.5 * z * (1.0 + lax.erf(z * INV_SQRT2))

    # layer 2 (+ bias): lane-dense [row_tile, H] store.
    y = (jnp.dot(z.astype(w2_ref.dtype), w2_ref[...],
                 preferred_element_type=jnp.float32) + b_ref[:, F:])
    out_ref[...] = y.astype(out_ref.dtype)


def ffn_forward(x, w1, b1, w2, b2, *, use_bf16_mxu=True, approximate_gelu=False):
    """x: [..., H]; returns same shape.  w1:[H,F] b1:[F] or [1,F]  w2:[F,H] b2:[H] or [1,H]."""
    orig_shape = x.shape
    H = orig_shape[-1]
    F = w1.shape[-1]
    assert w1.shape == (H, F) and w2.shape == (F, H)
    # lane-aligned packed-bias slab + lane-dense stores require 128-multiples
    assert H % 128 == 0 and F % 128 == 0, "H and F must be multiples of 128"

    # torch Linear biases are 1-D; normalize to [1, dim]
    b1 = b1.reshape(1, F).astype(jnp.float32)
    b2 = b2.reshape(1, H).astype(jnp.float32)
    b_packed = jnp.concatenate([b1, b2], axis=1)            # [1, F+H], single DMA

    # bf16 MXU operands (f32 accumulation); cast weights once, reused every step.
    mxu_dtype = jnp.bfloat16 if use_bf16_mxu else x.dtype
    w1c = w1.astype(mxu_dtype)
    w2c = w2.astype(mxu_dtype)

    x2 = x.reshape(-1, H)
    n = x2.shape[0]
    row_tile = _choose_row_tile(n)

    # Only pad when the whole input is smaller than one tile (tiny inputs);
    # otherwise the last partial block's OOB writes are masked by Pallas.
    n_run = n
    if n < row_tile:
        n_run = row_tile
        x2 = jnp.pad(x2, ((0, n_run - n), (0, 0)))

    grid = (pl.cdiv(n_run, row_tile),)

    kernel = functools.partial(ffn_kernel, approximate_gelu=approximate_gelu)

    out = pl.pallas_call(
        kernel,
        out_shape=jax.ShapeDtypeStruct((n_run, H), x.dtype),
        grid_spec=pltpu.PrefetchScalarGridSpec(
            num_scalar_prefetch=0,
            grid=grid,
            in_specs=[
                pl.BlockSpec((row_tile, H), lambda i: (i, 0)),   # x row tile
                pl.BlockSpec((H, F), lambda i: (0, 0)),          # w1 (VMEM-resident)
                pl.BlockSpec((F, H), lambda i: (0, 0)),          # w2 (VMEM-resident)
                pl.BlockSpec((1, F + H), lambda i: (0, 0)),      # packed f32 biases
            ],
            out_specs=pl.BlockSpec((row_tile, H), lambda i: (i, 0)),
        ),
        compiler_params=pltpu.CompilerParams(
            dimension_semantics=("parallel",),     # shard row tiles across TCs (v7x)
            vmem_limit_bytes=32 * 1024 * 1024,     # tiny footprint; explicit for safety
        ),
    )(x2, w1c, w2c, b_packed)

    if n_run != n:
        out = out[:n]
    return out.reshape(orig_shape)


# ------------------------------- references -------------------------------

def reference_f32(x, w1, b1, w2, b2):
    """Full-precision reference (torch fp32 semantics)."""
    z = jnp.dot(x, w1, precision=lax.Precision.HIGHEST) + b1.reshape(1, -1)
    z = 0.5 * z * (1.0 + lax.erf(z * INV_SQRT2))
    return jnp.dot(z, w2, precision=lax.Precision.HIGHEST) + b2.reshape(1, -1)


def reference_emulated(x, w1, b1, w2, b2, mxu_dtype=jnp.bfloat16):
    """Emulates the kernel's bf16-operand / f32-accumulate numerics in plain JAX."""
    z = jnp.dot(x.astype(mxu_dtype), w1.astype(mxu_dtype),
                preferred_element_type=jnp.float32) + b1.reshape(1, -1)
    z = 0.5 * z * (1.0 + lax.erf(z * INV_SQRT2))
    return jnp.dot(z.astype(mxu_dtype), w2.astype(mxu_dtype),
                   preferred_element_type=jnp.float32) + b2.reshape(1, -1)


if __name__ == "__main__":
    key = jax.random.PRNGKey(0)
    kx, k1, kb1, k2, kb2 = jax.random.split(key, 5)

    # 8 * 200 = 1600 rows -> row_tile 512, grid of 4 steps, last block partial
    # (exercises the masked tail-write path, no full-array pad/slice round-trip).
    B, S = 8, 200
    x = 0.5 * jax.random.normal(kx, (B, S, HIDDEN), jnp.float32)
    w1 = 0.1 * jax.random.normal(k1, (HIDDEN, FFN), jnp.float32)
    b1 = 0.1 * jax.random.normal(kb1, (FFN,), jnp.float32)        # 1-D, like torch
    w2 = 0.1 * jax.random.normal(k2, (FFN, HIDDEN), jnp.float32)
    b2 = 0.1 * jax.random.normal(kb2, (HIDDEN,), jnp.float32)     # 1-D, like torch

    out = ffn_forward(x, w1, b1, w2, b2)
    out = jax.block_until_ready(out)
    assert out.shape == x.shape

    # 1) Kernel-logic check: tight match against a reference that emulates the
    #    exact bf16-operand / f32-accumulate casts the kernel performs.
    ref_emu = reference_emulated(x, w1, b1, w2, b2)
    assert jnp.allclose(out, ref_emu, rtol=5e-4, atol=5e-4), \
        "mismatch vs bf16-emulated reference (kernel logic)"

    # 2) Numerics sanity check against the full-precision fp32 module semantics
    #    (tolerance budget for bf16 operand rounding at K=128/512).
    ref_f32 = reference_f32(x, w1, b1, w2, b2)
    assert jnp.allclose(out, ref_f32, rtol=3e-2, atol=3e-2), \
        "mismatch vs fp32 HIGHEST-precision reference"

    print("KERNEL_OK")
</pallas_src>

<mosaic_0001>
module attributes {stable_mosaic.version = 11 : i64} {
  func.func @ffn_kernel(%arg0: i32, %arg1: memref<512x128xf32, #tpu.memory_space<vmem>>, %arg2: memref<128x512xbf16, #tpu.memory_space<vmem>>, %arg3: memref<512x128xbf16, #tpu.memory_space<vmem>>, %arg4: memref<1x640xf32, #tpu.memory_space<vmem>>, %arg5: memref<512x128xf32, #tpu.memory_space<vmem>>) attributes {dimension_semantics = [#tpu.dimension_semantics<parallel>], iteration_bounds = array<i64: 4>, scalar_prefetch = 0 : i64, scratch_operands = 0 : i64, tpu.core_type = #tpu.core_type<tc>, window_params = [{transform_indices = @transform_0, window_bounds = array<i64: 512, 128>}, {pipeline_mode = #tpu.pipeline_mode<synchronous>, transform_indices = @transform_1, window_bounds = array<i64: 128, 512>}, {pipeline_mode = #tpu.pipeline_mode<synchronous>, transform_indices = @transform_2, window_bounds = array<i64: 512, 128>}, {pipeline_mode = #tpu.pipeline_mode<synchronous>, transform_indices = @transform_3, window_bounds = array<i64: 1, 640>}, {transform_indices = @transform_4, window_bounds = array<i64: 512, 128>}]} {
    %c0 = arith.constant 0 : index
    %c0_0 = arith.constant 0 : index
    %0 = vector.load %arg1[%c0, %c0_0] : memref<512x128xf32, #tpu.memory_space<vmem>>, vector<512x128xf32>
    %1 = arith.truncf %0 : vector<512x128xf32> to vector<512x128xbf16>
    %c0_1 = arith.constant 0 : index
    %c0_2 = arith.constant 0 : index
    %2 = vector.load %arg2[%c0_1, %c0_2] : memref<128x512xbf16, #tpu.memory_space<vmem>>, vector<128x512xbf16>
    %cst = arith.constant dense<0.000000e+00> : vector<512x512xf32>
    %3 = tpu.matmul %1, %2, %cst {dimension_numbers = #tpu.dot_dimension_numbers<[1], [0], [0], [1], [0, 0, 1, 1], [], []>} : vector<512x128xbf16>, vector<128x512xbf16>, vector<512x512xf32> -> vector<512x512xf32>
    %c0_3 = arith.constant 0 : index
    %c0_4 = arith.constant 0 : index
    %4 = vector.load %arg4[%c0_3, %c0_4] : memref<1x640xf32, #tpu.memory_space<vmem>>, vector<1x512xf32>
    %5 = vector.broadcast %4 : vector<1x512xf32> to vector<512x512xf32>
    %6 = arith.addf %3, %5 : vector<512x512xf32>
    %cst_5 = arith.constant 5.000000e-01 : f32
    %7 = vector.broadcast %cst_5 : f32 to vector<512x512xf32>
    %8 = arith.mulf %7, %6 : vector<512x512xf32>
    %cst_6 = arith.constant 0.707106769 : f32
    %9 = vector.broadcast %cst_6 : f32 to vector<512x512xf32>
    %10 = arith.mulf %6, %9 : vector<512x512xf32>
    %11 = math.erf %10 : vector<512x512xf32>
    %cst_7 = arith.constant 1.000000e+00 : f32
    %12 = vector.broadcast %cst_7 : f32 to vector<512x512xf32>
    %13 = arith.addf %12, %11 : vector<512x512xf32>
    %14 = arith.mulf %8, %13 : vector<512x512xf32>
    %15 = arith.truncf %14 : vector<512x512xf32> to vector<512x512xbf16>
    %c0_8 = arith.constant 0 : index
    %c0_9 = arith.constant 0 : index
    %16 = vector.load %arg3[%c0_8, %c0_9] : memref<512x128xbf16, #tpu.memory_space<vmem>>, vector<512x128xbf16>
    %cst_10 = arith.constant dense<0.000000e+00> : vector<512x128xf32>
    %17 = tpu.matmul %15, %16, %cst_10 {dimension_numbers = #tpu.dot_dimension_numbers<[1], [0], [0], [1], [0, 0, 1, 1], [], []>} : vector<512x512xbf16>, vector<512x128xbf16>, vector<512x128xf32> -> vector<512x128xf32>
    %c0_11 = arith.constant 0 : index
    %c512 = arith.constant 512 : index
    %18 = vector.load %arg4[%c0_11, %c512] : memref<1x640xf32, #tpu.memory_space<vmem>>, vector<1x128xf32>
    %19 = vector.broadcast %18 : vector<1x128xf32> to vector<512x128xf32>
    %20 = arith.addf %17, %19 : vector<512x128xf32>
    %c0_12 = arith.constant 0 : index
    %c0_13 = arith.constant 0 : index
    %21 = vector.load %arg5[%c0_12, %c0_13] : memref<512x128xf32, #tpu.memory_space<vmem>>, vector<512x128xf32>
    tpu.vector_store %arg5[%c0_12, %c0_13], %20 {strides = array<i32>} : memref<512x128xf32, #tpu.memory_space<vmem>>, vector<512x128xf32>,
    return
  }
  func.func @transform_0(%arg0: i32) -> (i32, i32) {
    %c0_i32 = arith.constant 0 : i32
    %c0_i32_0 = arith.constant 0 : i32
    return %arg0, %c0_i32 : i32, i32
  }
  func.func @transform_1(%arg0: i32) -> (i32, i32) {
    %c0_i32 = arith.constant 0 : i32
    %c0_i32_0 = arith.constant 0 : i32
    %c0_i32_1 = arith.constant 0 : i32
    return %c0_i32, %c0_i32_0 : i32, i32
  }
  func.func @transform_2(%arg0: i32) -> (i32, i32) {
    %c0_i32 = arith.constant 0 : i32
    %c0_i32_0 = arith.constant 0 : i32
    %c0_i32_1 = arith.constant 0 : i32
    return %c0_i32, %c0_i32_0 : i32, i32
  }
  func.func @transform_3(%arg0: i32) -> (i32, i32) {
    %c0_i32 = arith.constant 0 : i32
    %c0_i32_0 = arith.constant 0 : i32
    %c0_i32_1 = arith.constant 0 : i32
    return %c0_i32, %c0_i32_0 : i32, i32
  }
  func.func @transform_4(%arg0: i32) -> (i32, i32) {
    %c0_i32 = arith.constant 0 : i32
    %c0_i32_0 = arith.constant 0 : i32
    return %arg0, %c0_i32 : i32, i32
  }
}

</mosaic_0001>

<llo_original>
// kernel: tpu_custom_call.1
$region0: #{tpu_custom_call.1}
  #allocation0 [shape = 'u32[]', space=smem, size = 0x4, offset = 0x4, fixed_abs, tag = 'smem constant byte address 0x4 - core index']
  #allocation1 [shape = 'u32[144,128]{1,0:T(1,128)}', space=vmem, size = 0x12000, scoped, tag = 'internal scratch']
  %s0 = inlined_call_operand.hbm [shape: f32[1600,128], index: 0, kind: input, shape index: {}]
  %s1 = inlined_call_operand.hbm [shape: bf16[128,512], index: 1, kind: input, shape index: {}]
  %s2 = inlined_call_operand.hbm [shape: bf16[512,128], index: 2, kind: input, shape index: {}]
  %s3 = inlined_call_operand.vmem [shape: f32[1,640], index: 3, kind: input, shape index: {}]
  %s4 = inlined_call_operand.hbm [shape: f32[1600,128], index: 4, kind: output, shape index: {}]
  %s5 = sld [smem:[#allocation0]]
  $region61: #{tpu_custom_call.1} parent=0
    _
  %s7 = ssub.s32 1, %s5
  %s8 = scalar_select 0, %s7, %s5
  $region1: #{tpu_custom_call.1} parent=0
    #allocation2 [shape = 'u8[524288]{0}', space=vmem, size = 0x80000, scoped, tag = 'input window, operand 0']
    #allocation3 [shape = 's32[2]{0}', space=sflag, size = 0x8, scoped, tag = 'scoped memory for tpu_custom_call.1']
    #allocation4 [shape = 's32[2]{0}', space=sflag, size = 0x8, scoped, tag = 'scoped memory for tpu_custom_call.1']
    #allocation5 [shape = 'u8[131072]{0}', space=vmem, size = 0x20000, scoped, tag = 'input window, operand 1, single buffered']
    #allocation6 [shape = 's32[1]{0}', space=sflag, size = 0x4, scoped, tag = 'scoped memory for tpu_custom_call.1']
    #allocation7 [shape = 'u8[131072]{0}', space=vmem, size = 0x20000, scoped, tag = 'input window, operand 2, single buffered']
    #allocation8 [shape = 'u8[524288]{0}', space=vmem, size = 0x80000, scoped, tag = 'output window, operand 0']
    %9 = vsyncpa [#allocation3], 0
    %s10 = scalar_lea.sflag [#allocation3], 1
    %11 = vsyncpa %s10, 0
    %12 = vsyncpa [#allocation6], 0
    %13 = vsyncpa [#allocation4], 0
    %s14 = scalar_lea.sflag [#allocation4], 1
    %15 = vsyncpa %s14, 0
    loop: start=0, step=1, limit=6
    $region2: #{tpu_custom_call.1} parent=1 // loop_pre_header
      _
    $region3: #{tpu_custom_call.1} parent=1 // loop_header
      %s17 = sphi 0, %s21
      %p18 = scmp.ge.s32.totalorder %s17, 6
      %s27 = sphi 0, %s29
      %s30 = sphi 0, %s27
      %s31 = sphi 0, %s30
      %s47 = sphi 0, %s31
      %s51 = sphi 0, %s51
      %s53 = sphi 0, %s51
      %s54 = sphi 0, %s53
      %s68 = sphi 0, %s54
      %s72 = sphi 0, %s72
      %s74 = sphi 0, %s72
      %s75 = sphi 0, %s74
      %s89 = sphi 0, %s75
      %s93 = sphi 0, %s93
      %s95 = sphi 0, %s93
      %s96 = sphi 0, %s95
      %s110 = sphi 0, %s96
      %s116 = sphi 0, %s118
      %s119 = sphi 0, %s116
      %s120 = sphi 0, %s119
      %s136 = sphi 0, %s120
    $region4: #{tpu_custom_call.1} parent=1 // loop_header_branch
      %20 = sbr.rel (%p18) target = $region8
    $region5: #{tpu_custom_call.1} parent=1 // loop_body
      %s22 = ssub.s32 %s17, 1
      %s23 = ssub.s32 %s17, 2
      %s24 = sadd.s32 %s17, 1
      %s25 = ssub.s32 %s17, %s24
      %p26 = scmp.eq.s32.totalorder %s25, 0
      %s28 = sadd.s32 %s27, 1
      %s29 = scalar_select %p26, %s27, %s28
      %p32 = pneg %p26
      %p33 = scmp.eq.s32.totalorder %s17, 3
      %p34 = por %p32, %p33
      %p35 = scmp.ne.s32.totalorder %s27, %s30
      %p36 = scmp.eq.s32.totalorder %s17, 0
      %p37 = por %p35, %p36
      %p38 = scmp.ne.s32.totalorder %s27, %s30
      %p39 = scmp.eq.s32.totalorder %s22, 3
      %p40 = por %p38, %p39
      %p41 = scmp.ne.s32.totalorder %s30, %s31
      %p42 = scmp.eq.s32.totalorder %s22, 0
      %p43 = por %p41, %p42
      %p44 = scmp.ne.s32.totalorder %s30, %s31
      %p45 = scmp.eq.s32.totalorder %s23, 3
      %p46 = por %p44, %p45
      %p48 = scmp.ne.s32.totalorder %s31, %s47
      %p49 = scmp.eq.s32.totalorder %s23, 0
      %p50 = por %p48, %p49
      %s52 = sadd.s32 %s51, 1
      %p55 = scmp.eq.s32.totalorder %s17, 3
      %p56 = scmp.ne.s32.totalorder %s51, %s53
      %p57 = scmp.eq.s32.totalorder %s17, 0
      %p58 = por %p56, %p57
      %p59 = scmp.ne.s32.totalorder %s51, %s53
      %p60 = scmp.eq.s32.totalorder %s22, 3
      %p61 = por %p59, %p60
      %p62 = scmp.ne.s32.totalorder %s53, %s54
      %p63 = scmp.eq.s32.totalorder %s22, 0
      %p64 = por %p62, %p63
      %p65 = scmp.ne.s32.totalorder %s53, %s54
      %p66 = scmp.eq.s32.totalorder %s23, 3
      %p67 = por %p65, %p66
      %p69 = scmp.ne.s32.totalorder %s54, %s68
      %p70 = scmp.eq.s32.totalorder %s23, 0
      %p71 = por %p69, %p70
      %s73 = sadd.s32 %s72, 1
      %p76 = scmp.eq.s32.totalorder %s17, 3
      %p77 = scmp.ne.s32.totalorder %s72, %s74
      %p78 = scmp.eq.s32.totalorder %s17, 0
      %p79 = por %p77, %p78
      %p80 = scmp.ne.s32.totalorder %s72, %s74
      %p81 = scmp.eq.s32.totalorder %s22, 3
      %p82 = por %p80, %p81
      %p83 = scmp.ne.s32.totalorder %s74, %s75
      %p84 = scmp.eq.s32.totalorder %s22, 0
      %p85 = por %p83, %p84
      %p86 = scmp.ne.s32.totalorder %s74, %s75
      %p87 = scmp.eq.s32.totalorder %s23, 3
      %p88 = por %p86, %p87
      %p90 = scmp.ne.s32.totalorder %s75, %s89
      %p91 = scmp.eq.s32.totalorder %s23, 0
      %p92 = por %p90, %p91
      %s94 = sadd.s32 %s93, 1
      %p97 = scmp.eq.s32.totalorder %s17, 3
      %p98 = scmp.ne.s32.totalorder %s93, %s95
      %p99 = scmp.eq.s32.totalorder %s17, 0
      %p100 = por %p98, %p99
      %p101 = scmp.ne.s32.totalorder %s93, %s95
      %p102 = scmp.eq.s32.totalorder %s22, 3
      %p103 = por %p101, %p102
      %p104 = scmp.ne.s32.totalorder %s95, %s96
      %p105 = scmp.eq.s32.totalorder %s22, 0
      %p106 = por %p104, %p105
      %p107 = scmp.ne.s32.totalorder %s95, %s96
      %p108 = scmp.eq.s32.totalorder %s23, 3
      %p109 = por %p107, %p108
      %p111 = scmp.ne.s32.totalorder %s96, %s110
      %p112 = scmp.eq.s32.totalorder %s23, 0
      %p113 = por %p111, %p112
      %s114 = ssub.s32 %s17, %s24
      %p115 = scmp.eq.s32.totalorder %s114, 0
      %s117 = sadd.s32 %s116, 1
      %s118 = scalar_select %p115, %s116, %s117
      %p121 = pneg %p115
      %p122 = scmp.eq.s32.totalorder %s17, 3
      %p123 = por %p121, %p122
      %p124 = scmp.ne.s32.totalorder %s116, %s119
      %p125 = scmp.eq.s32.totalorder %s17, 0
      %p126 = por %p124, %p125
      %p127 = scmp.ne.s32.totalorder %s116, %s119
      %p128 = scmp.eq.s32.totalorder %s22, 3
      %p129 = por %p127, %p128
      %p130 = scmp.ne.s32.totalorder %s119, %s120
      %p131 = scmp.eq.s32.totalorder %s22, 0
      %p132 = por %p130, %p131
      %p133 = scmp.ne.s32.totalorder %s119, %s120
      %p134 = scmp.eq.s32.totalorder %s23, 3
      %p135 = por %p133, %p134
      %p137 = scmp.ne.s32.totalorder %s120, %s136
      %p138 = scmp.eq.s32.totalorder %s23, 0
      %p139 = por %p137, %p138
      %p140 = scmp.le.s32.totalorder 1, %s17
      %p141 = scmp.lt.s32.totalorder %s17, 5
      %p142 = pnand %p140, %p141
      %p143 = pneg %p142
      // Predicated region
      $region9: #{tpu_custom_call.1} parent=5 // pred_check
        _
      $region10: #{tpu_custom_call.1} parent=5 // pred_check_branch
        %145 = sbr.rel (%p142) target = $region12
      $region11: #{tpu_custom_call.1} parent=5 // pred_region
        %s146 = ssub.s32 %s17, 1
        // Predicated region
        $region13: #{tpu_custom_call.1} parent=11 // pred_check
          %p147 = pneg %p64
        $region14: #{tpu_custom_call.1} parent=11 // pred_check_branch
          %149 = sbr.rel (%p147) target = $region16
        $region15: #{tpu_custom_call.1} parent=11 // pred_region
          %s151 = ssub.s32 4096, 4096
          %152 = vsyncadd [#allocation6], %s151
          %s153 = sshll.u32 [#allocation5], 4
          %s154 = int_to_ptr.vmem [resolvable:$true] %s153
          %159 = dma.hbm_to_vmem [thread:$0]  %s1, 4096, %s154, [#allocation6], 256, 256, 16
        $region16: #{tpu_custom_call.1} parent=11 // pred_fallthru
          _
        // Predicated region
        $region17: #{tpu_custom_call.1} parent=11 // pred_check
          %p160 = pneg %p85
        $region18: #{tpu_custom_call.1} parent=11 // pred_check_branch
          %162 = sbr.rel (%p160) target = $region20
        $region19: #{tpu_custom_call.1} parent=11 // pred_region
          %s164 = ssub.s32 4096, 4096
          %165 = vsyncadd [#allocation6], %s164
          %s166 = sshll.u32 [#allocation7], 4
          %s167 = int_to_ptr.vmem [resolvable:$true] %s166
          %172 = dma.hbm_to_vmem [thread:$0]  %s2, 4096, %s167, [#allocation6], 64, 64, 4
        $region20: #{tpu_custom_call.1} parent=11 // pred_fallthru
          _
        // Predicated region
        $region21: #{tpu_custom_call.1} parent=11 // pred_check
          %p173 = pneg %p106
        $region22: #{tpu_custom_call.1} parent=11 // pred_check_branch
          %175 = sbr.rel (%p173) target = $region24
        $region23: #{tpu_custom_call.1} parent=11 // pred_region
          _
        $region24: #{tpu_custom_call.1} parent=11 // pred_fallthru
          _
      $region12: #{tpu_custom_call.1} parent=5 // pred_fallthru
        _
      %p176 = scmp.lt.s32.totalorder %s17, 4
      // Predicated region
      $region25: #{tpu_custom_call.1} parent=5 // pred_check
        %p177 = pneg %p176
      $region26: #{tpu_custom_call.1} parent=5 // pred_check_branch
        %179 = sbr.rel (%p177) target = $region28
      $region27: #{tpu_custom_call.1} parent=5 // pred_region
        // Predicated region
        $region29: #{tpu_custom_call.1} parent=27 // pred_check
          %p180 = pneg %p37
        $region30: #{tpu_custom_call.1} parent=27 // pred_check_branch
          %182 = sbr.rel (%p180) target = $region32
        $region31: #{tpu_custom_call.1} parent=27 // pred_region
          %s183 = sand.u32 %s27, 1
          %s184 = scalar_lea.sflag [#allocation3], %s183
          %s185 = sand.u32 %s27, 1
          %s186 = smul.addr %s185, 512
          %s187 = scalar_lea.vmem [#allocation2], %s186
          %s188 = smul.u32 64, %s17
          %s189 = ssub.s32 200, %s188
          %p190 = scmp.lt.s32.totalorder %s189, 64
          %s191 = scalar_select %p190, %s189, 64
          %s192 = smul.u32 128, %s191
          %s194 = ssub.s32 8192, %s192
          %195 = vsyncadd %s184, %s194
          %p196 = scmp.ne.s32.totalorder 0, %s192
          %s197 = smul.addr %s188, 128
          %s198 = scalar_lea.hbm %s0, %s197
          %s199 = smul.u32 8, %s191
          %s200 = sshll.u32 %s187, 4
          %s201 = int_to_ptr.vmem [resolvable:$true] %s200
          %s202 = sshll.u32 %s199, 4
          %206 = dma.hbm_to_vmem [thread:$0]  (%p196), %s198, %s202, %s201, %s184, 128, 128, 8
        $region32: #{tpu_custom_call.1} parent=27 // pred_fallthru
          _
      $region28: #{tpu_custom_call.1} parent=5 // pred_fallthru
        _
      %p207 = scmp.le.s32.totalorder 1, %s17
      %p208 = scmp.lt.s32.totalorder %s17, 5
      %p209 = pnand %p207, %p208
      %p210 = pneg %p209
      // Predicated region
      $region33: #{tpu_custom_call.1} parent=5 // pred_check
        _
      $region34: #{tpu_custom_call.1} parent=5 // pred_check_branch
        %212 = sbr.rel (%p209) target = $region36
      $region35: #{tpu_custom_call.1} parent=5 // pred_region
        %s213 = ssub.s32 %s17, 1
        %s214 = sand.u32 %s30, 1
        %s215 = scalar_lea.sflag [#allocation3], %s214
        %s216 = sand.u32 %s30, 1
        %s217 = smul.addr %s216, 512
        %s218 = scalar_lea.vmem [#allocation2], %s217
        // Predicated region
        $region37: #{tpu_custom_call.1} parent=35 // pred_check
          %p219 = pneg %p43
        $region38: #{tpu_custom_call.1} parent=35 // pred_check_branch
          %221 = sbr.rel (%p219) target = $region40
        $region39: #{tpu_custom_call.1} parent=35 // pred_region
          %222 = dma.done %s215, 8192
        $region40: #{tpu_custom_call.1} parent=35 // pred_fallthru
          _
        // Predicated region
        $region41: #{tpu_custom_call.1} parent=35 // pred_check
          %p223 = pneg %p64
        $region42: #{tpu_custom_call.1} parent=35 // pred_check_branch
          %225 = sbr.rel (%p223) target = $region44
        $region43: #{tpu_custom_call.1} parent=35 // pred_region
          %226 = dma.done [#allocation6], 4096
        $region44: #{tpu_custom_call.1} parent=35 // pred_fallthru
          _
        // Predicated region
        $region45: #{tpu_custom_call.1} parent=35 // pred_check
          %p227 = pneg %p85
        $region46: #{tpu_custom_call.1} parent=35 // pred_check_branch
          %229 = sbr.rel (%p227) target = $region48
        $region47: #{tpu_custom_call.1} parent=35 // pred_region
          %230 = dma.done [#allocation6], 4096
        $region48: #{tpu_custom_call.1} parent=35 // pred_fallthru
          _
        %s231 = sand.u32 %s30, 1
        %s232 = scalar_lea.sflag [#allocation3], %s231
        %s233 = sand.u32 %s30, 1
        %s234 = smul.addr %s233, 512
        %s235 = scalar_lea.vmem [#allocation2], %s234
        %p236 = pneg %p43
        %p237 = pneg %p40
        %p238 = pneg %p64
        %p239 = pneg %p61
        %p240 = pneg %p85
        %p241 = pneg %p82
        %p242 = pneg %p106
        %p243 = pneg %p103
        %p244 = pneg %p132
        %p245 = pneg %p129
        %s246 = sand.u32 %s119, 1
        %s247 = scalar_lea.sflag [#allocation4], %s246
        %s248 = sand.u32 %s119, 1
        %s249 = smul.addr %s248, 512
        %s250 = scalar_lea.vmem [#allocation8], %s249
        %s251 = smul.u32 64, %s22
        %s252 = ssub.s32 200, %s251
        %p253 = scmp.lt.s32.totalorder %s252, 64
        %s254 = scalar_select %p253, %s252, 64
        %s255 = smul.u32 128, %s254
        %s256 = smul.u32 64, %s22
        %s257 = ssub.s32 200, %s256
        %p258 = scmp.lt.s32.totalorder %s257, 64
        %s259 = scalar_select %p258, %s257, 64
        %s260 = smul.u32 128, %s259
        %v262 = vld [vmem:[%s218] sm:$0xff]
        %v263 = vld [vmem:[%s218 + $0x8] sm:$0xff]
        %v264 = vld [vmem:[%s218 + $0x10] sm:$0xff]
        %v265 = vld [vmem:[%s218 + $0x18] sm:$0xff]
        %v266 = vld [vmem:[%s218 + $0x20] sm:$0xff]
        %v267 = vld [vmem:[%s218 + $0x28] sm:$0xff]
        %v268 = vld [vmem:[%s218 + $0x30] sm:$0xff]
        %v269 = vld [vmem:[%s218 + $0x38] sm:$0xff]
        %v270 = vld [vmem:[%s218 + $0x40] sm:$0xff]
        %v271 = vld [vmem:[%s218 + $0x48] sm:$0xff]
        %v272 = vld [vmem:[%s218 + $0x50] sm:$0xff]
        %v273 = vld [vmem:[%s218 + $0x58] sm:$0xff]
        %v274 = vld [vmem:[%s218 + $0x60] sm:$0xff]
        %v275 = vld [vmem:[%s218 + $0x68] sm:$0xff]
        %v276 = vld [vmem:[%s218 + $0x70] sm:$0xff]
        %v277 = vld [vmem:[%s218 + $0x78] sm:$0xff]
        %v278 = vld [vmem:[%s218 + $0x80] sm:$0xff]
        %v279 = vld [vmem:[%s218 + $0x88] sm:$0xff]
        %v280 = vld [vmem:[%s218 + $0x90] sm:$0xff]
        %v281 = vld [vmem:[%s218 + $0x98] sm:$0xff]
        %v282 = vld [vmem:[%s218 + $0xa0] sm:$0xff]
        %v283 = vld [vmem:[%s218 + $0xa8] sm:$0xff]
        %v284 = vld [vmem:[%s218 + $0xb0] sm:$0xff]
        %v285 = vld [vmem:[%s218 + $0xb8] sm:$0xff]
        %v286 = vld [vmem:[%s218 + $0xc0] sm:$0xff]
        %v287 = vld [vmem:[%s218 + $0xc8] sm:$0xff]
        %v288 = vld [vmem:[%s218 + $0xd0] sm:$0xff]
        %v289 = vld [vmem:[%s218 + $0xd8] sm:$0xff]
        %v290 = vld [vmem:[%s218 + $0xe0] sm:$0xff]
        %v291 = vld [vmem:[%s218 + $0xe8] sm:$0xff]
        %v292 = vld [vmem:[%s218 + $0xf0] sm:$0xff]
        %v293 = vld [vmem:[%s218 + $0xf8] sm:$0xff]
        %v294 = vld [vmem:[%s218 + $0x100] sm:$0xff]
        %v295 = vld [vmem:[%s218 + $0x108] sm:$0xff]
        %v296 = vld [vmem:[%s218 + $0x110] sm:$0xff]
        %v297 = vld [vmem:[%s218 + $0x118] sm:$0xff]
        %v298 = vld [vmem:[%s218 + $0x120] sm:$0xff]
        %v299 = vld [vmem:[%s218 + $0x128] sm:$0xff]
        %v300 = vld [vmem:[%s218 + $0x130] sm:$0xff]
        %v301 = vld [vmem:[%s218 + $0x138] sm:$0xff]
        %v302 = vld [vmem:[%s218 + $0x140] sm:$0xff]
        %v303 = vld [vmem:[%s218 + $0x148] sm:$0xff]
        %v304 = vld [vmem:[%s218 + $0x150] sm:$0xff]
        %v305 = vld [vmem:[%s218 + $0x158] sm:$0xff]
        %v306 = vld [vmem:[%s218 + $0x160] sm:$0xff]
        %v307 = vld [vmem:[%s218 + $0x168] sm:$0xff]
        %v308 = vld [vmem:[%s218 + $0x170] sm:$0xff]
        %v309 = vld [vmem:[%s218 + $0x178] sm:$0xff]
        %v310 = vld [vmem:[%s218 + $0x180] sm:$0xff]
        %v311 = vld [vmem:[%s218 + $0x188] sm:$0xff]
        %v312 = vld [vmem:[%s218 + $0x190] sm:$0xff]
        %v313 = vld [vmem:[%s218 + $0x198] sm:$0xff]
        %v314 = vld [vmem:[%s218 + $0x1a0] sm:$0xff]
        %v315 = vld [vmem:[%s218 + $0x1a8] sm:$0xff]
        %v316 = vld [vmem:[%s218 + $0x1b0] sm:$0xff]
        %v317 = vld [vmem:[%s218 + $0x1b8] sm:$0xff]
        %v318 = vld [vmem:[%s218 + $0x1c0] sm:$0xff]
        %v319 = vld [vmem:[%s218 + $0x1c8] sm:$0xff]
        %v320 = vld [vmem:[%s218 + $0x1d0] sm:$0xff]
        %v321 = vld [vmem:[%s218 + $0x1d8] sm:$0xff]
        %v322 = vld [vmem:[%s218 + $0x1e0] sm:$0xff]
        %v323 = vld [vmem:[%s218 + $0x1e8] sm:$0xff]
        %v324 = vld [vmem:[%s218 + $0x1f0] sm:$0xff]
        %v325 = vld [vmem:[%s218 + $0x1f8] sm:$0xff]
        %v326 = vpack.c.bf16 %v263, %v262
        %v327 = vpack.c.bf16 %v265, %v264
        %v328 = vpack.c.bf16 %v267, %v266
        %v329 = vpack.c.bf16 %v269, %v268
        %v330 = vpack.c.bf16 %v271, %v270
        %v331 = vpack.c.bf16 %v273, %v272
        %v332 = vpack.c.bf16 %v275, %v274
        %v333 = vpack.c.bf16 %v277, %v276
        %v334 = vpack.c.bf16 %v279, %v278
        %v335 = vpack.c.bf16 %v281, %v280
        %v336 = vpack.c.bf16 %v283, %v282
        %v337 = vpack.c.bf16 %v285, %v284
        %v338 = vpack.c.bf16 %v287, %v286
        %v339 = vpack.c.bf16 %v289, %v288
        %v340 = vpack.c.bf16 %v291, %v290
        %v341 = vpack.c.bf16 %v293, %v292
        %v342 = vpack.c.bf16 %v295, %v294
        %v343 = vpack.c.bf16 %v297, %v296
        %v344 = vpack.c.bf16 %v299, %v298
        %v345 = vpack.c.bf16 %v301, %v300
        %v346 = vpack.c.bf16 %v303, %v302
        %v347 = vpack.c.bf16 %v305, %v304
        %v348 = vpack.c.bf16 %v307, %v306
        %v349 = vpack.c.bf16 %v309, %v308
        %v350 = vpack.c.bf16 %v311, %v310
        %v351 = vpack.c.bf16 %v313, %v312
        %v352 = vpack.c.bf16 %v315, %v314
        %v353 = vpack.c.bf16 %v317, %v316
        %v354 = vpack.c.bf16 %v319, %v318
        %v355 = vpack.c.bf16 %v321, %v320
        %v356 = vpack.c.bf16 %v323, %v322
        %v357 = vpack.c.bf16 %v325, %v324
        %v358 = vld [vmem:[#allocation5] sm:$0xff]
        %v359 = vld [vmem:[#allocation5 + $0x8] sm:$0xff]
        %v360 = vld [vmem:[#allocation5 + $0x10] sm:$0xff]
        %v361 = vld [vmem:[#allocation5 + $0x18] sm:$0xff]
        %v362 = vld [vmem:[#allocation5 + $0x20] sm:$0xff]
        %v363 = vld [vmem:[#allocation5 + $0x28] sm:$0xff]
        %v364 = vld [vmem:[#allocation5 + $0x30] sm:$0xff]
        %v365 = vld [vmem:[#allocation5 + $0x38] sm:$0xff]
        %v366 = vld [vmem:[#allocation5 + $0x40] sm:$0xff]
        %v367 = vld [vmem:[#allocation5 + $0x48] sm:$0xff]
        %v368 = vld [vmem:[#allocation5 + $0x50] sm:$0xff]
        %v369 = vld [vmem:[#allocation5 + $0x58] sm:$0xff]
        %v370 = vld [vmem:[#allocation5 + $0x60] sm:$0xff]
        %v371 = vld [vmem:[#allocation5 + $0x68] sm:$0xff]
        %v372 = vld [vmem:[#allocation5 + $0x70] sm:$0xff]
        %v373 = vld [vmem:[#allocation5 + $0x78] sm:$0xff]
        %v374 = vld [vmem:[#allocation5 + $0x80] sm:$0xff]
        %v375 = vld [vmem:[#allocation5 + $0x88] sm:$0xff]
        %v376 = vld [vmem:[#allocation5 + $0x90] sm:$0xff]
        %v377 = vld [vmem:[#allocation5 + $0x98] sm:$0xff]
        %v378 = vld [vmem:[#allocation5 + $0xa0] sm:$0xff]
        %v379 = vld [vmem:[#allocation5 + $0xa8] sm:$0xff]
        %v380 = vld [vmem:[#allocation5 + $0xb0] sm:$0xff]
        %v381 = vld [vmem:[#allocation5 + $0xb8] sm:$0xff]
        %v382 = vld [vmem:[#allocation5 + $0xc0] sm:$0xff]
        %v383 = vld [vmem:[#allocation5 + $0xc8] sm:$0xff]
        %v384 = vld [vmem:[#allocation5 + $0xd0] sm:$0xff]
        %v385 = vld [vmem:[#allocation5 + $0xd8] sm:$0xff]
        %v386 = vld [vmem:[#allocation5 + $0xe0] sm:$0xff]
        %v387 = vld [vmem:[#allocation5 + $0xe8] sm:$0xff]
        %v388 = vld [vmem:[#allocation5 + $0xf0] sm:$0xff]
        %v389 = vld [vmem:[#allocation5 + $0xf8] sm:$0xff]
        %v390 = vld [vmem:[%s3] sm:$0xf]
        %v392 = vlaneseq
        %v393 = vshrl.u32 %v392, 7
        %v394 = vsub.s32 0, %v393
        %v395 = vrot.slane %v390, %v394
        %v396 = vlaneseq
        %v397 = vshrl.u32 %v396, 7
        %v398 = vsub.s32 1, %v397
        %v399 = vrot.slane %v390, %v398
        %v400 = vlaneseq
        %v401 = vshrl.u32 %v400, 7
        %v402 = vsub.s32 2, %v401
        %v403 = vrot.slane %v390, %v402
        %v404 = vlaneseq
        %v405 = vshrl.u32 %v404, 7
        %v406 = vsub.s32 3, %v405
        %v407 = vrot.slane %v390, %v406
        %v444 = vunpack.c.l.b16 %v358
        %v445 = vunpack.c.h.b16 %v358
        %v446 = vunpack.c.l.b16 %v359
        %v447 = vunpack.c.h.b16 %v359
        %v448 = vunpack.c.l.b16 %v360
        %v449 = vunpack.c.h.b16 %v360
        %v450 = vunpack.c.l.b16 %v361
        %v451 = vunpack.c.h.b16 %v361
        %v452 = vunpack.c.l.b16 %v362
        %v453 = vunpack.c.h.b16 %v362
        %v454 = vunpack.c.l.b16 %v363
        %v455 = vunpack.c.h.b16 %v363
        %v456 = vunpack.c.l.b16 %v364
        %v457 = vunpack.c.h.b16 %v364
        %v458 = vunpack.c.l.b16 %v365
        %v459 = vunpack.c.h.b16 %v365
        %v460 = vunpack.c.l.b16 %v366
        %v461 = vunpack.c.h.b16 %v366
        %v462 = vunpack.c.l.b16 %v367
        %v463 = vunpack.c.h.b16 %v367
        %v464 = vunpack.c.l.b16 %v368
        %v465 = vunpack.c.h.b16 %v368
        %v466 = vunpack.c.l.b16 %v369
        %v467 = vunpack.c.h.b16 %v369
        %v468 = vunpack.c.l.b16 %v370
        %v469 = vunpack.c.h.b16 %v370
        %v470 = vunpack.c.l.b16 %v371
        %v471 = vunpack.c.h.b16 %v371
        %v472 = vunpack.c.l.b16 %v372
        %v473 = vunpack.c.h.b16 %v372
        %v474 = vunpack.c.l.b16 %v373
        %v475 = vunpack.c.h.b16 %v373
        %v476 = vunpack.c.l.b16 %v374
        %v477 = vunpack.c.h.b16 %v374
        %v478 = vunpack.c.l.b16 %v375
        %v479 = vunpack.c.h.b16 %v375
        %v480 = vunpack.c.l.b16 %v376
        %v481 = vunpack.c.h.b16 %v376
        %v482 = vunpack.c.l.b16 %v377
        %v483 = vunpack.c.h.b16 %v377
        %v484 = vunpack.c.l.b16 %v378
        %v485 = vunpack.c.h.b16 %v378
        %v486 = vunpack.c.l.b16 %v379
        %v487 = vunpack.c.h.b16 %v379
        %v488 = vunpack.c.l.b16 %v380
        %v489 = vunpack.c.h.b16 %v380
        %v490 = vunpack.c.l.b16 %v381
        %v491 = vunpack.c.h.b16 %v381
        %v492 = vunpack.c.l.b16 %v382
        %v493 = vunpack.c.h.b16 %v382
        %v494 = vunpack.c.l.b16 %v383
        %v495 = vunpack.c.h.b16 %v383
        %v496 = vunpack.c.l.b16 %v384
        %v497 = vunpack.c.h.b16 %v384
        %v498 = vunpack.c.l.b16 %v385
        %v499 = vunpack.c.h.b16 %v385
        %v500 = vunpack.c.l.b16 %v386
        %v501 = vunpack.c.h.b16 %v386
        %v502 = vunpack.c.l.b16 %v387
        %v503 = vunpack.c.h.b16 %v387
        %v504 = vunpack.c.l.b16 %v388
        %v505 = vunpack.c.h.b16 %v388
        %v506 = vunpack.c.l.b16 %v389
        %v507 = vunpack.c.h.b16 %v389
        %v508 = vpack.c.b16 %v448, %v444
        %v509 = vpack.c.b16 %v449, %v445
        %v510 = vpack.c.b16 %v450, %v446
        %v511 = vpack.c.b16 %v451, %v447
        %v512 = vpack.c.b16 %v456, %v452
        %v513 = vpack.c.b16 %v457, %v453
        %v514 = vpack.c.b16 %v458, %v454
        %v515 = vpack.c.b16 %v459, %v455
        %v516 = vpack.c.b16 %v464, %v460
        %v517 = vpack.c.b16 %v465, %v461
        %v518 = vpack.c.b16 %v466, %v462
        %v519 = vpack.c.b16 %v467, %v463
        %v520 = vpack.c.b16 %v472, %v468
        %v521 = vpack.c.b16 %v473, %v469
        %v522 = vpack.c.b16 %v474, %v470
        %v523 = vpack.c.b16 %v475, %v471
        %v524 = vpack.c.b16 %v480, %v476
        %v525 = vpack.c.b16 %v481, %v477
        %v526 = vpack.c.b16 %v482, %v478
        %v527 = vpack.c.b16 %v483, %v479
        %v528 = vpack.c.b16 %v488, %v484
        %v529 = vpack.c.b16 %v489, %v485
        %v530 = vpack.c.b16 %v490, %v486
        %v531 = vpack.c.b16 %v491, %v487
        %v532 = vpack.c.b16 %v496, %v492
        %v533 = vpack.c.b16 %v497, %v493
        %v534 = vpack.c.b16 %v498, %v494
        %v535 = vpack.c.b16 %v499, %v495
        %v536 = vpack.c.b16 %v504, %v500
        %v537 = vpack.c.b16 %v505, %v501
        %v538 = vpack.c.b16 %v506, %v502
        %v539 = vpack.c.b16 %v507, %v503
        %572 = vmatprep.subr.bf16.mxu0 %v509
        %573 = vmatpush1.bf16.msra.mxu0 %v508
        %574 = vmatprep.subr.bf16.mxu0 %v513
        %575 = vmatpush1.bf16.msra.mxu0 %v512
        %576 = vmatprep.subr.bf16.mxu0 %v517
        %577 = vmatpush1.bf16.msra.mxu0 %v516
        %578 = vmatprep.subr.bf16.mxu0 %v521
        %579 = vmatpush1.bf16.msra.mxu0 %v520
        %580 = vmatprep.subr.bf16.mxu0 %v525
        %581 = vmatpush1.bf16.msra.mxu0 %v524
        %582 = vmatprep.subr.bf16.mxu0 %v529
        %583 = vmatpush1.bf16.msra.mxu0 %v528
        %584 = vmatprep.subr.bf16.mxu0 %v533
        %585 = vmatpush1.bf16.msra.mxu0 %v532
        %586 = vmatprep.subr.bf16.mxu0 %v537
        %587 = vmatpush1.bf16.msra.mxu0 %v536
        %588 = vmatprep.subr.bf16.mxu0 0
        %589 = vmatpush1.bf16.msra.mxu0 0
        %590 = vmatprep.subr.bf16.mxu0 0
        %591 = vmatpush1.bf16.msra.mxu0 0
        %592 = vmatprep.subr.bf16.mxu0 0
        %593 = vmatpush1.bf16.msra.mxu0 0
        %594 = vmatprep.subr.bf16.mxu0 0
        %595 = vmatpush1.bf16.msra.mxu0 0
        %596 = vmatprep.subr.bf16.mxu0 0
        %597 = vmatpush1.bf16.msra.mxu0 0
        %598 = vmatprep.subr.bf16.mxu0 0
        %599 = vmatpush1.bf16.msra.mxu0 0
        %600 = vmatprep.subr.bf16.mxu0 0
        %601 = vmatpush1.bf16.msra.mxu0 0
        %602 = vmatprep.subr.bf16.mxu0 0
        %603 = vmatpush1.bf16.msra.mxu0 0
        %604 = vmatprep.mubr.bf16.mxu0 0
        %605 = vmatmul.mubr.bf16.gmra.mrb[0].mxu0 %v326
        %v606 = vpop.f32.mrb[0].mxu0
        %v607 = vadd.f32 %v395, %v606
        %v608 = vpop.f32.mrb[0].mxu0
        %v609 = vadd.f32 %v399, %v608
        %v610 = vpop.f32.mrb[0].mxu0
        %v611 = vadd.f32 %v395, %v610
        %v612 = vpop.f32.mrb[0].mxu0
        %v613 = vadd.f32 %v399, %v612
        %614 = vmatprep.mubr.bf16.mxu0 0
        %615 = vmatmul.mubr.bf16.gmra.mrb[0].mxu0 %v327
        %v616 = vpop.f32.mrb[0].mxu0
        %v617 = vadd.f32 %v395, %v616
        %v618 = vpop.f32.mrb[0].mxu0
        %v619 = vadd.f32 %v399, %v618
        %v620 = vpop.f32.mrb[0].mxu0
        %v621 = vadd.f32 %v395, %v620
        %v622 = vpop.f32.mrb[0].mxu0
        %v623 = vadd.f32 %v399, %v622
        %624 = vmatprep.mubr.bf16.mxu0 0
        %625 = vmatmul.mubr.bf16.gmra.mrb[0].mxu0 %v328
        %v626 = vpop.f32.mrb[0].mxu0
        %v627 = vadd.f32 %v395, %v626
        %v628 = vpop.f32.mrb[0].mxu0
        %v629 = vadd.f32 %v399, %v628
        %v630 = vpop.f32.mrb[0].mxu0
        %v631 = vadd.f32 %v395, %v630
        %v632 = vpop.f32.mrb[0].mxu0
        %v633 = vadd.f32 %v399, %v632
        %634 = vmatprep.mubr.bf16.mxu0 0
        %635 = vmatmul.mubr.bf16.gmra.mrb[0].mxu0 %v329
        %v636 = vpop.f32.mrb[0].mxu0
        %v637 = vadd.f32 %v395, %v636
        %v638 = vpop.f32.mrb[0].mxu0
        %v639 = vadd.f32 %v399, %v638
        %v640 = vpop.f32.mrb[0].mxu0
        %v641 = vadd.f32 %v395, %v640
        %v642 = vpop.f32.mrb[0].mxu0
        %v643 = vadd.f32 %v399, %v642
        %644 = vmatprep.mubr.bf16.mxu0 0
        %645 = vmatmul.mubr.bf16.gmra.mrb[0].mxu0 %v330
        %v646 = vpop.f32.mrb[0].mxu0
        %v647 = vadd.f32 %v395, %v646
        %v648 = vpop.f32.mrb[0].mxu0
        %v649 = vadd.f32 %v399, %v648
        %v650 = vpop.f32.mrb[0].mxu0
        %v651 = vadd.f32 %v395, %v650
        %v652 = vpop.f32.mrb[0].mxu0
        %v653 = vadd.f32 %v399, %v652
        %654 = vmatprep.mubr.bf16.mxu0 0
        %655 = vmatmul.mubr.bf16.gmra.mrb[0].mxu0 %v331
        %v656 = vpop.f32.mrb[0].mxu0
        %v657 = vadd.f32 %v395, %v656
        %v658 = vpop.f32.mrb[0].mxu0
        %v659 = vadd.f32 %v399, %v658
        %v660 = vpop.f32.mrb[0].mxu0
        %v661 = vadd.f32 %v395, %v660
        %v662 = vpop.f32.mrb[0].mxu0
        %v663 = vadd.f32 %v399, %v662
        %664 = vmatprep.mubr.bf16.mxu0 0
        %665 = vmatmul.mubr.bf16.gmra.mrb[0].mxu0 %v332
        %v666 = vpop.f32.mrb[0].mxu0
        %v667 = vadd.f32 %v395, %v666
        %v668 = vpop.f32.mrb[0].mxu0
        %v669 = vadd.f32 %v399, %v668
        %v670 = vpop.f32.mrb[0].mxu0
        %v671 = vadd.f32 %v395, %v670
        %v672 = vpop.f32.mrb[0].mxu0
        %v673 = vadd.f32 %v399, %v672
        %674 = vmatprep.mubr.bf16.mxu0 0
        %675 = vmatmul.mubr.bf16.gmra.mrb[0].mxu0 %v333
        %v676 = vpop.f32.mrb[0].mxu0
        %v677 = vadd.f32 %v395, %v676
        %v678 = vpop.f32.mrb[0].mxu0
        %v679 = vadd.f32 %v399, %v678
        %v680 = vpop.f32.mrb[0].mxu0
        %v681 = vadd.f32 %v395, %v680
        %v682 = vpop.f32.mrb[0].mxu0
        %v683 = vadd.f32 %v399, %v682
        %684 = vmatprep.mubr.bf16.mxu0 0
        %685 = vmatmul.mubr.bf16.gmra.mrb[0].mxu0 %v334
        %v686 = vpop.f32.mrb[0].mxu0
        %v687 = vadd.f32 %v395, %v686
        %v688 = vpop.f32.mrb[0].mxu0
        %v689 = vadd.f32 %v399, %v688
        %v690 = vpop.f32.mrb[0].mxu0
        %v691 = vadd.f32 %v395, %v690
        %v692 = vpop.f32.mrb[0].mxu0
        %v693 = vadd.f32 %v399, %v692
        %694 = vmatprep.mubr.bf16.mxu0 0
        %695 = vmatmul.mubr.bf16.gmra.mrb[0].mxu0 %v335
        %v696 = vpop.f32.mrb[0].mxu0
        %v697 = vadd.f32 %v395, %v696
        %v698 = vpop.f32.mrb[0].mxu0
        %v699 = vadd.f32 %v399, %v698
        %v700 = vpop.f32.mrb[0].mxu0
        %v701 = vadd.f32 %v395, %v700
        %v702 = vpop.f32.mrb[0].mxu0
        %v703 = vadd.f32 %v399, %v702
        %704 = vmatprep.mubr.bf16.mxu0 0
        %705 = vmatmul.mubr.bf16.gmra.mrb[0].mxu0 %v336
        %v706 = vpop.f32.mrb[0].mxu0
        %v707 = vadd.f32 %v395, %v706
        %v708 = vpop.f32.mrb[0].mxu0
        %v709 = vadd.f32 %v399, %v708
        %v710 = vpop.f32.mrb[0].mxu0
        %v711 = vadd.f32 %v395, %v710
        %v712 = vpop.f32.mrb[0].mxu0
        %v713 = vadd.f32 %v399, %v712
        %714 = vmatprep.mubr.bf16.mxu0 0
        %715 = vmatmul.mubr.bf16.gmra.mrb[0].mxu0 %v337
        %v716 = vpop.f32.mrb[0].mxu0
        %v717 = vadd.f32 %v395, %v716
        %v718 = vpop.f32.mrb[0].mxu0
        %v719 = vadd.f32 %v399, %v718
        %v720 = vpop.f32.mrb[0].mxu0
        %v721 = vadd.f32 %v395, %v720
        %v722 = vpop.f32.mrb[0].mxu0
        %v723 = vadd.f32 %v399, %v722
        %724 = vmatprep.mubr.bf16.mxu0 0
        %725 = vmatmul.mubr.bf16.gmra.mrb[0].mxu0 %v338
        %v726 = vpop.f32.mrb[0].mxu0
        %v727 = vadd.f32 %v395, %v726
        %v728 = vpop.f32.mrb[0].mxu0
        %v729 = vadd.f32 %v399, %v728
        %v730 = vpop.f32.mrb[0].mxu0
        %v731 = vadd.f32 %v395, %v730
        %v732 = vpop.f32.mrb[0].mxu0
        %v733 = vadd.f32 %v399, %v732
        %734 = vmatprep.mubr.bf16.mxu0 0
        %735 = vmatmul.mubr.bf16.gmra.mrb[0].mxu0 %v339
        %v736 = vpop.f32.mrb[0].mxu0
        %v737 = vadd.f32 %v395, %v736
        %v738 = vpop.f32.mrb[0].mxu0
        %v739 = vadd.f32 %v399, %v738
        %v740 = vpop.f32.mrb[0].mxu0
        %v741 = vadd.f32 %v395, %v740
        %v742 = vpop.f32.mrb[0].mxu0
        %v743 = vadd.f32 %v399, %v742
        %744 = vmatprep.mubr.bf16.mxu0 0
        %745 = vmatmul.mubr.bf16.gmra.mrb[0].mxu0 %v340
        %v746 = vpop.f32.mrb[0].mxu0
        %v747 = vadd.f32 %v395, %v746
        %v748 = vpop.f32.mrb[0].mxu0
        %v749 = vadd.f32 %v399, %v748
        %v750 = vpop.f32.mrb[0].mxu0
        %v751 = vadd.f32 %v395, %v750
        %v752 = vpop.f32.mrb[0].mxu0
        %v753 = vadd.f32 %v399, %v752
        %754 = vmatprep.mubr.bf16.mxu0 0
        %755 = vmatmul.mubr.bf16.gmra.mrb[0].mxu0 %v341
        %v756 = vpop.f32.mrb[0].mxu0
        %v757 = vadd.f32 %v395, %v756
        %v758 = vpop.f32.mrb[0].mxu0
        %v759 = vadd.f32 %v399, %v758
        %v760 = vpop.f32.mrb[0].mxu0
        %v761 = vadd.f32 %v395, %v760
        %v762 = vpop.f32.mrb[0].mxu0
        %v763 = vadd.f32 %v399, %v762
        %764 = vmatprep.mubr.bf16.mxu0 0
        %765 = vmatmul.mubr.bf16.gmra.mrb[0].mxu0 %v342
        %v766 = vpop.f32.mrb[0].mxu0
        %v767 = vadd.f32 %v395, %v766
        %v768 = vpop.f32.mrb[0].mxu0
        %v769 = vadd.f32 %v399, %v768
        %v770 = vpop.f32.mrb[0].mxu0
        %v771 = vadd.f32 %v395, %v770
        %v772 = vpop.f32.mrb[0].mxu0
        %v773 = vadd.f32 %v399, %v772
        %774 = vmatprep.mubr.bf16.mxu0 0
        %775 = vmatmul.mubr.bf16.gmra.mrb[0].mxu0 %v343
        %v776 = vpop.f32.mrb[0].mxu0
        %v777 = vadd.f32 %v395, %v776
        %v778 = vpop.f32.mrb[0].mxu0
        %v779 = vadd.f32 %v399, %v778
        %v780 = vpop.f32.mrb[0].mxu0
        %v781 = vadd.f32 %v395, %v780
        %v782 = vpop.f32.mrb[0].mxu0
        %v783 = vadd.f32 %v399, %v782
        %784 = vmatprep.mubr.bf16.mxu0 0
        %785 = vmatmul.mubr.bf16.gmra.mrb[0].mxu0 %v344
        %v786 = vpop.f32.mrb[0].mxu0
        %v787 = vadd.f32 %v395, %v786
        %v788 = vpop.f32.mrb[0].mxu0
        %v789 = vadd.f32 %v399, %v788
        %v790 = vpop.f32.mrb[0].mxu0
        %v791 = vadd.f32 %v395, %v790
        %v792 = vpop.f32.mrb[0].mxu0
        %v793 = vadd.f32 %v399, %v792
        %794 = vmatprep.mubr.bf16.mxu0 0
        %795 = vmatmul.mubr.bf16.gmra.mrb[0].mxu0 %v345
        %v796 = vpop.f32.mrb[0].mxu0
        %v797 = vadd.f32 %v395, %v796
        %v798 = vpop.f32.mrb[0].mxu0
        %v799 = vadd.f32 %v399, %v798
        %v800 = vpop.f32.mrb[0].mxu0
        %v801 = vadd.f32 %v395, %v800
        %v802 = vpop.f32.mrb[0].mxu0
        %v803 = vadd.f32 %v399, %v802
        %804 = vmatprep.mubr.bf16.mxu0 0
        %805 = vmatmul.mubr.bf16.gmra.mrb[0].mxu0 %v346
        %v806 = vpop.f32.mrb[0].mxu0
        %v807 = vadd.f32 %v395, %v806
        %v808 = vpop.f32.mrb[0].mxu0
        %v809 = vadd.f32 %v399, %v808
        %v810 = vpop.f32.mrb[0].mxu0
        %v811 = vadd.f32 %v395, %v810
        %v812 = vpop.f32.mrb[0].mxu0
        %v813 = vadd.f32 %v399, %v812
        %814 = vmatprep.mubr.bf16.mxu0 0
        %815 = vmatmul.mubr.bf16.gmra.mrb[0].mxu0 %v347
        %v816 = vpop.f32.mrb[0].mxu0
        %v817 = vadd.f32 %v395, %v816
        %v818 = vpop.f32.mrb[0].mxu0
        %v819 = vadd.f32 %v399, %v818
        %v820 = vpop.f32.mrb[0].mxu0
        %v821 = vadd.f32 %v395, %v820
        %v822 = vpop.f32.mrb[0].mxu0
        %v823 = vadd.f32 %v399, %v822
        %824 = vmatprep.mubr.bf16.mxu0 0
        %825 = vmatmul.mubr.bf16.gmra.mrb[0].mxu0 %v348
        %v826 = vpop.f32.mrb[0].mxu0
        %v827 = vadd.f32 %v395, %v826
        %v828 = vpop.f32.mrb[0].mxu0
        %v829 = vadd.f32 %v399, %v828
        %v830 = vpop.f32.mrb[0].mxu0
        %v831 = vadd.f32 %v395, %v830
        %v832 = vpop.f32.mrb[0].mxu0
        %v833 = vadd.f32 %v399, %v832
        %834 = vmatprep.mubr.bf16.mxu0 0
        %835 = vmatmul.mubr.bf16.gmra.mrb[0].mxu0 %v349
        %v836 = vpop.f32.mrb[0].mxu0
        %v837 = vadd.f32 %v395, %v836
        %v838 = vpop.f32.mrb[0].mxu0
        %v839 = vadd.f32 %v399, %v838
        %v840 = vpop.f32.mrb[0].mxu0
        %v841 = vadd.f32 %v395, %v840
        %v842 = vpop.f32.mrb[0].mxu0
        %v843 = vadd.f32 %v399, %v842
        %844 = vmatprep.mubr.bf16.mxu0 0
        %845 = vmatmul.mubr.bf16.gmra.mrb[0].mxu0 %v350
        %v846 = vpop.f32.mrb[0].mxu0
        %v847 = vadd.f32 %v395, %v846
        %v848 = vpop.f32.mrb[0].mxu0
        %v849 = vadd.f32 %v399, %v848
        %v850 = vpop.f32.mrb[0].mxu0
        %v851 = vadd.f32 %v395, %v850
        %v852 = vpop.f32.mrb[0].mxu0
        %v853 = vadd.f32 %v399, %v852
        %854 = vmatprep.mubr.bf16.mxu0 0
        %855 = vmatmul.mubr.bf16.gmra.mrb[0].mxu0 %v351
        %v856 = vpop.f32.mrb[0].mxu0
        %v857 = vadd.f32 %v395, %v856
        %v858 = vpop.f32.mrb[0].mxu0
        %v859 = vadd.f32 %v399, %v858
        %v860 = vpop.f32.mrb[0].mxu0
        %v861 = vadd.f32 %v395, %v860
        %v862 = vpop.f32.mrb[0].mxu0
        %v863 = vadd.f32 %v399, %v862
        %864 = vmatprep.mubr.bf16.mxu0 0
        %865 = vmatmul.mubr.bf16.gmra.mrb[0].mxu0 %v352
        %v866 = vpop.f32.mrb[0].mxu0
        %v867 = vadd.f32 %v395, %v866
        %v868 = vpop.f32.mrb[0].mxu0
        %v869 = vadd.f32 %v399, %v868
        %v870 = vpop.f32.mrb[0].mxu0
        %v871 = vadd.f32 %v395, %v870
        %v872 = vpop.f32.mrb[0].mxu0
        %v873 = vadd.f32 %v399, %v872
        %874 = vmatprep.mubr.bf16.mxu0 0
        %875 = vmatmul.mubr.bf16.gmra.mrb[0].mxu0 %v353
        %v876 = vpop.f32.mrb[0].mxu0
        %v877 = vadd.f32 %v395, %v876
        %v878 = vpop.f32.mrb[0].mxu0
        %v879 = vadd.f32 %v399, %v878
        %v880 = vpop.f32.mrb[0].mxu0
        %v881 = vadd.f32 %v395, %v880
        %v882 = vpop.f32.mrb[0].mxu0
        %v883 = vadd.f32 %v399, %v882
        %884 = vmatprep.mubr.bf16.mxu0 0
        %885 = vmatmul.mubr.bf16.gmra.mrb[0].mxu0 %v354
        %v886 = vpop.f32.mrb[0].mxu0
        %v887 = vadd.f32 %v395, %v886
        %v888 = vpop.f32.mrb[0].mxu0
        %v889 = vadd.f32 %v399, %v888
        %v890 = vpop.f32.mrb[0].mxu0
        %v891 = vadd.f32 %v395, %v890
        %v892 = vpop.f32.mrb[0].mxu0
        %v893 = vadd.f32 %v399, %v892
        %894 = vmatprep.mubr.bf16.mxu0 0
        %895 = vmatmul.mubr.bf16.gmra.mrb[0].mxu0 %v355
        %v896 = vpop.f32.mrb[0].mxu0
        %v897 = vadd.f32 %v395, %v896
        %v898 = vpop.f32.mrb[0].mxu0
        %v899 = vadd.f32 %v399, %v898
        %v900 = vpop.f32.mrb[0].mxu0
        %v901 = vadd.f32 %v395, %v900
        %v902 = vpop.f32.mrb[0].mxu0
        %v903 = vadd.f32 %v399, %v902
        %904 = vmatprep.mubr.bf16.mxu0 0
        %905 = vmatmul.mubr.bf16.gmra.mrb[0].mxu0 %v356
        %v906 = vpop.f32.mrb[0].mxu0
        %v907 = vadd.f32 %v395, %v906
        %v908 = vpop.f32.mrb[0].mxu0
        %v909 = vadd.f32 %v399, %v908
        %v910 = vpop.f32.mrb[0].mxu0
        %v911 = vadd.f32 %v395, %v910
        %v912 = vpop.f32.mrb[0].mxu0
        %v913 = vadd.f32 %v399, %v912
        %914 = vmatprep.mubr.bf16.mxu0 0
        %915 = vmatmul.mubr.bf16.gmra.mrb[0].mxu0 %v357
        %v916 = vpop.f32.mrb[0].mxu0
        %v917 = vadd.f32 %v395, %v916
        %v918 = vpop.f32.mrb[0].mxu0
        %v919 = vadd.f32 %v399, %v918
        %v920 = vpop.f32.mrb[0].mxu0
        %v921 = vadd.f32 %v395, %v920
        %v922 = vpop.f32.mrb[0].mxu0
        %v923 = vadd.f32 %v399, %v922
        %924 = vdwg.mxu0
        %925 = vmatprep.subr.bf16.mxu0 %v511
        %926 = vmatpush1.bf16.msra.mxu0 %v510
        %927 = vmatprep.subr.bf16.mxu0 %v515
        %928 = vmatpush1.bf16.msra.mxu0 %v514
        %929 = vmatprep.subr.bf16.mxu0 %v519
        %930 = vmatpush1.bf16.msra.mxu0 %v518
        %931 = vmatprep.subr.bf16.mxu0 %v523
        %932 = vmatpush1.bf16.msra.mxu0 %v522
        %933 = vmatprep.subr.bf16.mxu0 %v527
        %934 = vmatpush1.bf16.msra.mxu0 %v526
        %935 = vmatprep.subr.bf16.mxu0 %v531
        %936 = vmatpush1.bf16.msra.mxu0 %v530
        %937 = vmatprep.subr.bf16.mxu0 %v535
        %938 = vmatpush1.bf16.msra.mxu0 %v534
        %939 = vmatprep.subr.bf16.mxu0 %v539
        %940 = vmatpush1.bf16.msra.mxu0 %v538
        %941 = vmatprep.subr.bf16.mxu0 0
        %942 = vmatpush1.bf16.msra.mxu0 0
        %943 = vmatprep.subr.bf16.mxu0 0
        %944 = vmatpush1.bf16.msra.mxu0 0
        %945 = vmatprep.subr.bf16.mxu0 0
        %946 = vmatpush1.bf16.msra.mxu0 0
        %947 = vmatprep.subr.bf16.mxu0 0
        %948 = vmatpush1.bf16.msra.mxu0 0
        %949 = vmatprep.subr.bf16.mxu0 0
        %950 = vmatpush1.bf16.msra.mxu0 0
        %951 = vmatprep.subr.bf16.mxu0 0
        %952 = vmatpush1.bf16.msra.mxu0 0
        %953 = vmatprep.subr.bf16.mxu0 0
        %954 = vmatpush1.bf16.msra.mxu0 0
        %955 = vmatprep.subr.bf16.mxu0 0
        %956 = vmatpush1.bf16.msra.mxu0 0
        %957 = vmatprep.mubr.bf16.mxu0 0
        %958 = vmatmul.mubr.bf16.gmra.mrb[0].mxu0 %v326
        %v959 = vpop.f32.mrb[0].mxu0
        %v960 = vadd.f32 %v403, %v959
        %v961 = vpop.f32.mrb[0].mxu0
        %v962 = vadd.f32 %v407, %v961
        %v963 = vpop.f32.mrb[0].mxu0
        %v964 = vadd.f32 %v403, %v963
        %v965 = vpop.f32.mrb[0].mxu0
        %v966 = vadd.f32 %v407, %v965
        %967 = vmatprep.mubr.bf16.mxu0 0
        %968 = vmatmul.mubr.bf16.gmra.mrb[0].mxu0 %v327
        %v969 = vpop.f32.mrb[0].mxu0
        %v970 = vadd.f32 %v403, %v969
        %v971 = vpop.f32.mrb[0].mxu0
        %v972 = vadd.f32 %v407, %v971
        %v973 = vpop.f32.mrb[0].mxu0
        %v974 = vadd.f32 %v403, %v973
        %v975 = vpop.f32.mrb[0].mxu0
        %v976 = vadd.f32 %v407, %v975
        %977 = vmatprep.mubr.bf16.mxu0 0
        %978 = vmatmul.mubr.bf16.gmra.mrb[0].mxu0 %v328
        %v979 = vpop.f32.mrb[0].mxu0
        %v980 = vadd.f32 %v403, %v979
        %v981 = vpop.f32.mrb[0].mxu0
        %v982 = vadd.f32 %v407, %v981
        %v983 = vpop.f32.mrb[0].mxu0
        %v984 = vadd.f32 %v403, %v983
        %v985 = vpop.f32.mrb[0].mxu0
        %v986 = vadd.f32 %v407, %v985
        %987 = vmatprep.mubr.bf16.mxu0 0
        %988 = vmatmul.mubr.bf16.gmra.mrb[0].mxu0 %v329
        %v989 = vpop.f32.mrb[0].mxu0
        %v990 = vadd.f32 %v403, %v989
        %v991 = vpop.f32.mrb[0].mxu0
        %v992 = vadd.f32 %v407, %v991
        %v993 = vpop.f32.mrb[0].mxu0
        %v994 = vadd.f32 %v403, %v993
        %v995 = vpop.f32.mrb[0].mxu0
        %v996 = vadd.f32 %v407, %v995
        %997 = vmatprep.mubr.bf16.mxu0 0
        %998 = vmatmul.mubr.bf16.gmra.mrb[0].mxu0 %v330
        %v999 = vpop.f32.mrb[0].mxu0
        %v1000 = vadd.f32 %v403, %v999
        %v1001 = vpop.f32.mrb[0].mxu0
        %v1002 = vadd.f32 %v407, %v1001
        %v1003 = vpop.f32.mrb[0].mxu0
        %v1004 = vadd.f32 %v403, %v1003
        %v1005 = vpop.f32.mrb[0].mxu0
        %v1006 = vadd.f32 %v407, %v1005
        %1007 = vmatprep.mubr.bf16.mxu0 0
        %1008 = vmatmul.mubr.bf16.gmra.mrb[0].mxu0 %v331
        %v1009 = vpop.f32.mrb[0].mxu0
        %v1010 = vadd.f32 %v403, %v1009
        %v1011 = vpop.f32.mrb[0].mxu0
        %v1012 = vadd.f32 %v407, %v1011
        %v1013 = vpop.f32.mrb[0].mxu0
        %v1014 = vadd.f32 %v403, %v1013
        %v1015 = vpop.f32.mrb[0].mxu0
        %v1016 = vadd.f32 %v407, %v1015
        %1017 = vmatprep.mubr.bf16.mxu0 0
        %1018 = vmatmul.mubr.bf16.gmra.mrb[0].mxu0 %v332
        %v1019 = vpop.f32.mrb[0].mxu0
        %v1020 = vadd.f32 %v403, %v1019
        %v1021 = vpop.f32.mrb[0].mxu0
        %v1022 = vadd.f32 %v407, %v1021
        %v1023 = vpop.f32.mrb[0].mxu0
        %v1024 = vadd.f32 %v403, %v1023
        %v1025 = vpop.f32.mrb[0].mxu0
        %v1026 = vadd.f32 %v407, %v1025
        %1027 = vmatprep.mubr.bf16.mxu0 0
        %1028 = vmatmul.mubr.bf16.gmra.mrb[0].mxu0 %v333
        %v1029 = vpop.f32.mrb[0].mxu0
        %v1030 = vadd.f32 %v403, %v1029
        %v1031 = vpop.f32.mrb[0].mxu0
        %v1032 = vadd.f32 %v407, %v1031
        %v1033 = vpop.f32.mrb[0].mxu0
        %v1034 = vadd.f32 %v403, %v1033
        %v1035 = vpop.f32.mrb[0].mxu0
        %v1036 = vadd.f32 %v407, %v1035
        %1037 = vmatprep.mubr.bf16.mxu0 0
        %1038 = vmatmul.mubr.bf16.gmra.mrb[0].mxu0 %v334
        %v1039 = vpop.f32.mrb[0].mxu0
        %v1040 = vadd.f32 %v403, %v1039
        %v1041 = vpop.f32.mrb[0].mxu0
        %v1042 = vadd.f32 %v407, %v1041
        %v1043 = vpop.f32.mrb[0].mxu0
        %v1044 = vadd.f32 %v403, %v1043
        %v1045 = vpop.f32.mrb[0].mxu0
        %v1046 = vadd.f32 %v407, %v1045
        %1047 = vmatprep.mubr.bf16.mxu0 0
        %1048 = vmatmul.mubr.bf16.gmra.mrb[0].mxu0 %v335
        %v1049 = vpop.f32.mrb[0].mxu0
        %v1050 = vadd.f32 %v403, %v1049
        %v1051 = vpop.f32.mrb[0].mxu0
        %v1052 = vadd.f32 %v407, %v1051
        %v1053 = vpop.f32.mrb[0].mxu0
        %v1054 = vadd.f32 %v403, %v1053
        %v1055 = vpop.f32.mrb[0].mxu0
        %v1056 = vadd.f32 %v407, %v1055
        %1057 = vmatprep.mubr.bf16.mxu0 0
        %1058 = vmatmul.mubr.bf16.gmra.mrb[0].mxu0 %v336
        %v1059 = vpop.f32.mrb[0].mxu0
        %v1060 = vadd.f32 %v403, %v1059
        %v1061 = vpop.f32.mrb[0].mxu0
        %v1062 = vadd.f32 %v407, %v1061
        %v1063 = vpop.f32.mrb[0].mxu0
        %v1064 = vadd.f32 %v403, %v1063
        %v1065 = vpop.f32.mrb[0].mxu0
        %v1066 = vadd.f32 %v407, %v1065
        %1067 = vmatprep.mubr.bf16.mxu0 0
        %1068 = vmatmul.mubr.bf16.gmra.mrb[0].mxu0 %v337
        %v1069 = vpop.f32.mrb[0].mxu0
        %v1070 = vadd.f32 %v403, %v1069
        %v1071 = vpop.f32.mrb[0].mxu0
        %v1072 = vadd.f32 %v407, %v1071
        %v1073 = vpop.f32.mrb[0].mxu0
        %v1074 = vadd.f32 %v403, %v1073
        %v1075 = vpop.f32.mrb[0].mxu0
        %v1076 = vadd.f32 %v407, %v1075
        %1077 = vmatprep.mubr.bf16.mxu0 0
        %1078 = vmatmul.mubr.bf16.gmra.mrb[0].mxu0 %v338
        %v1079 = vpop.f32.mrb[0].mxu0
        %v1080 = vadd.f32 %v403, %v1079
        %v1081 = vpop.f32.mrb[0].mxu0
        %v1082 = vadd.f32 %v407, %v1081
        %v1083 = vpop.f32.mrb[0].mxu0
        %v1084 = vadd.f32 %v403, %v1083
        %v1085 = vpop.f32.mrb[0].mxu0
        %v1086 = vadd.f32 %v407, %v1085
        %1087 = vmatprep.mubr.bf16.mxu0 0
        %1088 = vmatmul.mubr.bf16.gmra.mrb[0].mxu0 %v339
        %v1089 = vpop.f32.mrb[0].mxu0
        %v1090 = vadd.f32 %v403, %v1089
        %v1091 = vpop.f32.mrb[0].mxu0
        %v1092 = vadd.f32 %v407, %v1091
        %v1093 = vpop.f32.mrb[0].mxu0
        %v1094 = vadd.f32 %v403, %v1093
        %v1095 = vpop.f32.mrb[0].mxu0
        %v1096 = vadd.f32 %v407, %v1095
        %1097 = vmatprep.mubr.bf16.mxu0 0
        %1098 = vmatmul.mubr.bf16.gmra.mrb[0].mxu0 %v340
        %v1099 = vpop.f32.mrb[0].mxu0
        %v1100 = vadd.f32 %v403, %v1099
        %v1101 = vpop.f32.mrb[0].mxu0
        %v1102 = vadd.f32 %v407, %v1101
        %v1103 = vpop.f32.mrb[0].mxu0
        %v1104 = vadd.f32 %v403, %v1103
        %v1105 = vpop.f32.mrb[0].mxu0
        %v1106 = vadd.f32 %v407, %v1105
        %1107 = vmatprep.mubr.bf16.mxu0 0
        %1108 = vmatmul.mubr.bf16.gmra.mrb[0].mxu0 %v341
        %v1109 = vpop.f32.mrb[0].mxu0
        %v1110 = vadd.f32 %v403, %v1109
        %v1111 = vpop.f32.mrb[0].mxu0
        %v1112 = vadd.f32 %v407, %v1111
        %v1113 = vpop.f32.mrb[0].mxu0
        %v1114 = vadd.f32 %v403, %v1113
        %v1115 = vpop.f32.mrb[0].mxu0
        %v1116 = vadd.f32 %v407, %v1115
        %1117 = vmatprep.mubr.bf16.mxu0 0
        %1118 = vmatmul.mubr.bf16.gmra.mrb[0].mxu0 %v342
        %v1119 = vpop.f32.mrb[0].mxu0
        %v1120 = vadd.f32 %v403, %v1119
        %v1121 = vpop.f32.mrb[0].mxu0
        %v1122 = vadd.f32 %v407, %v1121
        %v1123 = vpop.f32.mrb[0].mxu0
        %v1124 = vadd.f32 %v403, %v1123
        %v1125 = vpop.f32.mrb[0].mxu0
        %v1126 = vadd.f32 %v407, %v1125
        %1127 = vmatprep.mubr.bf16.mxu0 0
        %1128 = vmatmul.mubr.bf16.gmra.mrb[0].mxu0 %v343
        %v1129 = vpop.f32.mrb[0].mxu0
        %v1130 = vadd.f32 %v403, %v1129
        %v1131 = vpop.f32.mrb[0].mxu0
        %v1132 = vadd.f32 %v407, %v1131
        %v1133 = vpop.f32.mrb[0].mxu0
        %v1134 = vadd.f32 %v403, %v1133
        %v1135 = vpop.f32.mrb[0].mxu0
        %v1136 = vadd.f32 %v407, %v1135
        %1137 = vmatprep.mubr.bf16.mxu0 0
        %1138 = vmatmul.mubr.bf16.gmra.mrb[0].mxu0 %v344
        %v1139 = vpop.f32.mrb[0].mxu0
        %v1140 = vadd.f32 %v403, %v1139
        %v1141 = vpop.f32.mrb[0].mxu0
        %v1142 = vadd.f32 %v407, %v1141
        %v1143 = vpop.f32.mrb[0].mxu0
        %v1144 = vadd.f32 %v403, %v1143
        %v1145 = vpop.f32.mrb[0].mxu0
        %v1146 = vadd.f32 %v407, %v1145
        %1147 = vmatprep.mubr.bf16.mxu0 0
        %1148 = vmatmul.mubr.bf16.gmra.mrb[0].mxu0 %v345
        %v1149 = vpop.f32.mrb[0].mxu0
        %v1150 = vadd.f32 %v403, %v1149
        %v1151 = vpop.f32.mrb[0].mxu0
        %v1152 = vadd.f32 %v407, %v1151
        %v1153 = vpop.f32.mrb[0].mxu0
        %v1154 = vadd.f32 %v403, %v1153
        %v1155 = vpop.f32.mrb[0].mxu0
        %v1156 = vadd.f32 %v407, %v1155
        %1157 = vmatprep.mubr.bf16.mxu0 0
        %1158 = vmatmul.mubr.bf16.gmra.mrb[0].mxu0 %v346
        %v1159 = vpop.f32.mrb[0].mxu0
        %v1160 = vadd.f32 %v403, %v1159
        %v1161 = vpop.f32.mrb[0].mxu0
        %v1162 = vadd.f32 %v407, %v1161
        %v1163 = vpop.f32.mrb[0].mxu0
        %v1164 = vadd.f32 %v403, %v1163
        %v1165 = vpop.f32.mrb[0].mxu0
        %v1166 = vadd.f32 %v407, %v1165
        %1167 = vmatprep.mubr.bf16.mxu0 0
        %1168 = vmatmul.mubr.bf16.gmra.mrb[0].mxu0 %v347
        %v1169 = vpop.f32.mrb[0].mxu0
        %v1170 = vadd.f32 %v403, %v1169
        %v1171 = vpop.f32.mrb[0].mxu0
        %v1172 = vadd.f32 %v407, %v1171
        %v1173 = vpop.f32.mrb[0].mxu0
        %v1174 = vadd.f32 %v403, %v1173
        %v1175 = vpop.f32.mrb[0].mxu0
        %v1176 = vadd.f32 %v407, %v1175
        %1177 = vmatprep.mubr.bf16.mxu0 0
        %1178 = vmatmul.mubr.bf16.gmra.mrb[0].mxu0 %v348
        %v1179 = vpop.f32.mrb[0].mxu0
        %v1180 = vadd.f32 %v403, %v1179
        %v1181 = vpop.f32.mrb[0].mxu0
        %v1182 = vadd.f32 %v407, %v1181
        %v1183 = vpop.f32.mrb[0].mxu0
        %v1184 = vadd.f32 %v403, %v1183
        %v1185 = vpop.f32.mrb[0].mxu0
        %v1186 = vadd.f32 %v407, %v1185
        %1187 = vmatprep.mubr.bf16.mxu0 0
        %1188 = vmatmul.mubr.bf16.gmra.mrb[0].mxu0 %v349
        %v1189 = vpop.f32.mrb[0].mxu0
        %v1190 = vadd.f32 %v403, %v1189
        %v1191 = vpop.f32.mrb[0].mxu0
        %v1192 = vadd.f32 %v407, %v1191
        %v1193 = vpop.f32.mrb[0].mxu0
        %v1194 = vadd.f32 %v403, %v1193
        %v1195 = vpop.f32.mrb[0].mxu0
        %v1196 = vadd.f32 %v407, %v1195
        %1197 = vmatprep.mubr.bf16.mxu0 0
        %1198 = vmatmul.mubr.bf16.gmra.mrb[0].mxu0 %v350
        %v1199 = vpop.f32.mrb[0].mxu0
        %v1200 = vadd.f32 %v403, %v1199
        %v1201 = vpop.f32.mrb[0].mxu0
        %v1202 = vadd.f32 %v407, %v1201
        %v1203 = vpop.f32.mrb[0].mxu0
        %v1204 = vadd.f32 %v403, %v1203
        %v1205 = vpop.f32.mrb[0].mxu0
        %v1206 = vadd.f32 %v407, %v1205
        %1207 = vmatprep.mubr.bf16.mxu0 0
        %1208 = vmatmul.mubr.bf16.gmra.mrb[0].mxu0 %v351
        %v1209 = vpop.f32.mrb[0].mxu0
        %v1210 = vadd.f32 %v403, %v1209
        %v1211 = vpop.f32.mrb[0].mxu0
        %v1212 = vadd.f32 %v407, %v1211
        %v1213 = vpop.f32.mrb[0].mxu0
        %v1214 = vadd.f32 %v403, %v1213
        %v1215 = vpop.f32.mrb[0].mxu0
        %v1216 = vadd.f32 %v407, %v1215
        %1217 = vmatprep.mubr.bf16.mxu0 0
        %1218 = vmatmul.mubr.bf16.gmra.mrb[0].mxu0 %v352
        %v1219 = vpop.f32.mrb[0].mxu0
        %v1220 = vadd.f32 %v403, %v1219
        %v1221 = vpop.f32.mrb[0].mxu0
        %v1222 = vadd.f32 %v407, %v1221
        %v1223 = vpop.f32.mrb[0].mxu0
        %v1224 = vadd.f32 %v403, %v1223
        %v1225 = vpop.f32.mrb[0].mxu0
        %v1226 = vadd.f32 %v407, %v1225
        %1227 = vmatprep.mubr.bf16.mxu0 0
        %1228 = vmatmul.mubr.bf16.gmra.mrb[0].mxu0 %v353
        %v1229 = vpop.f32.mrb[0].mxu0
        %v1230 = vadd.f32 %v403, %v1229
        %v1231 = vpop.f32.mrb[0].mxu0
        %v1232 = vadd.f32 %v407, %v1231
        %v1233 = vpop.f32.mrb[0].mxu0
        %v1234 = vadd.f32 %v403, %v1233
        %v1235 = vpop.f32.mrb[0].mxu0
        %v1236 = vadd.f32 %v407, %v1235
        %1237 = vmatprep.mubr.bf16.mxu0 0
        %1238 = vmatmul.mubr.bf16.gmra.mrb[0].mxu0 %v354
        %v1239 = vpop.f32.mrb[0].mxu0
        %v1240 = vadd.f32 %v403, %v1239
        %v1241 = vpop.f32.mrb[0].mxu0
        %v1242 = vadd.f32 %v407, %v1241
        %v1243 = vpop.f32.mrb[0].mxu0
        %v1244 = vadd.f32 %v403, %v1243
        %v1245 = vpop.f32.mrb[0].mxu0
        %v1246 = vadd.f32 %v407, %v1245
        %1247 = vmatprep.mubr.bf16.mxu0 0
        %1248 = vmatmul.mubr.bf16.gmra.mrb[0].mxu0 %v355
        %v1249 = vpop.f32.mrb[0].mxu0
        %v1250 = vadd.f32 %v403, %v1249
        %v1251 = vpop.f32.mrb[0].mxu0
        %v1252 = vadd.f32 %v407, %v1251
        %v1253 = vpop.f32.mrb[0].mxu0
        %v1254 = vadd.f32 %v403, %v1253
        %v1255 = vpop.f32.mrb[0].mxu0
        %v1256 = vadd.f32 %v407, %v1255
        %1257 = vmatprep.mubr.bf16.mxu0 0
        %1258 = vmatmul.mubr.bf16.gmra.mrb[0].mxu0 %v356
        %v1259 = vpop.f32.mrb[0].mxu0
        %v1260 = vadd.f32 %v403, %v1259
        %v1261 = vpop.f32.mrb[0].mxu0
        %v1262 = vadd.f32 %v407, %v1261
        %v1263 = vpop.f32.mrb[0].mxu0
        %v1264 = vadd.f32 %v403, %v1263
        %v1265 = vpop.f32.mrb[0].mxu0
        %v1266 = vadd.f32 %v407, %v1265
        %1267 = vmatprep.mubr.bf16.mxu0 0
        %1268 = vmatmul.mubr.bf16.gmra.mrb[0].mxu0 %v357
        %v1269 = vpop.f32.mrb[0].mxu0
        %v1270 = vadd.f32 %v403, %v1269
        %v1271 = vpop.f32.mrb[0].mxu0
        %v1272 = vadd.f32 %v407, %v1271
        %v1273 = vpop.f32.mrb[0].mxu0
        %v1274 = vadd.f32 %v403, %v1273
        %v1275 = vpop.f32.mrb[0].mxu0
        %v1276 = vadd.f32 %v407, %v1275
        %1277 = vdwg.mxu0
        %v1278 = vmul.f32 %v607, 0.5
        %v1279 = vmul.f32 %v609, 0.5
        %v1280 = vmul.f32 %v960, 0.5
        %v1281 = vmul.f32 %v962, 0.5
        %v1282 = vmul.f32 %v611, 0.5
        %v1283 = vmul.f32 %v613, 0.5
        %v1284 = vmul.f32 %v964, 0.5
        %v1285 = vmul.f32 %v966, 0.5
        %v1286 = vmul.f32 %v617, 0.5
        %v1287 = vmul.f32 %v619, 0.5
        %v1288 = vmul.f32 %v970, 0.5
        %v1289 = vmul.f32 %v972, 0.5
        %v1290 = vmul.f32 %v621, 0.5
        %v1291 = vmul.f32 %v623, 0.5
        %v1292 = vmul.f32 %v974, 0.5
        %v1293 = vmul.f32 %v976, 0.5
        %v1294 = vmul.f32 %v627, 0.5
        %v1295 = vmul.f32 %v629, 0.5
        %v1296 = vmul.f32 %v980, 0.5
        %v1297 = vmul.f32 %v982, 0.5
        %v1298 = vmul.f32 %v631, 0.5
        %v1299 = vmul.f32 %v633, 0.5
        %v1300 = vmul.f32 %v984, 0.5
        %v1301 = vmul.f32 %v986, 0.5
        %v1302 = vmul.f32 %v637, 0.5
        %v1303 = vmul.f32 %v639, 0.5
        %v1304 = vmul.f32 %v990, 0.5
        %v1305 = vmul.f32 %v992, 0.5
        %v1306 = vmul.f32 %v641, 0.5
        %v1307 = vmul.f32 %v643, 0.5
        %v1308 = vmul.f32 %v994, 0.5
        %v1309 = vmul.f32 %v996, 0.5
        %v1310 = vmul.f32 %v647, 0.5
        %v1311 = vmul.f32 %v649, 0.5
        %v1312 = vmul.f32 %v1000, 0.5
        %v1313 = vmul.f32 %v1002, 0.5
        %v1314 = vmul.f32 %v651, 0.5
        %v1315 = vmul.f32 %v653, 0.5
        %v1316 = vmul.f32 %v1004, 0.5
        %v1317 = vmul.f32 %v1006, 0.5
        %v1318 = vmul.f32 %v657, 0.5
        %v1319 = vmul.f32 %v659, 0.5
        %v1320 = vmul.f32 %v1010, 0.5
        %v1321 = vmul.f32 %v1012, 0.5
        %v1322 = vmul.f32 %v661, 0.5
        %v1323 = vmul.f32 %v663, 0.5
        %v1324 = vmul.f32 %v1014, 0.5
        %v1325 = vmul.f32 %v1016, 0.5
        %v1326 = vmul.f32 %v667, 0.5
        %v1327 = vmul.f32 %v669, 0.5
        %v1328 = vmul.f32 %v1020, 0.5
        %v1329 = vmul.f32 %v1022, 0.5
        %v1330 = vmul.f32 %v671, 0.5
        %v1331 = vmul.f32 %v673, 0.5
        %v1332 = vmul.f32 %v1024, 0.5
        %v1333 = vmul.f32 %v1026, 0.5
        %v1334 = vmul.f32 %v677, 0.5
        %v1335 = vmul.f32 %v679, 0.5
        %v1336 = vmul.f32 %v1030, 0.5
        %v1337 = vmul.f32 %v1032, 0.5
        %v1338 = vmul.f32 %v681, 0.5
        %v1339 = vmul.f32 %v683, 0.5
        %v1340 = vmul.f32 %v1034, 0.5
        %v1341 = vmul.f32 %v1036, 0.5
        %v1342 = vmul.f32 %v687, 0.5
        %v1343 = vmul.f32 %v689, 0.5
        %v1344 = vmul.f32 %v1040, 0.5
        %v1345 = vmul.f32 %v1042, 0.5
        %v1346 = vmul.f32 %v691, 0.5
        %v1347 = vmul.f32 %v693, 0.5
        %v1348 = vmul.f32 %v1044, 0.5
        %v1349 = vmul.f32 %v1046, 0.5
        %v1350 = vmul.f32 %v697, 0.5
        %v1351 = vmul.f32 %v699, 0.5
        %v1352 = vmul.f32 %v1050, 0.5
        %v1353 = vmul.f32 %v1052, 0.5
        %v1354 = vmul.f32 %v701, 0.5
        %v1355 = vmul.f32 %v703, 0.5
        %v1356 = vmul.f32 %v1054, 0.5
        %v1357 = vmul.f32 %v1056, 0.5
        %v1358 = vmul.f32 %v707, 0.5
        %v1359 = vmul.f32 %v709, 0.5
        %v1360 = vmul.f32 %v1060, 0.5
        %v1361 = vmul.f32 %v1062, 0.5
        %v1362 = vmul.f32 %v711, 0.5
        %v1363 = vmul.f32 %v713, 0.5
        %v1364 = vmul.f32 %v1064, 0.5
        %v1365 = vmul.f32 %v1066, 0.5
        %v1366 = vmul.f32 %v717, 0.5
        %v1367 = vmul.f32 %v719, 0.5
        %v1368 = vmul.f32 %v1070, 0.5
        %v1369 = vmul.f32 %v1072, 0.5
        %v1370 = vmul.f32 %v721, 0.5
        %v1371 = vmul.f32 %v723, 0.5
        %v1372 = vmul.f32 %v1074, 0.5
        %v1373 = vmul.f32 %v1076, 0.5
        %v1374 = vmul.f32 %v727, 0.5
        %v1375 = vmul.f32 %v729, 0.5
        %v1376 = vmul.f32 %v1080, 0.5
        %v1377 = vmul.f32 %v1082, 0.5
        %v1378 = vmul.f32 %v731, 0.5
        %v1379 = vmul.f32 %v733, 0.5
        %v1380 = vmul.f32 %v1084, 0.5
        %v1381 = vmul.f32 %v1086, 0.5
        %v1382 = vmul.f32 %v737, 0.5
        %v1383 = vmul.f32 %v739, 0.5
        %v1384 = vmul.f32 %v1090, 0.5
        %v1385 = vmul.f32 %v1092, 0.5
        %v1386 = vmul.f32 %v741, 0.5
        %v1387 = vmul.f32 %v743, 0.5
        %v1388 = vmul.f32 %v1094, 0.5
        %v1389 = vmul.f32 %v1096, 0.5
        %v1390 = vmul.f32 %v747, 0.5
        %v1391 = vmul.f32 %v749, 0.5
        %v1392 = vmul.f32 %v1100, 0.5
        %v1393 = vmul.f32 %v1102, 0.5
        %v1394 = vmul.f32 %v751, 0.5
        %v1395 = vmul.f32 %v753, 0.5
        %v1396 = vmul.f32 %v1104, 0.5
        %v1397 = vmul.f32 %v1106, 0.5
        %v1398 = vmul.f32 %v757, 0.5
        %v1399 = vmul.f32 %v759, 0.5
        %v1400 = vmul.f32 %v1110, 0.5
        %v1401 = vmul.f32 %v1112, 0.5
        %v1402 = vmul.f32 %v761, 0.5
        %v1403 = vmul.f32 %v763, 0.5
        %v1404 = vmul.f32 %v1114, 0.5
        %v1405 = vmul.f32 %v1116, 0.5
        %v1406 = vmul.f32 %v767, 0.5
        %v1407 = vmul.f32 %v769, 0.5
        %v1408 = vmul.f32 %v1120, 0.5
        %v1409 = vmul.f32 %v1122, 0.5
        %v1410 = vmul.f32 %v771, 0.5
        %v1411 = vmul.f32 %v773, 0.5
        %v1412 = vmul.f32 %v1124, 0.5
        %v1413 = vmul.f32 %v1126, 0.5
        %v1414 = vmul.f32 %v777, 0.5
        %v1415 = vmul.f32 %v779, 0.5
        %v1416 = vmul.f32 %v1130, 0.5
        %v1417 = vmul.f32 %v1132, 0.5
        %v1418 = vmul.f32 %v781, 0.5
        %v1419 = vmul.f32 %v783, 0.5
        %v1420 = vmul.f32 %v1134, 0.5
        %v1421 = vmul.f32 %v1136, 0.5
        %v1422 = vmul.f32 %v787, 0.5
        %v1423 = vmul.f32 %v789, 0.5
        %v1424 = vmul.f32 %v1140, 0.5
        %v1425 = vmul.f32 %v1142, 0.5
        %v1426 = vmul.f32 %v791, 0.5
        %v1427 = vmul.f32 %v793, 0.5
        %v1428 = vmul.f32 %v1144, 0.5
        %v1429 = vmul.f32 %v1146, 0.5
        %v1430 = vmul.f32 %v797, 0.5
        %v1431 = vmul.f32 %v799, 0.5
        %v1432 = vmul.f32 %v1150, 0.5
        %v1433 = vmul.f32 %v1152, 0.5
        %v1434 = vmul.f32 %v801, 0.5
        %v1435 = vmul.f32 %v803, 0.5
        %v1436 = vmul.f32 %v1154, 0.5
        %v1437 = vmul.f32 %v1156, 0.5
        %v1438 = vmul.f32 %v807, 0.5
        %v1439 = vmul.f32 %v809, 0.5
        %v1440 = vmul.f32 %v1160, 0.5
        %v1441 = vmul.f32 %v1162, 0.5
        %v1442 = vmul.f32 %v811, 0.5
        %v1443 = vmul.f32 %v813, 0.5
        %v1444 = vmul.f32 %v1164, 0.5
        %v1445 = vmul.f32 %v1166, 0.5
        %v1446 = vmul.f32 %v817, 0.5
        %v1447 = vmul.f32 %v819, 0.5
        %v1448 = vmul.f32 %v1170, 0.5
        %v1449 = vmul.f32 %v1172, 0.5
        %v1450 = vmul.f32 %v821, 0.5
        %v1451 = vmul.f32 %v823, 0.5
        %v1452 = vmul.f32 %v1174, 0.5
        %v1453 = vmul.f32 %v1176, 0.5
        %v1454 = vmul.f32 %v827, 0.5
        %v1455 = vmul.f32 %v829, 0.5
        %v1456 = vmul.f32 %v1180, 0.5
        %v1457 = vmul.f32 %v1182, 0.5
        %v1458 = vmul.f32 %v831, 0.5
        %v1459 = vmul.f32 %v833, 0.5
        %v1460 = vmul.f32 %v1184, 0.5
        %v1461 = vmul.f32 %v1186, 0.5
        %v1462 = vmul.f32 %v837, 0.5
        %v1463 = vmul.f32 %v839, 0.5
        %v1464 = vmul.f32 %v1190, 0.5
        %v1465 = vmul.f32 %v1192, 0.5
        %v1466 = vmul.f32 %v841, 0.5
        %v1467 = vmul.f32 %v843, 0.5
        %v1468 = vmul.f32 %v1194, 0.5
        %v1469 = vmul.f32 %v1196, 0.5
        %v1470 = vmul.f32 %v847, 0.5
        %v1471 = vmul.f32 %v849, 0.5
        %v1472 = vmul.f32 %v1200, 0.5
        %v1473 = vmul.f32 %v1202, 0.5
        %v1474 = vmul.f32 %v851, 0.5
        %v1475 = vmul.f32 %v853, 0.5
        %v1476 = vmul.f32 %v1204, 0.5
        %v1477 = vmul.f32 %v1206, 0.5
        %v1478 = vmul.f32 %v857, 0.5
        %v1479 = vmul.f32 %v859, 0.5
        %v1480 = vmul.f32 %v1210, 0.5
        %v1481 = vmul.f32 %v1212, 0.5
        %v1482 = vmul.f32 %v861, 0.5
        %v1483 = vmul.f32 %v863, 0.5
        %v1484 = vmul.f32 %v1214, 0.5
        %v1485 = vmul.f32 %v1216, 0.5
        %v1486 = vmul.f32 %v867, 0.5
        %v1487 = vmul.f32 %v869, 0.5
        %v1488 = vmul.f32 %v1220, 0.5
        %v1489 = vmul.f32 %v1222, 0.5
        %v1490 = vmul.f32 %v871, 0.5
        %v1491 = vmul.f32 %v873, 0.5
        %v1492 = vmul.f32 %v1224, 0.5
        %v1493 = vmul.f32 %v1226, 0.5
        %v1494 = vmul.f32 %v877, 0.5
        %v1495 = vmul.f32 %v879, 0.5
        %v1496 = vmul.f32 %v1230, 0.5
        %v1497 = vmul.f32 %v1232, 0.5
        %v1498 = vmul.f32 %v881, 0.5
        %v1499 = vmul.f32 %v883, 0.5
        %v1500 = vmul.f32 %v1234, 0.5
        %v1501 = vmul.f32 %v1236, 0.5
        %v1502 = vmul.f32 %v887, 0.5
        %v1503 = vmul.f32 %v889, 0.5
        %v1504 = vmul.f32 %v1240, 0.5
        %v1505 = vmul.f32 %v1242, 0.5
        %v1506 = vmul.f32 %v891, 0.5
        %v1507 = vmul.f32 %v893, 0.5
        %v1508 = vmul.f32 %v1244, 0.5
        %v1509 = vmul.f32 %v1246, 0.5
        %v1510 = vmul.f32 %v897, 0.5
        %v1511 = vmul.f32 %v899, 0.5
        %v1512 = vmul.f32 %v1250, 0.5
        %v1513 = vmul.f32 %v1252, 0.5
        %v1514 = vmul.f32 %v901, 0.5
        %v1515 = vmul.f32 %v903, 0.5
        %v1516 = vmul.f32 %v1254, 0.5
        %v1517 = vmul.f32 %v1256, 0.5
        %v1518 = vmul.f32 %v907, 0.5
        %v1519 = vmul.f32 %v909, 0.5
        %v1520 = vmul.f32 %v1260, 0.5
        %v1521 = vmul.f32 %v1262, 0.5
        %v1522 = vmul.f32 %v911, 0.5
        %v1523 = vmul.f32 %v913, 0.5
        %v1524 = vmul.f32 %v1264, 0.5
        %v1525 = vmul.f32 %v1266, 0.5
        %v1526 = vmul.f32 %v917, 0.5
        %v1527 = vmul.f32 %v919, 0.5
        %v1528 = vmul.f32 %v1270, 0.5
        %v1529 = vmul.f32 %v1272, 0.5
        %v1530 = vmul.f32 %v921, 0.5
        %v1531 = vmul.f32 %v923, 0.5
        %v1532 = vmul.f32 %v1274, 0.5
        %v1533 = vmul.f32 %v1276, 0.5
        %v1534 = vmul.f32 %v607, 0.70710677
        %v1535 = vmul.f32 %v609, 0.70710677
        %v1536 = vmul.f32 %v960, 0.70710677
        %v1537 = vmul.f32 %v962, 0.70710677
        %v1538 = vmul.f32 %v611, 0.70710677
        %v1539 = vmul.f32 %v613, 0.70710677
        %v1540 = vmul.f32 %v964, 0.70710677
        %v1541 = vmul.f32 %v966, 0.70710677
        %v1542 = vmul.f32 %v617, 0.70710677
        %v1543 = vmul.f32 %v619, 0.70710677
        %v1544 = vmul.f32 %v970, 0.70710677
        %v1545 = vmul.f32 %v972, 0.70710677
        %v1546 = vmul.f32 %v621, 0.70710677
        %v1547 = vmul.f32 %v623, 0.70710677
        %v1548 = vmul.f32 %v974, 0.70710677
        %v1549 = vmul.f32 %v976, 0.70710677
        %v1550 = vmul.f32 %v627, 0.70710677
        %v1551 = vmul.f32 %v629, 0.70710677
        %v1552 = vmul.f32 %v980, 0.70710677
        %v1553 = vmul.f32 %v982, 0.70710677
        %v1554 = vmul.f32 %v631, 0.70710677
        %v1555 = vmul.f32 %v633, 0.70710677
        %v1556 = vmul.f32 %v984, 0.70710677
        %v1557 = vmul.f32 %v986, 0.70710677
        %v1558 = vmul.f32 %v637, 0.70710677
        %v1559 = vmul.f32 %v639, 0.70710677
        %v1560 = vmul.f32 %v990, 0.70710677
        %v1561 = vmul.f32 %v992, 0.70710677
        %v1562 = vmul.f32 %v641, 0.70710677
        %v1563 = vmul.f32 %v643, 0.70710677
        %v1564 = vmul.f32 %v994, 0.70710677
        %v1565 = vmul.f32 %v996, 0.70710677
        %v1566 = vmul.f32 %v647, 0.70710677
        %v1567 = vmul.f32 %v649, 0.70710677
        %v1568 = vmul.f32 %v1000, 0.70710677
        %v1569 = vmul.f32 %v1002, 0.70710677
        %v1570 = vmul.f32 %v651, 0.70710677
        %v1571 = vmul.f32 %v653, 0.70710677
        %v1572 = vmul.f32 %v1004, 0.70710677
        %v1573 = vmul.f32 %v1006, 0.70710677
        %v1574 = vmul.f32 %v657, 0.70710677
        %v1575 = vmul.f32 %v659, 0.70710677
        %v1576 = vmul.f32 %v1010, 0.70710677
        %v1577 = vmul.f32 %v1012, 0.70710677
        %v1578 = vmul.f32 %v661, 0.70710677
        %v1579 = vmul.f32 %v663, 0.70710677
        %v1580 = vmul.f32 %v1014, 0.70710677
        %v1581 = vmul.f32 %v1016, 0.70710677
        %v1582 = vmul.f32 %v667, 0.70710677
        %v1583 = vmul.f32 %v669, 0.70710677
        %v1584 = vmul.f32 %v1020, 0.70710677
        %v1585 = vmul.f32 %v1022, 0.70710677
        %v1586 = vmul.f32 %v671, 0.70710677
        %v1587 = vmul.f32 %v673, 0.70710677
        %v1588 = vmul.f32 %v1024, 0.70710677
        %v1589 = vmul.f32 %v1026, 0.70710677
        %v1590 = vmul.f32 %v677, 0.70710677
        %v1591 = vmul.f32 %v679, 0.70710677
        %v1592 = vmul.f32 %v1030, 0.70710677
        %v1593 = vmul.f32 %v1032, 0.70710677
        %v1594 = vmul.f32 %v681, 0.70710677
        %v1595 = vmul.f32 %v683, 0.70710677
        %v1596 = vmul.f32 %v1034, 0.70710677
        %v1597 = vmul.f32 %v1036, 0.70710677
        %v1598 = vmul.f32 %v687, 0.70710677
        %v1599 = vmul.f32 %v689, 0.70710677
        %v1600 = vmul.f32 %v1040, 0.70710677
        %v1601 = vmul.f32 %v1042, 0.70710677
        %v1602 = vmul.f32 %v691, 0.70710677
        %v1603 = vmul.f32 %v693, 0.70710677
        %v1604 = vmul.f32 %v1044, 0.70710677
        %v1605 = vmul.f32 %v1046, 0.70710677
        %v1606 = vmul.f32 %v697, 0.70710677
        %v1607 = vmul.f32 %v699, 0.70710677
        %v1608 = vmul.f32 %v1050, 0.70710677
        %v1609 = vmul.f32 %v1052, 0.70710677
        %v1610 = vmul.f32 %v701, 0.70710677
        %v1611 = vmul.f32 %v703, 0.70710677
        %v1612 = vmul.f32 %v1054, 0.70710677
        %v1613 = vmul.f32 %v1056, 0.70710677
        %v1614 = vmul.f32 %v707, 0.70710677
        %v1615 = vmul.f32 %v709, 0.70710677
        %v1616 = vmul.f32 %v1060, 0.70710677
        %v1617 = vmul.f32 %v1062, 0.70710677
        %v1618 = vmul.f32 %v711, 0.70710677
        %v1619 = vmul.f32 %v713, 0.70710677
        %v1620 = vmul.f32 %v1064, 0.70710677
        %v1621 = vmul.f32 %v1066, 0.70710677
        %v1622 = vmul.f32 %v717, 0.70710677
        %v1623 = vmul.f32 %v719, 0.70710677
        %v1624 = vmul.f32 %v1070, 0.70710677
        %v1625 = vmul.f32 %v1072, 0.70710677
        %v1626 = vmul.f32 %v721, 0.70710677
        %v1627 = vmul.f32 %v723, 0.70710677
        %v1628 = vmul.f32 %v1074, 0.70710677
        %v1629 = vmul.f32 %v1076, 0.70710677
        %v1630 = vmul.f32 %v727, 0.70710677
        %v1631 = vmul.f32 %v729, 0.70710677
        %v1632 = vmul.f32 %v1080, 0.70710677
        %v1633 = vmul.f32 %v1082, 0.70710677
        %v1634 = vmul.f32 %v731, 0.70710677
        %v1635 = vmul.f32 %v733, 0.70710677
        %v1636 = vmul.f32 %v1084, 0.70710677
        %v1637 = vmul.f32 %v1086, 0.70710677
        %v1638 = vmul.f32 %v737, 0.70710677
        %v1639 = vmul.f32 %v739, 0.70710677
        %v1640 = vmul.f32 %v1090, 0.70710677
        %v1641 = vmul.f32 %v1092, 0.70710677
        %v1642 = vmul.f32 %v741, 0.70710677
        %v1643 = vmul.f32 %v743, 0.70710677
        %v1644 = vmul.f32 %v1094, 0.70710677
        %v1645 = vmul.f32 %v1096, 0.70710677
        %v1646 = vmul.f32 %v747, 0.70710677
        %v1647 = vmul.f32 %v749, 0.70710677
        %v1648 = vmul.f32 %v1100, 0.70710677
        %v1649 = vmul.f32 %v1102, 0.70710677
        %v1650 = vmul.f32 %v751, 0.70710677
        %v1651 = vmul.f32 %v753, 0.70710677
        %v1652 = vmul.f32 %v1104, 0.70710677
        %v1653 = vmul.f32 %v1106, 0.70710677
        %v1654 = vmul.f32 %v757, 0.70710677
        %v1655 = vmul.f32 %v759, 0.70710677
        %v1656 = vmul.f32 %v1110, 0.70710677
        %v1657 = vmul.f32 %v1112, 0.70710677
        %v1658 = vmul.f32 %v761, 0.70710677
        %v1659 = vmul.f32 %v763, 0.70710677
        %v1660 = vmul.f32 %v1114, 0.70710677
        %v1661 = vmul.f32 %v1116, 0.70710677
        %v1662 = vmul.f32 %v767, 0.70710677
        %v1663 = vmul.f32 %v769, 0.70710677
        %v1664 = vmul.f32 %v1120, 0.70710677
        %v1665 = vmul.f32 %v1122, 0.70710677
        %v1666 = vmul.f32 %v771, 0.70710677
        %v1667 = vmul.f32 %v773, 0.70710677
        %v1668 = vmul.f32 %v1124, 0.70710677
        %v1669 = vmul.f32 %v1126, 0.70710677
        %v1670 = vmul.f32 %v777, 0.70710677
        %v1671 = vmul.f32 %v779, 0.70710677
        %v1672 = vmul.f32 %v1130, 0.70710677
        %v1673 = vmul.f32 %v1132, 0.70710677
        %v1674 = vmul.f32 %v781, 0.70710677
        %v1675 = vmul.f32 %v783, 0.70710677
        %v1676 = vmul.f32 %v1134, 0.70710677
        %v1677 = vmul.f32 %v1136, 0.70710677
        %v1678 = vmul.f32 %v787, 0.70710677
        %v1679 = vmul.f32 %v789, 0.70710677
        %v1680 = vmul.f32 %v1140, 0.70710677
        %v1681 = vmul.f32 %v1142, 0.70710677
        %v1682 = vmul.f32 %v791, 0.70710677
        %v1683 = vmul.f32 %v793, 0.70710677
        %v1684 = vmul.f32 %v1144, 0.70710677
        %v1685 = vmul.f32 %v1146, 0.70710677
        %v1686 = vmul.f32 %v797, 0.70710677
        %v1687 = vmul.f32 %v799, 0.70710677
        %v1688 = vmul.f32 %v1150, 0.70710677
        %v1689 = vmul.f32 %v1152, 0.70710677
        %v1690 = vmul.f32 %v801, 0.70710677
        %v1691 = vmul.f32 %v803, 0.70710677
        %v1692 = vmul.f32 %v1154, 0.70710677
        %v1693 = vmul.f32 %v1156, 0.70710677
        %v1694 = vmul.f32 %v807, 0.70710677
        %v1695 = vmul.f32 %v809, 0.70710677
        %v1696 = vmul.f32 %v1160, 0.70710677
        %v1697 = vmul.f32 %v1162, 0.70710677
        %v1698 = vmul.f32 %v811, 0.70710677
        %v1699 = vmul.f32 %v813, 0.70710677
        %v1700 = vmul.f32 %v1164, 0.70710677
        %v1701 = vmul.f32 %v1166, 0.70710677
        %v1702 = vmul.f32 %v817, 0.70710677
        %v1703 = vmul.f32 %v819, 0.70710677
        %v1704 = vmul.f32 %v1170, 0.70710677
        %v1705 = vmul.f32 %v1172, 0.70710677
        %v1706 = vmul.f32 %v821, 0.70710677
        %v1707 = vmul.f32 %v823, 0.70710677
        %v1708 = vmul.f32 %v1174, 0.70710677
        %v1709 = vmul.f32 %v1176, 0.70710677
        %v1710 = vmul.f32 %v827, 0.70710677
        %v1711 = vmul.f32 %v829, 0.70710677
        %v1712 = vmul.f32 %v1180, 0.70710677
        %v1713 = vmul.f32 %v1182, 0.70710677
        %v1714 = vmul.f32 %v831, 0.70710677
        %v1715 = vmul.f32 %v833, 0.70710677
        %v1716 = vmul.f32 %v1184, 0.70710677
        %v1717 = vmul.f32 %v1186, 0.70710677
        %v1718 = vmul.f32 %v837, 0.70710677
        %v1719 = vmul.f32 %v839, 0.70710677
        %v1720 = vmul.f32 %v1190, 0.70710677
        %v1721 = vmul.f32 %v1192, 0.70710677
        %v1722 = vmul.f32 %v841, 0.70710677
        %v1723 = vmul.f32 %v843, 0.70710677
        %v1724 = vmul.f32 %v1194, 0.70710677
        %v1725 = vmul.f32 %v1196, 0.70710677
        %v1726 = vmul.f32 %v847, 0.70710677
        %v1727 = vmul.f32 %v849, 0.70710677
        %v1728 = vmul.f32 %v1200, 0.70710677
        %v1729 = vmul.f32 %v1202, 0.70710677
        %v1730 = vmul.f32 %v851, 0.70710677
        %v1731 = vmul.f32 %v853, 0.70710677
        %v1732 = vmul.f32 %v1204, 0.70710677
        %v1733 = vmul.f32 %v1206, 0.70710677
        %v1734 = vmul.f32 %v857, 0.70710677
        %v1735 = vmul.f32 %v859, 0.70710677
        %v1736 = vmul.f32 %v1210, 0.70710677
        %v1737 = vmul.f32 %v1212, 0.70710677
        %v1738 = vmul.f32 %v861, 0.70710677
        %v1739 = vmul.f32 %v863, 0.70710677
        %v1740 = vmul.f32 %v1214, 0.70710677
        %v1741 = vmul.f32 %v1216, 0.70710677
        %v1742 = vmul.f32 %v867, 0.70710677
        %v1743 = vmul.f32 %v869, 0.70710677
        %v1744 = vmul.f32 %v1220, 0.70710677
        %v1745 = vmul.f32 %v1222, 0.70710677
        %v1746 = vmul.f32 %v871, 0.70710677
        %v1747 = vmul.f32 %v873, 0.70710677
        %v1748 = vmul.f32 %v1224, 0.70710677
        %v1749 = vmul.f32 %v1226, 0.70710677
        %v1750 = vmul.f32 %v877, 0.70710677
        %v1751 = vmul.f32 %v879, 0.70710677
        %v1752 = vmul.f32 %v1230, 0.70710677
        %v1753 = vmul.f32 %v1232, 0.70710677
        %v1754 = vmul.f32 %v881, 0.70710677
        %v1755 = vmul.f32 %v883, 0.70710677
        %v1756 = vmul.f32 %v1234, 0.70710677
        %v1757 = vmul.f32 %v1236, 0.70710677
        %v1758 = vmul.f32 %v887, 0.70710677
        %v1759 = vmul.f32 %v889, 0.70710677
        %v1760 = vmul.f32 %v1240, 0.70710677
        %v1761 = vmul.f32 %v1242, 0.70710677
        %v1762 = vmul.f32 %v891, 0.70710677
        %v1763 = vmul.f32 %v893, 0.70710677
        %v1764 = vmul.f32 %v1244, 0.70710677
        %v1765 = vmul.f32 %v1246, 0.70710677
        %v1766 = vmul.f32 %v897, 0.70710677
        %v1767 = vmul.f32 %v899, 0.70710677
        %v1768 = vmul.f32 %v1250, 0.70710677
        %v1769 = vmul.f32 %v1252, 0.70710677
        %v1770 = vmul.f32 %v901, 0.70710677
        %v1771 = vmul.f32 %v903, 0.70710677
        %v1772 = vmul.f32 %v1254, 0.70710677
        %v1773 = vmul.f32 %v1256, 0.70710677
        %v1774 = vmul.f32 %v907, 0.70710677
        %v1775 = vmul.f32 %v909, 0.70710677
        %v1776 = vmul.f32 %v1260, 0.70710677
        %v1777 = vmul.f32 %v1262, 0.70710677
        %v1778 = vmul.f32 %v911, 0.70710677
        %v1779 = vmul.f32 %v913, 0.70710677
        %v1780 = vmul.f32 %v1264, 0.70710677
        %v1781 = vmul.f32 %v1266, 0.70710677
        %v1782 = vmul.f32 %v917, 0.70710677
        %v1783 = vmul.f32 %v919, 0.70710677
        %v1784 = vmul.f32 %v1270, 0.70710677
        %v1785 = vmul.f32 %v1272, 0.70710677
        %v1786 = vmul.f32 %v921, 0.70710677
        %v1787 = vmul.f32 %v923, 0.70710677
        %v1788 = vmul.f32 %v1274, 0.70710677
        %v1789 = vmul.f32 %v1276, 0.70710677
        %v1790 = verf.f32.pop %v1534
        %v1791 = verf.f32.pop %v1535
        %v1792 = verf.f32.pop %v1536
        %v1793 = verf.f32.pop %v1537
        %v1794 = verf.f32.pop %v1538
        %v1795 = verf.f32.pop %v1539
        %v1796 = verf.f32.pop %v1540
        %v1797 = verf.f32.pop %v1541
        %v1798 = verf.f32.pop %v1542
        %v1799 = verf.f32.pop %v1543
        %v1800 = verf.f32.pop %v1544
        %v1801 = verf.f32.pop %v1545
        %v1802 = verf.f32.pop %v1546
        %v1803 = verf.f32.pop %v1547
        %v1804 = verf.f32.pop %v1548
        %v1805 = verf.f32.pop %v1549
        %v1806 = verf.f32.pop %v1550
        %v1807 = verf.f32.pop %v1551
        %v1808 = verf.f32.pop %v1552
        %v1809 = verf.f32.pop %v1553
        %v1810 = verf.f32.pop %v1554
        %v1811 = verf.f32.pop %v1555
        %v1812 = verf.f32.pop %v1556
        %v1813 = verf.f32.pop %v1557
        %v1814 = verf.f32.pop %v1558
        %v1815 = verf.f32.pop %v1559
        %v1816 = verf.f32.pop %v1560
        %v1817 = verf.f32.pop %v1561
        %v1818 = verf.f32.pop %v1562
        %v1819 = verf.f32.pop %v1563
        %v1820 = verf.f32.pop %v1564
        %v1821 = verf.f32.pop %v1565
        %v1822 = verf.f32.pop %v1566
        %v1823 = verf.f32.pop %v1567
        %v1824 = verf.f32.pop %v1568
        %v1825 = verf.f32.pop %v1569
        %v1826 = verf.f32.pop %v1570
        %v1827 = verf.f32.pop %v1571
        %v1828 = verf.f32.pop %v1572
        %v1829 = verf.f32.pop %v1573
        %v1830 = verf.f32.pop %v1574
        %v1831 = verf.f32.pop %v1575
        %v1832 = verf.f32.pop %v1576
        %v1833 = verf.f32.pop %v1577
        %v1834 = verf.f32.pop %v1578
        %v1835 = verf.f32.pop %v1579
        %v1836 = verf.f32.pop %v1580
        %v1837 = verf.f32.pop %v1581
        %v1838 = verf.f32.pop %v1582
        %v1839 = verf.f32.pop %v1583
        %v1840 = verf.f32.pop %v1584
        %v1841 = verf.f32.pop %v1585
        %v1842 = verf.f32.pop %v1586
        %v1843 = verf.f32.pop %v1587
        %v1844 = verf.f32.pop %v1588
        %v1845 = verf.f32.pop %v1589
        %v1846 = verf.f32.pop %v1590
        %v1847 = verf.f32.pop %v1591
        %v1848 = verf.f32.pop %v1592
        %v1849 = verf.f32.pop %v1593
        %v1850 = verf.f32.pop %v1594
        %v1851 = verf.f32.pop %v1595
        %v1852 = verf.f32.pop %v1596
        %v1853 = verf.f32.pop %v1597
        %v1854 = verf.f32.pop %v1598
        %v1855 = verf.f32.pop %v1599
        %v1856 = verf.f32.pop %v1600
        %v1857 = verf.f32.pop %v1601
        %v1858 = verf.f32.pop %v1602
        %v1859 = verf.f32.pop %v1603
        %v1860 = verf.f32.pop %v1604
        %v1861 = verf.f32.pop %v1605
        %v1862 = verf.f32.pop %v1606
        %v1863 = verf.f32.pop %v1607
        %v1864 = verf.f32.pop %v1608
        %v1865 = verf.f32.pop %v1609
        %v1866 = verf.f32.pop %v1610
        %v1867 = verf.f32.pop %v1611
        %v1868 = verf.f32.pop %v1612
        %v1869 = verf.f32.pop %v1613
        %v1870 = verf.f32.pop %v1614
        %v1871 = verf.f32.pop %v1615
        %v1872 = verf.f32.pop %v1616
        %v1873 = verf.f32.pop %v1617
        %v1874 = verf.f32.pop %v1618
        %v1875 = verf.f32.pop %v1619
        %v1876 = verf.f32.pop %v1620
        %v1877 = verf.f32.pop %v1621
        %v1878 = verf.f32.pop %v1622
        %v1879 = verf.f32.pop %v1623
        %v1880 = verf.f32.pop %v1624
        %v1881 = verf.f32.pop %v1625
        %v1882 = verf.f32.pop %v1626
        %v1883 = verf.f32.pop %v1627
        %v1884 = verf.f32.pop %v1628
        %v1885 = verf.f32.pop %v1629
        %v1886 = verf.f32.pop %v1630
        %v1887 = verf.f32.pop %v1631
        %v1888 = verf.f32.pop %v1632
        %v1889 = verf.f32.pop %v1633
        %v1890 = verf.f32.pop %v1634
        %v1891 = verf.f32.pop %v1635
        %v1892 = verf.f32.pop %v1636
        %v1893 = verf.f32.pop %v1637
        %v1894 = verf.f32.pop %v1638
        %v1895 = verf.f32.pop %v1639
        %v1896 = verf.f32.pop %v1640
        %v1897 = verf.f32.pop %v1641
        %v1898 = verf.f32.pop %v1642
        %v1899 = verf.f32.pop %v1643
        %v1900 = verf.f32.pop %v1644
        %v1901 = verf.f32.pop %v1645
        %v1902 = verf.f32.pop %v1646
        %v1903 = verf.f32.pop %v1647
        %v1904 = verf.f32.pop %v1648
        %v1905 = verf.f32.pop %v1649
        %v1906 = verf.f32.pop %v1650
        %v1907 = verf.f32.pop %v1651
        %v1908 = verf.f32.pop %v1652
        %v1909 = verf.f32.pop %v1653
        %v1910 = verf.f32.pop %v1654
        %v1911 = verf.f32.pop %v1655
        %v1912 = verf.f32.pop %v1656
        %v1913 = verf.f32.pop %v1657
        %v1914 = verf.f32.pop %v1658
        %v1915 = verf.f32.pop %v1659
        %v1916 = verf.f32.pop %v1660
        %v1917 = verf.f32.pop %v1661
        %v1918 = verf.f32.pop %v1662
        %v1919 = verf.f32.pop %v1663
        %v1920 = verf.f32.pop %v1664
        %v1921 = verf.f32.pop %v1665
        %v1922 = verf.f32.pop %v1666
        %v1923 = verf.f32.pop %v1667
        %v1924 = verf.f32.pop %v1668
        %v1925 = verf.f32.pop %v1669
        %v1926 = verf.f32.pop %v1670
        %v1927 = verf.f32.pop %v1671
        %v1928 = verf.f32.pop %v1672
        %v1929 = verf.f32.pop %v1673
        %v1930 = verf.f32.pop %v1674
        %v1931 = verf.f32.pop %v1675
        %v1932 = verf.f32.pop %v1676
        %v1933 = verf.f32.pop %v1677
        %v1934 = verf.f32.pop %v1678
        %v1935 = verf.f32.pop %v1679
        %v1936 = verf.f32.pop %v1680
        %v1937 = verf.f32.pop %v1681
        %v1938 = verf.f32.pop %v1682
        %v1939 = verf.f32.pop %v1683
        %v1940 = verf.f32.pop %v1684
        %v1941 = verf.f32.pop %v1685
        %v1942 = verf.f32.pop %v1686
        %v1943 = verf.f32.pop %v1687
        %v1944 = verf.f32.pop %v1688
        %v1945 = verf.f32.pop %v1689
        %v1946 = verf.f32.pop %v1690
        %v1947 = verf.f32.pop %v1691
        %v1948 = verf.f32.pop %v1692
        %v1949 = verf.f32.pop %v1693
        %v1950 = verf.f32.pop %v1694
        %v1951 = verf.f32.pop %v1695
        %v1952 = verf.f32.pop %v1696
        %v1953 = verf.f32.pop %v1697
        %v1954 = verf.f32.pop %v1698
        %v1955 = verf.f32.pop %v1699
        %v1956 = verf.f32.pop %v1700
        %v1957 = verf.f32.pop %v1701
        %v1958 = verf.f32.pop %v1702
        %v1959 = verf.f32.pop %v1703
        %v1960 = verf.f32.pop %v1704
        %v1961 = verf.f32.pop %v1705
        %v1962 = verf.f32.pop %v1706
        %v1963 = verf.f32.pop %v1707
        %v1964 = verf.f32.pop %v1708
        %v1965 = verf.f32.pop %v1709
        %v1966 = verf.f32.pop %v1710
        %v1967 = verf.f32.pop %v1711
        %v1968 = verf.f32.pop %v1712
        %v1969 = verf.f32.pop %v1713
        %v1970 = verf.f32.pop %v1714
        %v1971 = verf.f32.pop %v1715
        %v1972 = verf.f32.pop %v1716
        %v1973 = verf.f32.pop %v1717
        %v1974 = verf.f32.pop %v1718
        %v1975 = verf.f32.pop %v1719
        %v1976 = verf.f32.pop %v1720
        %v1977 = verf.f32.pop %v1721
        %v1978 = verf.f32.pop %v1722
        %v1979 = verf.f32.pop %v1723
        %v1980 = verf.f32.pop %v1724
        %v1981 = verf.f32.pop %v1725
        %v1982 = verf.f32.pop %v1726
        %v1983 = verf.f32.pop %v1727
        %v1984 = verf.f32.pop %v1728
        %v1985 = verf.f32.pop %v1729
        %v1986 = verf.f32.pop %v1730
        %v1987 = verf.f32.pop %v1731
        %v1988 = verf.f32.pop %v1732
        %v1989 = verf.f32.pop %v1733
        %v1990 = verf.f32.pop %v1734
        %v1991 = verf.f32.pop %v1735
        %v1992 = verf.f32.pop %v1736
        %v1993 = verf.f32.pop %v1737
        %v1994 = verf.f32.pop %v1738
        %v1995 = verf.f32.pop %v1739
        %v1996 = verf.f32.pop %v1740
        %v1997 = verf.f32.pop %v1741
        %v1998 = verf.f32.pop %v1742
        %v1999 = verf.f32.pop %v1743
        %v2000 = verf.f32.pop %v1744
        %v2001 = verf.f32.pop %v1745
        %v2002 = verf.f32.pop %v1746
        %v2003 = verf.f32.pop %v1747
        %v2004 = verf.f32.pop %v1748
        %v2005 = verf.f32.pop %v1749
        %v2006 = verf.f32.pop %v1750
        %v2007 = verf.f32.pop %v1751
        %v2008 = verf.f32.pop %v1752
        %v2009 = verf.f32.pop %v1753
        %v2010 = verf.f32.pop %v1754
        %v2011 = verf.f32.pop %v1755
        %v2012 = verf.f32.pop %v1756
        %v2013 = verf.f32.pop %v1757
        %v2014 = verf.f32.pop %v1758
        %v2015 = verf.f32.pop %v1759
        %v2016 = verf.f32.pop %v1760
        %v2017 = verf.f32.pop %v1761
        %v2018 = verf.f32.pop %v1762
        %v2019 = verf.f32.pop %v1763
        %v2020 = verf.f32.pop %v1764
        %v2021 = verf.f32.pop %v1765
        %v2022 = verf.f32.pop %v1766
        %v2023 = verf.f32.pop %v1767
        %v2024 = verf.f32.pop %v1768
        %v2025 = verf.f32.pop %v1769
        %v2026 = verf.f32.pop %v1770
        %v2027 = verf.f32.pop %v1771
        %v2028 = verf.f32.pop %v1772
        %v2029 = verf.f32.pop %v1773
        %v2030 = verf.f32.pop %v1774
        %v2031 = verf.f32.pop %v1775
        %v2032 = verf.f32.pop %v1776
        %v2033 = verf.f32.pop %v1777
        %v2034 = verf.f32.pop %v1778
        %v2035 = verf.f32.pop %v1779
        %v2036 = verf.f32.pop %v1780
        %v2037 = verf.f32.pop %v1781
        %v2038 = verf.f32.pop %v1782
        %v2039 = verf.f32.pop %v1783
        %v2040 = verf.f32.pop %v1784
        %v2041 = verf.f32.pop %v1785
        %v2042 = verf.f32.pop %v1786
        %v2043 = verf.f32.pop %v1787
        %v2044 = verf.f32.pop %v1788
        %v2045 = verf.f32.pop %v1789
        %v2046 = vadd.f32 %v1790, 1.0
        %v2047 = vadd.f32 %v1791, 1.0
        %v2048 = vadd.f32 %v1792, 1.0
        %v2049 = vadd.f32 %v1793, 1.0
        %v2050 = vadd.f32 %v1794, 1.0
        %v2051 = vadd.f32 %v1795, 1.0
        %v2052 = vadd.f32 %v1796, 1.0
        %v2053 = vadd.f32 %v1797, 1.0
        %v2054 = vadd.f32 %v1798, 1.0
        %v2055 = vadd.f32 %v1799, 1.0
        %v2056 = vadd.f32 %v1800, 1.0
        %v2057 = vadd.f32 %v1801, 1.0
        %v2058 = vadd.f32 %v1802, 1.0
        %v2059 = vadd.f32 %v1803, 1.0
        %v2060 = vadd.f32 %v1804, 1.0
        %v2061 = vadd.f32 %v1805, 1.0
        %v2062 = vadd.f32 %v1806, 1.0
        %v2063 = vadd.f32 %v1807, 1.0
        %v2064 = vadd.f32 %v1808, 1.0
        %v2065 = vadd.f32 %v1809, 1.0
        %v2066 = vadd.f32 %v1810, 1.0
        %v2067 = vadd.f32 %v1811, 1.0
        %v2068 = vadd.f32 %v1812, 1.0
        %v2069 = vadd.f32 %v1813, 1.0
        %v2070 = vadd.f32 %v1814, 1.0
        %v2071 = vadd.f32 %v1815, 1.0
        %v2072 = vadd.f32 %v1816, 1.0
        %v2073 = vadd.f32 %v1817, 1.0
        %v2074 = vadd.f32 %v1818, 1.0
        %v2075 = vadd.f32 %v1819, 1.0
        %v2076 = vadd.f32 %v1820, 1.0
        %v2077 = vadd.f32 %v1821, 1.0
        %v2078 = vadd.f32 %v1822, 1.0
        %v2079 = vadd.f32 %v1823, 1.0
        %v2080 = vadd.f32 %v1824, 1.0
        %v2081 = vadd.f32 %v1825, 1.0
        %v2082 = vadd.f32 %v1826, 1.0
        %v2083 = vadd.f32 %v1827, 1.0
        %v2084 = vadd.f32 %v1828, 1.0
        %v2085 = vadd.f32 %v1829, 1.0
        %v2086 = vadd.f32 %v1830, 1.0
        %v2087 = vadd.f32 %v1831, 1.0
        %v2088 = vadd.f32 %v1832, 1.0
        %v2089 = vadd.f32 %v1833, 1.0
        %v2090 = vadd.f32 %v1834, 1.0
        %v2091 = vadd.f32 %v1835, 1.0
        %v2092 = vadd.f32 %v1836, 1.0
        %v2093 = vadd.f32 %v1837, 1.0
        %v2094 = vadd.f32 %v1838, 1.0
        %v2095 = vadd.f32 %v1839, 1.0
        %v2096 = vadd.f32 %v1840, 1.0
        %v2097 = vadd.f32 %v1841, 1.0
        %v2098 = vadd.f32 %v1842, 1.0
        %v2099 = vadd.f32 %v1843, 1.0
        %v2100 = vadd.f32 %v1844, 1.0
        %v2101 = vadd.f32 %v1845, 1.0
        %v2102 = vadd.f32 %v1846, 1.0
        %v2103 = vadd.f32 %v1847, 1.0
        %v2104 = vadd.f32 %v1848, 1.0
        %v2105 = vadd.f32 %v1849, 1.0
        %v2106 = vadd.f32 %v1850, 1.0
        %v2107 = vadd.f32 %v1851, 1.0
        %v2108 = vadd.f32 %v1852, 1.0
        %v2109 = vadd.f32 %v1853, 1.0
        %v2110 = vadd.f32 %v1854, 1.0
        %v2111 = vadd.f32 %v1855, 1.0
        %v2112 = vadd.f32 %v1856, 1.0
        %v2113 = vadd.f32 %v1857, 1.0
        %v2114 = vadd.f32 %v1858, 1.0
        %v2115 = vadd.f32 %v1859, 1.0
        %v2116 = vadd.f32 %v1860, 1.0
        %v2117 = vadd.f32 %v1861, 1.0
        %v2118 = vadd.f32 %v1862, 1.0
        %v2119 = vadd.f32 %v1863, 1.0
        %v2120 = vadd.f32 %v1864, 1.0
        %v2121 = vadd.f32 %v1865, 1.0
        %v2122 = vadd.f32 %v1866, 1.0
        %v2123 = vadd.f32 %v1867, 1.0
        %v2124 = vadd.f32 %v1868, 1.0
        %v2125 = vadd.f32 %v1869, 1.0
        %v2126 = vadd.f32 %v1870, 1.0
        %v2127 = vadd.f32 %v1871, 1.0
        %v2128 = vadd.f32 %v1872, 1.0
        %v2129 = vadd.f32 %v1873, 1.0
        %v2130 = vadd.f32 %v1874, 1.0
        %v2131 = vadd.f32 %v1875, 1.0
        %v2132 = vadd.f32 %v1876, 1.0
        %v2133 = vadd.f32 %v1877, 1.0
        %v2134 = vadd.f32 %v1878, 1.0
        %v2135 = vadd.f32 %v1879, 1.0
        %v2136 = vadd.f32 %v1880, 1.0
        %v2137 = vadd.f32 %v1881, 1.0
        %v2138 = vadd.f32 %v1882, 1.0
        %v2139 = vadd.f32 %v1883, 1.0
        %v2140 = vadd.f32 %v1884, 1.0
        %v2141 = vadd.f32 %v1885, 1.0
        %v2142 = vadd.f32 %v1886, 1.0
        %v2143 = vadd.f32 %v1887, 1.0
        %v2144 = vadd.f32 %v1888, 1.0
        %v2145 = vadd.f32 %v1889, 1.0
        %v2146 = vadd.f32 %v1890, 1.0
        %v2147 = vadd.f32 %v1891, 1.0
        %v2148 = vadd.f32 %v1892, 1.0
        %v2149 = vadd.f32 %v1893, 1.0
        %v2150 = vadd.f32 %v1894, 1.0
        %v2151 = vadd.f32 %v1895, 1.0
        %v2152 = vadd.f32 %v1896, 1.0
        %v2153 = vadd.f32 %v1897, 1.0
        %v2154 = vadd.f32 %v1898, 1.0
        %v2155 = vadd.f32 %v1899, 1.0
        %v2156 = vadd.f32 %v1900, 1.0
        %v2157 = vadd.f32 %v1901, 1.0
        %v2158 = vadd.f32 %v1902, 1.0
        %v2159 = vadd.f32 %v1903, 1.0
        %v2160 = vadd.f32 %v1904, 1.0
        %v2161 = vadd.f32 %v1905, 1.0
        %v2162 = vadd.f32 %v1906, 1.0
        %v2163 = vadd.f32 %v1907, 1.0
        %v2164 = vadd.f32 %v1908, 1.0
        %v2165 = vadd.f32 %v1909, 1.0
        %v2166 = vadd.f32 %v1910, 1.0
        %v2167 = vadd.f32 %v1911, 1.0
        %v2168 = vadd.f32 %v1912, 1.0
        %v2169 = vadd.f32 %v1913, 1.0
        %v2170 = vadd.f32 %v1914, 1.0
        %v2171 = vadd.f32 %v1915, 1.0
        %v2172 = vadd.f32 %v1916, 1.0
        %v2173 = vadd.f32 %v1917, 1.0
        %v2174 = vadd.f32 %v1918, 1.0
        %v2175 = vadd.f32 %v1919, 1.0
        %v2176 = vadd.f32 %v1920, 1.0
        %v2177 = vadd.f32 %v1921, 1.0
        %v2178 = vadd.f32 %v1922, 1.0
        %v2179 = vadd.f32 %v1923, 1.0
        %v2180 = vadd.f32 %v1924, 1.0
        %v2181 = vadd.f32 %v1925, 1.0
        %v2182 = vadd.f32 %v1926, 1.0
        %v2183 = vadd.f32 %v1927, 1.0
        %v2184 = vadd.f32 %v1928, 1.0
        %v2185 = vadd.f32 %v1929, 1.0
        %v2186 = vadd.f32 %v1930, 1.0
        %v2187 = vadd.f32 %v1931, 1.0
        %v2188 = vadd.f32 %v1932, 1.0
        %v2189 = vadd.f32 %v1933, 1.0
        %v2190 = vadd.f32 %v1934, 1.0
        %v2191 = vadd.f32 %v1935, 1.0
        %v2192 = vadd.f32 %v1936, 1.0
        %v2193 = vadd.f32 %v1937, 1.0
        %v2194 = vadd.f32 %v1938, 1.0
        %v2195 = vadd.f32 %v1939, 1.0
        %v2196 = vadd.f32 %v1940, 1.0
        %v2197 = vadd.f32 %v1941, 1.0
        %v2198 = vadd.f32 %v1942, 1.0
        %v2199 = vadd.f32 %v1943, 1.0
        %v2200 = vadd.f32 %v1944, 1.0
        %v2201 = vadd.f32 %v1945, 1.0
        %v2202 = vadd.f32 %v1946, 1.0
        %v2203 = vadd.f32 %v1947, 1.0
        %v2204 = vadd.f32 %v1948, 1.0
        %v2205 = vadd.f32 %v1949, 1.0
        %v2206 = vadd.f32 %v1950, 1.0
        %v2207 = vadd.f32 %v1951, 1.0
        %v2208 = vadd.f32 %v1952, 1.0
        %v2209 = vadd.f32 %v1953, 1.0
        %v2210 = vadd.f32 %v1954, 1.0
        %v2211 = vadd.f32 %v1955, 1.0
        %v2212 = vadd.f32 %v1956, 1.0
        %v2213 = vadd.f32 %v1957, 1.0
        %v2214 = vadd.f32 %v1958, 1.0
        %v2215 = vadd.f32 %v1959, 1.0
        %v2216 = vadd.f32 %v1960, 1.0
        %v2217 = vadd.f32 %v1961, 1.0
        %v2218 = vadd.f32 %v1962, 1.0
        %v2219 = vadd.f32 %v1963, 1.0
        %v2220 = vadd.f32 %v1964, 1.0
        %v2221 = vadd.f32 %v1965, 1.0
        %v2222 = vadd.f32 %v1966, 1.0
        %v2223 = vadd.f32 %v1967, 1.0
        %v2224 = vadd.f32 %v1968, 1.0
        %v2225 = vadd.f32 %v1969, 1.0
        %v2226 = vadd.f32 %v1970, 1.0
        %v2227 = vadd.f32 %v1971, 1.0
        %v2228 = vadd.f32 %v1972, 1.0
        %v2229 = vadd.f32 %v1973, 1.0
        %v2230 = vadd.f32 %v1974, 1.0
        %v2231 = vadd.f32 %v1975, 1.0
        %v2232 = vadd.f32 %v1976, 1.0
        %v2233 = vadd.f32 %v1977, 1.0
        %v2234 = vadd.f32 %v1978, 1.0
        %v2235 = vadd.f32 %v1979, 1.0
        %v2236 = vadd.f32 %v1980, 1.0
        %v2237 = vadd.f32 %v1981, 1.0
        %v2238 = vadd.f32 %v1982, 1.0
        %v2239 = vadd.f32 %v1983, 1.0
        %v2240 = vadd.f32 %v1984, 1.0
        %v2241 = vadd.f32 %v1985, 1.0
        %v2242 = vadd.f32 %v1986, 1.0
        %v2243 = vadd.f32 %v1987, 1.0
        %v2244 = vadd.f32 %v1988, 1.0
        %v2245 = vadd.f32 %v1989, 1.0
        %v2246 = vadd.f32 %v1990, 1.0
        %v2247 = vadd.f32 %v1991, 1.0
        %v2248 = vadd.f32 %v1992, 1.0
        %v2249 = vadd.f32 %v1993, 1.0
        %v2250 = vadd.f32 %v1994, 1.0
        %v2251 = vadd.f32 %v1995, 1.0
        %v2252 = vadd.f32 %v1996, 1.0
        %v2253 = vadd.f32 %v1997, 1.0
        %v2254 = vadd.f32 %v1998, 1.0
        %v2255 = vadd.f32 %v1999, 1.0
        %v2256 = vadd.f32 %v2000, 1.0
        %v2257 = vadd.f32 %v2001, 1.0
        %v2258 = vadd.f32 %v2002, 1.0
        %v2259 = vadd.f32 %v2003, 1.0
        %v2260 = vadd.f32 %v2004, 1.0
        %v2261 = vadd.f32 %v2005, 1.0
        %v2262 = vadd.f32 %v2006, 1.0
        %v2263 = vadd.f32 %v2007, 1.0
        %v2264 = vadd.f32 %v2008, 1.0
        %v2265 = vadd.f32 %v2009, 1.0
        %v2266 = vadd.f32 %v2010, 1.0
        %v2267 = vadd.f32 %v2011, 1.0
        %v2268 = vadd.f32 %v2012, 1.0
        %v2269 = vadd.f32 %v2013, 1.0
        %v2270 = vadd.f32 %v2014, 1.0
        %v2271 = vadd.f32 %v2015, 1.0
        %v2272 = vadd.f32 %v2016, 1.0
        %v2273 = vadd.f32 %v2017, 1.0
        %v2274 = vadd.f32 %v2018, 1.0
        %v2275 = vadd.f32 %v2019, 1.0
        %v2276 = vadd.f32 %v2020, 1.0
        %v2277 = vadd.f32 %v2021, 1.0
        %v2278 = vadd.f32 %v2022, 1.0
        %v2279 = vadd.f32 %v2023, 1.0
        %v2280 = vadd.f32 %v2024, 1.0
        %v2281 = vadd.f32 %v2025, 1.0
        %v2282 = vadd.f32 %v2026, 1.0
        %v2283 = vadd.f32 %v2027, 1.0
        %v2284 = vadd.f32 %v2028, 1.0
        %v2285 = vadd.f32 %v2029, 1.0
        %v2286 = vadd.f32 %v2030, 1.0
        %v2287 = vadd.f32 %v2031, 1.0
        %v2288 = vadd.f32 %v2032, 1.0
        %v2289 = vadd.f32 %v2033, 1.0
        %v2290 = vadd.f32 %v2034, 1.0
        %v2291 = vadd.f32 %v2035, 1.0
        %v2292 = vadd.f32 %v2036, 1.0
        %v2293 = vadd.f32 %v2037, 1.0
        %v2294 = vadd.f32 %v2038, 1.0
        %v2295 = vadd.f32 %v2039, 1.0
        %v2296 = vadd.f32 %v2040, 1.0
        %v2297 = vadd.f32 %v2041, 1.0
        %v2298 = vadd.f32 %v2042, 1.0
        %v2299 = vadd.f32 %v2043, 1.0
        %v2300 = vadd.f32 %v2044, 1.0
        %v2301 = vadd.f32 %v2045, 1.0
        %v2302 = vmul.f32 %v1278, %v2046
        %v2303 = vmul.f32 %v1279, %v2047
        %v2304 = vmul.f32 %v1280, %v2048
        %v2305 = vmul.f32 %v1281, %v2049
        %v2306 = vmul.f32 %v1282, %v2050
        %v2307 = vmul.f32 %v1283, %v2051
        %v2308 = vmul.f32 %v1284, %v2052
        %v2309 = vmul.f32 %v1285, %v2053
        %v2310 = vmul.f32 %v1286, %v2054
        %v2311 = vmul.f32 %v1287, %v2055
        %v2312 = vmul.f32 %v1288, %v2056
        %v2313 = vmul.f32 %v1289, %v2057
        %v2314 = vmul.f32 %v1290, %v2058
        %v2315 = vmul.f32 %v1291, %v2059
        %v2316 = vmul.f32 %v1292, %v2060
        %v2317 = vmul.f32 %v1293, %v2061
        %v2318 = vmul.f32 %v1294, %v2062
        %v2319 = vmul.f32 %v1295, %v2063
        %v2320 = vmul.f32 %v1296, %v2064
        %v2321 = vmul.f32 %v1297, %v2065
        %v2322 = vmul.f32 %v1298, %v2066
        %v2323 = vmul.f32 %v1299, %v2067
        %v2324 = vmul.f32 %v1300, %v2068
        %v2325 = vmul.f32 %v1301, %v2069
        %v2326 = vmul.f32 %v1302, %v2070
        %v2327 = vmul.f32 %v1303, %v2071
        %v2328 = vmul.f32 %v1304, %v2072
        %v2329 = vmul.f32 %v1305, %v2073
        %v2330 = vmul.f32 %v1306, %v2074
        %v2331 = vmul.f32 %v1307, %v2075
        %v2332 = vmul.f32 %v1308, %v2076
        %v2333 = vmul.f32 %v1309, %v2077
        %v2334 = vmul.f32 %v1310, %v2078
        %v2335 = vmul.f32 %v1311, %v2079
        %v2336 = vmul.f32 %v1312, %v2080
        %v2337 = vmul.f32 %v1313, %v2081
        %v2338 = vmul.f32 %v1314, %v2082
        %v2339 = vmul.f32 %v1315, %v2083
        %v2340 = vmul.f32 %v1316, %v2084
        %v2341 = vmul.f32 %v1317, %v2085
        %v2342 = vmul.f32 %v1318, %v2086
        %v2343 = vmul.f32 %v1319, %v2087
        %v2344 = vmul.f32 %v1320, %v2088
        %v2345 = vmul.f32 %v1321, %v2089
        %v2346 = vmul.f32 %v1322, %v2090
        %v2347 = vmul.f32 %v1323, %v2091
        %v2348 = vmul.f32 %v1324, %v2092
        %v2349 = vmul.f32 %v1325, %v2093
        %v2350 = vmul.f32 %v1326, %v2094
        %v2351 = vmul.f32 %v1327, %v2095
        %v2352 = vmul.f32 %v1328, %v2096
        %v2353 = vmul.f32 %v1329, %v2097
        %v2354 = vmul.f32 %v1330, %v2098
        %v2355 = vmul.f32 %v1331, %v2099
        %v2356 = vmul.f32 %v1332, %v2100
        %v2357 = vmul.f32 %v1333, %v2101
        %v2358 = vmul.f32 %v1334, %v2102
        %v2359 = vmul.f32 %v1335, %v2103
        %v2360 = vmul.f32 %v1336, %v2104
        %v2361 = vmul.f32 %v1337, %v2105
        %v2362 = vmul.f32 %v1338, %v2106
        %v2363 = vmul.f32 %v1339, %v2107
        %v2364 = vmul.f32 %v1340, %v2108
        %v2365 = vmul.f32 %v1341, %v2109
        %v2366 = vmul.f32 %v1342, %v2110
        %v2367 = vmul.f32 %v1343, %v2111
        %v2368 = vmul.f32 %v1344, %v2112
        %v2369 = vmul.f32 %v1345, %v2113
        %v2370 = vmul.f32 %v1346, %v2114
        %v2371 = vmul.f32 %v1347, %v2115
        %v2372 = vmul.f32 %v1348, %v2116
        %v2373 = vmul.f32 %v1349, %v2117
        %v2374 = vmul.f32 %v1350, %v2118
        %v2375 = vmul.f32 %v1351, %v2119
        %v2376 = vmul.f32 %v1352, %v2120
        %v2377 = vmul.f32 %v1353, %v2121
        %v2378 = vmul.f32 %v1354, %v2122
        %v2379 = vmul.f32 %v1355, %v2123
        %v2380 = vmul.f32 %v1356, %v2124
        %v2381 = vmul.f32 %v1357, %v2125
        %v2382 = vmul.f32 %v1358, %v2126
        %v2383 = vmul.f32 %v1359, %v2127
        %v2384 = vmul.f32 %v1360, %v2128
        %v2385 = vmul.f32 %v1361, %v2129
        %v2386 = vmul.f32 %v1362, %v2130
        %v2387 = vmul.f32 %v1363, %v2131
        %v2388 = vmul.f32 %v1364, %v2132
        %v2389 = vmul.f32 %v1365, %v2133
        %v2390 = vmul.f32 %v1366, %v2134
        %v2391 = vmul.f32 %v1367, %v2135
        %v2392 = vmul.f32 %v1368, %v2136
        %v2393 = vmul.f32 %v1369, %v2137
        %v2394 = vmul.f32 %v1370, %v2138
        %v2395 = vmul.f32 %v1371, %v2139
        %v2396 = vmul.f32 %v1372, %v2140
        %v2397 = vmul.f32 %v1373, %v2141
        %v2398 = vmul.f32 %v1374, %v2142
        %v2399 = vmul.f32 %v1375, %v2143
        %v2400 = vmul.f32 %v1376, %v2144
        %v2401 = vmul.f32 %v1377, %v2145
        %v2402 = vmul.f32 %v1378, %v2146
        %v2403 = vmul.f32 %v1379, %v2147
        %v2404 = vmul.f32 %v1380, %v2148
        %v2405 = vmul.f32 %v1381, %v2149
        %v2406 = vmul.f32 %v1382, %v2150
        %v2407 = vmul.f32 %v1383, %v2151
        %v2408 = vmul.f32 %v1384, %v2152
        %v2409 = vmul.f32 %v1385, %v2153
        %v2410 = vmul.f32 %v1386, %v2154
        %v2411 = vmul.f32 %v1387, %v2155
        %v2412 = vmul.f32 %v1388, %v2156
        %v2413 = vmul.f32 %v1389, %v2157
        %v2414 = vmul.f32 %v1390, %v2158
        %v2415 = vmul.f32 %v1391, %v2159
        %v2416 = vmul.f32 %v1392, %v2160
        %v2417 = vmul.f32 %v1393, %v2161
        %v2418 = vmul.f32 %v1394, %v2162
        %v2419 = vmul.f32 %v1395, %v2163
        %v2420 = vmul.f32 %v1396, %v2164
        %v2421 = vmul.f32 %v1397, %v2165
        %v2422 = vmul.f32 %v1398, %v2166
        %v2423 = vmul.f32 %v1399, %v2167
        %v2424 = vmul.f32 %v1400, %v2168
        %v2425 = vmul.f32 %v1401, %v2169
        %v2426 = vmul.f32 %v1402, %v2170
        %v2427 = vmul.f32 %v1403, %v2171
        %v2428 = vmul.f32 %v1404, %v2172
        %v2429 = vmul.f32 %v1405, %v2173
        %v2430 = vmul.f32 %v1406, %v2174
        %v2431 = vmul.f32 %v1407, %v2175
        %v2432 = vmul.f32 %v1408, %v2176
        %v2433 = vmul.f32 %v1409, %v2177
        %v2434 = vmul.f32 %v1410, %v2178
        %v2435 = vmul.f32 %v1411, %v2179
        %v2436 = vmul.f32 %v1412, %v2180
        %v2437 = vmul.f32 %v1413, %v2181
        %v2438 = vmul.f32 %v1414, %v2182
        %v2439 = vmul.f32 %v1415, %v2183
        %v2440 = vmul.f32 %v1416, %v2184
        %v2441 = vmul.f32 %v1417, %v2185
        %v2442 = vmul.f32 %v1418, %v2186
        %v2443 = vmul.f32 %v1419, %v2187
        %v2444 = vmul.f32 %v1420, %v2188
        %v2445 = vmul.f32 %v1421, %v2189
        %v2446 = vmul.f32 %v1422, %v2190
        %v2447 = vmul.f32 %v1423, %v2191
        %v2448 = vmul.f32 %v1424, %v2192
        %v2449 = vmul.f32 %v1425, %v2193
        %v2450 = vmul.f32 %v1426, %v2194
        %v2451 = vmul.f32 %v1427, %v2195
        %v2452 = vmul.f32 %v1428, %v2196
        %v2453 = vmul.f32 %v1429, %v2197
        %v2454 = vmul.f32 %v1430, %v2198
        %v2455 = vmul.f32 %v1431, %v2199
        %v2456 = vmul.f32 %v1432, %v2200
        %v2457 = vmul.f32 %v1433, %v2201
        %v2458 = vmul.f32 %v1434, %v2202
        %v2459 = vmul.f32 %v1435, %v2203
        %v2460 = vmul.f32 %v1436, %v2204
        %v2461 = vmul.f32 %v1437, %v2205
        %v2462 = vmul.f32 %v1438, %v2206
        %v2463 = vmul.f32 %v1439, %v2207
        %v2464 = vmul.f32 %v1440, %v2208
        %v2465 = vmul.f32 %v1441, %v2209
        %v2466 = vmul.f32 %v1442, %v2210
        %v2467 = vmul.f32 %v1443, %v2211
        %v2468 = vmul.f32 %v1444, %v2212
        %v2469 = vmul.f32 %v1445, %v2213
        %v2470 = vmul.f32 %v1446, %v2214
        %v2471 = vmul.f32 %v1447, %v2215
        %v2472 = vmul.f32 %v1448, %v2216
        %v2473 = vmul.f32 %v1449, %v2217
        %v2474 = vmul.f32 %v1450, %v2218
        %v2475 = vmul.f32 %v1451, %v2219
        %v2476 = vmul.f32 %v1452, %v2220
        %v2477 = vmul.f32 %v1453, %v2221
        %v2478 = vmul.f32 %v1454, %v2222
        %v2479 = vmul.f32 %v1455, %v2223
        %v2480 = vmul.f32 %v1456, %v2224
        %v2481 = vmul.f32 %v1457, %v2225
        %v2482 = vmul.f32 %v1458, %v2226
        %v2483 = vmul.f32 %v1459, %v2227
        %v2484 = vmul.f32 %v1460, %v2228
        %v2485 = vmul.f32 %v1461, %v2229
        %v2486 = vmul.f32 %v1462, %v2230
        %v2487 = vmul.f32 %v1463, %v2231
        %v2488 = vmul.f32 %v1464, %v2232
        %v2489 = vmul.f32 %v1465, %v2233
        %v2490 = vmul.f32 %v1466, %v2234
        %v2491 = vmul.f32 %v1467, %v2235
        %v2492 = vmul.f32 %v1468, %v2236
        %v2493 = vmul.f32 %v1469, %v2237
        %v2494 = vmul.f32 %v1470, %v2238
        %v2495 = vmul.f32 %v1471, %v2239
        %v2496 = vmul.f32 %v1472, %v2240
        %v2497 = vmul.f32 %v1473, %v2241
        %v2498 = vmul.f32 %v1474, %v2242
        %v2499 = vmul.f32 %v1475, %v2243
        %v2500 = vmul.f32 %v1476, %v2244
        %v2501 = vmul.f32 %v1477, %v2245
        %v2502 = vmul.f32 %v1478, %v2246
        %v2503 = vmul.f32 %v1479, %v2247
        %v2504 = vmul.f32 %v1480, %v2248
        %v2505 = vmul.f32 %v1481, %v2249
        %v2506 = vmul.f32 %v1482, %v2250
        %v2507 = vmul.f32 %v1483, %v2251
        %v2508 = vmul.f32 %v1484, %v2252
        %v2509 = vmul.f32 %v1485, %v2253
        %v2510 = vmul.f32 %v1486, %v2254
        %v2511 = vmul.f32 %v1487, %v2255
        %v2512 = vmul.f32 %v1488, %v2256
        %v2513 = vmul.f32 %v1489, %v2257
        %v2514 = vmul.f32 %v1490, %v2258
        %v2515 = vmul.f32 %v1491, %v2259
        %v2516 = vmul.f32 %v1492, %v2260
        %v2517 = vmul.f32 %v1493, %v2261
        %v2518 = vmul.f32 %v1494, %v2262
        %v2519 = vmul.f32 %v1495, %v2263
        %v2520 = vmul.f32 %v1496, %v2264
        %v2521 = vmul.f32 %v1497, %v2265
        %v2522 = vmul.f32 %v1498, %v2266
        %v2523 = vmul.f32 %v1499, %v2267
        %v2524 = vmul.f32 %v1500, %v2268
        %v2525 = vmul.f32 %v1501, %v2269
        %v2526 = vmul.f32 %v1502, %v2270
        %v2527 = vmul.f32 %v1503, %v2271
        %v2528 = vmul.f32 %v1504, %v2272
        %v2529 = vmul.f32 %v1505, %v2273
        %v2530 = vmul.f32 %v1506, %v2274
        %v2531 = vmul.f32 %v1507, %v2275
        %v2532 = vmul.f32 %v1508, %v2276
        %v2533 = vmul.f32 %v1509, %v2277
        %v2534 = vmul.f32 %v1510, %v2278
        %v2535 = vmul.f32 %v1511, %v2279
        %v2536 = vmul.f32 %v1512, %v2280
        %v2537 = vmul.f32 %v1513, %v2281
        %v2538 = vmul.f32 %v1514, %v2282
        %v2539 = vmul.f32 %v1515, %v2283
        %v2540 = vmul.f32 %v1516, %v2284
        %v2541 = vmul.f32 %v1517, %v2285
        %v2542 = vmul.f32 %v1518, %v2286
        %v2543 = vmul.f32 %v1519, %v2287
        %v2544 = vmul.f32 %v1520, %v2288
        %v2545 = vmul.f32 %v1521, %v2289
        %v2546 = vmul.f32 %v1522, %v2290
        %v2547 = vmul.f32 %v1523, %v2291
        %v2548 = vmul.f32 %v1524, %v2292
        %v2549 = vmul.f32 %v1525, %v2293
        %v2550 = vmul.f32 %v1526, %v2294
        %v2551 = vmul.f32 %v1527, %v2295
        %v2552 = vmul.f32 %v1528, %v2296
        %v2553 = vmul.f32 %v1529, %v2297
        %v2554 = vmul.f32 %v1530, %v2298
        %v2555 = vmul.f32 %v1531, %v2299
        %v2556 = vmul.f32 %v1532, %v2300
        %v2557 = vmul.f32 %v1533, %v2301
        %v2558 = vpack.c.bf16 %v2306, %v2302
        %v2559 = vpack.c.bf16 %v2307, %v2303
        %v2560 = vpack.c.bf16 %v2308, %v2304
        %v2561 = vpack.c.bf16 %v2309, %v2305
        %v2562 = vpack.c.bf16 %v2314, %v2310
        %v2563 = vpack.c.bf16 %v2315, %v2311
        %v2564 = vpack.c.bf16 %v2316, %v2312
        %v2565 = vpack.c.bf16 %v2317, %v2313
        %v2566 = vpack.c.bf16 %v2322, %v2318
        %v2567 = vpack.c.bf16 %v2323, %v2319
        %v2568 = vpack.c.bf16 %v2324, %v2320
        %v2569 = vpack.c.bf16 %v2325, %v2321
        %v2570 = vpack.c.bf16 %v2330, %v2326
        %v2571 = vpack.c.bf16 %v2331, %v2327
        %v2572 = vpack.c.bf16 %v2332, %v2328
        %v2573 = vpack.c.bf16 %v2333, %v2329
        %v2574 = vpack.c.bf16 %v2338, %v2334
        %v2575 = vpack.c.bf16 %v2339, %v2335
        %v2576 = vpack.c.bf16 %v2340, %v2336
        %v2577 = vpack.c.bf16 %v2341, %v2337
        %v2578 = vpack.c.bf16 %v2346, %v2342
        %v2579 = vpack.c.bf16 %v2347, %v2343
        %v2580 = vpack.c.bf16 %v2348, %v2344
        %v2581 = vpack.c.bf16 %v2349, %v2345
        %v2582 = vpack.c.bf16 %v2354, %v2350
        %v2583 = vpack.c.bf16 %v2355, %v2351
        %v2584 = vpack.c.bf16 %v2356, %v2352
        %v2585 = vpack.c.bf16 %v2357, %v2353
        %v2586 = vpack.c.bf16 %v2362, %v2358
        %v2587 = vpack.c.bf16 %v2363, %v2359
        %v2588 = vpack.c.bf16 %v2364, %v2360
        %v2589 = vpack.c.bf16 %v2365, %v2361
        %v2590 = vpack.c.bf16 %v2370, %v2366
        %v2591 = vpack.c.bf16 %v2371, %v2367
        %v2592 = vpack.c.bf16 %v2372, %v2368
        %v2593 = vpack.c.bf16 %v2373, %v2369
        %v2594 = vpack.c.bf16 %v2378, %v2374
        %v2595 = vpack.c.bf16 %v2379, %v2375
        %v2596 = vpack.c.bf16 %v2380, %v2376
        %v2597 = vpack.c.bf16 %v2381, %v2377
        %v2598 = vpack.c.bf16 %v2386, %v2382
        %v2599 = vpack.c.bf16 %v2387, %v2383
        %v2600 = vpack.c.bf16 %v2388, %v2384
        %v2601 = vpack.c.bf16 %v2389, %v2385
        %v2602 = vpack.c.bf16 %v2394, %v2390
        %v2603 = vpack.c.bf16 %v2395, %v2391
        %v2604 = vpack.c.bf16 %v2396, %v2392
        %v2605 = vpack.c.bf16 %v2397, %v2393
        %v2606 = vpack.c.bf16 %v2402, %v2398
        %v2607 = vpack.c.bf16 %v2403, %v2399
        %v2608 = vpack.c.bf16 %v2404, %v2400
        %v2609 = vpack.c.bf16 %v2405, %v2401
        %v2610 = vpack.c.bf16 %v2410, %v2406
        %v2611 = vpack.c.bf16 %v2411, %v2407
        %v2612 = vpack.c.bf16 %v2412, %v2408
        %v2613 = vpack.c.bf16 %v2413, %v2409
        %v2614 = vpack.c.bf16 %v2418, %v2414
        %v2615 = vpack.c.bf16 %v2419, %v2415
        %v2616 = vpack.c.bf16 %v2420, %v2416
        %v2617 = vpack.c.bf16 %v2421, %v2417
        %v2618 = vpack.c.bf16 %v2426, %v2422
        %v2619 = vpack.c.bf16 %v2427, %v2423
        %v2620 = vpack.c.bf16 %v2428, %v2424
        %v2621 = vpack.c.bf16 %v2429, %v2425
        %v2622 = vpack.c.bf16 %v2434, %v2430
        %v2623 = vpack.c.bf16 %v2435, %v2431
        %v2624 = vpack.c.bf16 %v2436, %v2432
        %v2625 = vpack.c.bf16 %v2437, %v2433
        %v2626 = vpack.c.bf16 %v2442, %v2438
        %v2627 = vpack.c.bf16 %v2443, %v2439
        %v2628 = vpack.c.bf16 %v2444, %v2440
        %v2629 = vpack.c.bf16 %v2445, %v2441
        %v2630 = vpack.c.bf16 %v2450, %v2446
        %v2631 = vpack.c.bf16 %v2451, %v2447
        %v2632 = vpack.c.bf16 %v2452, %v2448
        %v2633 = vpack.c.bf16 %v2453, %v2449
        %v2634 = vpack.c.bf16 %v2458, %v2454
        %v2635 = vpack.c.bf16 %v2459, %v2455
        %v2636 = vpack.c.bf16 %v2460, %v2456
        %v2637 = vpack.c.bf16 %v2461, %v2457
        %v2638 = vpack.c.bf16 %v2466, %v2462
        %v2639 = vpack.c.bf16 %v2467, %v2463
        %v2640 = vpack.c.bf16 %v2468, %v2464
        %v2641 = vpack.c.bf16 %v2469, %v2465
        %v2642 = vpack.c.bf16 %v2474, %v2470
        %v2643 = vpack.c.bf16 %v2475, %v2471
        %v2644 = vpack.c.bf16 %v2476, %v2472
        %v2645 = vpack.c.bf16 %v2477, %v2473
        %v2646 = vpack.c.bf16 %v2482, %v2478
        %v2647 = vpack.c.bf16 %v2483, %v2479
        %v2648 = vpack.c.bf16 %v2484, %v2480
        %v2649 = vpack.c.bf16 %v2485, %v2481
        %v2650 = vpack.c.bf16 %v2490, %v2486
        %v2651 = vpack.c.bf16 %v2491, %v2487
        %v2652 = vpack.c.bf16 %v2492, %v2488
        %v2653 = vpack.c.bf16 %v2493, %v2489
        %v2654 = vpack.c.bf16 %v2498, %v2494
        %v2655 = vpack.c.bf16 %v2499, %v2495
        %v2656 = vpack.c.bf16 %v2500, %v2496
        %v2657 = vpack.c.bf16 %v2501, %v2497
        %v2658 = vpack.c.bf16 %v2506, %v2502
        %v2659 = vpack.c.bf16 %v2507, %v2503
        %v2660 = vpack.c.bf16 %v2508, %v2504
        %v2661 = vpack.c.bf16 %v2509, %v2505
        %v2662 = vpack.c.bf16 %v2514, %v2510
        %v2663 = vpack.c.bf16 %v2515, %v2511
        %v2664 = vpack.c.bf16 %v2516, %v2512
        %v2665 = vpack.c.bf16 %v2517, %v2513
        %v2666 = vpack.c.bf16 %v2522, %v2518
        %v2667 = vpack.c.bf16 %v2523, %v2519
        %v2668 = vpack.c.bf16 %v2524, %v2520
        %v2669 = vpack.c.bf16 %v2525, %v2521
        %v2670 = vpack.c.bf16 %v2530, %v2526
        %v2671 = vpack.c.bf16 %v2531, %v2527
        %v2672 = vpack.c.bf16 %v2532, %v2528
        %v2673 = vpack.c.bf16 %v2533, %v2529
        %v2674 = vpack.c.bf16 %v2538, %v2534
        %v2675 = vpack.c.bf16 %v2539, %v2535
        %v2676 = vpack.c.bf16 %v2540, %v2536
        %v2677 = vpack.c.bf16 %v2541, %v2537
        %v2678 = vpack.c.bf16 %v2546, %v2542
        %v2679 = vpack.c.bf16 %v2547, %v2543
        %v2680 = vpack.c.bf16 %v2548, %v2544
        %v2681 = vpack.c.bf16 %v2549, %v2545
        %v2682 = vpack.c.bf16 %v2554, %v2550
        %v2683 = vpack.c.bf16 %v2555, %v2551
        %v2684 = vpack.c.bf16 %v2556, %v2552
        %v2685 = vpack.c.bf16 %v2557, %v2553
        %v2686 = vld [vmem:[#allocation7] sm:$0xf]
        %v2687 = vld [vmem:[#allocation7 + $0x4] sm:$0xf]
        %v2688 = vld [vmem:[#allocation7 + $0x8] sm:$0xf]
        %v2689 = vld [vmem:[#allocation7 + $0xc] sm:$0xf]
        %v2690 = vld [vmem:[#allocation7 + $0x10] sm:$0xf]
        %v2691 = vld [vmem:[#allocation7 + $0x14] sm:$0xf]
        %v2692 = vld [vmem:[#allocation7 + $0x18] sm:$0xf]
        %v2693 = vld [vmem:[#allocation7 + $0x1c] sm:$0xf]
        %v2694 = vld [vmem:[#allocation7 + $0x20] sm:$0xf]
        %v2695 = vld [vmem:[#allocation7 + $0x24] sm:$0xf]
        %v2696 = vld [vmem:[#allocation7 + $0x28] sm:$0xf]
        %v2697 = vld [vmem:[#allocation7 + $0x2c] sm:$0xf]
        %v2698 = vld [vmem:[#allocation7 + $0x30] sm:$0xf]
        %v2699 = vld [vmem:[#allocation7 + $0x34] sm:$0xf]
        %v2700 = vld [vmem:[#allocation7 + $0x38] sm:$0xf]
        %v2701 = vld [vmem:[#allocation7 + $0x3c] sm:$0xf]
        %v2702 = vld [vmem:[#allocation7 + $0x40] sm:$0xf]
        %v2703 = vld [vmem:[#allocation7 + $0x44] sm:$0xf]
        %v2704 = vld [vmem:[#allocation7 + $0x48] sm:$0xf]
        %v2705 = vld [vmem:[#allocation7 + $0x4c] sm:$0xf]
        %v2706 = vld [vmem:[#allocation7 + $0x50] sm:$0xf]
        %v2707 = vld [vmem:[#allocation7 + $0x54] sm:$0xf]
        %v2708 = vld [vmem:[#allocation7 + $0x58] sm:$0xf]
        %v2709 = vld [vmem:[#allocation7 + $0x5c] sm:$0xf]
        %v2710 = vld [vmem:[#allocation7 + $0x60] sm:$0xf]
        %v2711 = vld [vmem:[#allocation7 + $0x64] sm:$0xf]
        %v2712 = vld [vmem:[#allocation7 + $0x68] sm:$0xf]
        %v2713 = vld [vmem:[#allocation7 + $0x6c] sm:$0xf]
        %v2714 = vld [vmem:[#allocation7 + $0x70] sm:$0xf]
        %v2715 = vld [vmem:[#allocation7 + $0x74] sm:$0xf]
        %v2716 = vld [vmem:[#allocation7 + $0x78] sm:$0xf]
        %v2717 = vld [vmem:[#allocation7 + $0x7c] sm:$0xf]
        %v2718 = vld [vmem:[#allocation7 + $0x80] sm:$0xf]
        %v2719 = vld [vmem:[#allocation7 + $0x84] sm:$0xf]
        %v2720 = vld [vmem:[#allocation7 + $0x88] sm:$0xf]
        %v2721 = vld [vmem:[#allocation7 + $0x8c] sm:$0xf]
        %v2722 = vld [vmem:[#allocation7 + $0x90] sm:$0xf]
        %v2723 = vld [vmem:[#allocation7 + $0x94] sm:$0xf]
        %v2724 = vld [vmem:[#allocation7 + $0x98] sm:$0xf]
        %v2725 = vld [vmem:[#allocation7 + $0x9c] sm:$0xf]
        %v2726 = vld [vmem:[#allocation7 + $0xa0] sm:$0xf]
        %v2727 = vld [vmem:[#allocation7 + $0xa4] sm:$0xf]
        %v2728 = vld [vmem:[#allocation7 + $0xa8] sm:$0xf]
        %v2729 = vld [vmem:[#allocation7 + $0xac] sm:$0xf]
        %v2730 = vld [vmem:[#allocation7 + $0xb0] sm:$0xf]
        %v2731 = vld [vmem:[#allocation7 + $0xb4] sm:$0xf]
        %v2732 = vld [vmem:[#allocation7 + $0xb8] sm:$0xf]
        %v2733 = vld [vmem:[#allocation7 + $0xbc] sm:$0xf]
        %v2734 = vld [vmem:[#allocation7 + $0xc0] sm:$0xf]
        %v2735 = vld [vmem:[#allocation7 + $0xc4] sm:$0xf]
        %v2736 = vld [vmem:[#allocation7 + $0xc8] sm:$0xf]
        %v2737 = vld [vmem:[#allocation7 + $0xcc] sm:$0xf]
        %v2738 = vld [vmem:[#allocation7 + $0xd0] sm:$0xf]
        %v2739 = vld [vmem:[#allocation7 + $0xd4] sm:$0xf]
        %v2740 = vld [vmem:[#allocation7 + $0xd8] sm:$0xf]
        %v2741 = vld [vmem:[#allocation7 + $0xdc] sm:$0xf]
        %v2742 = vld [vmem:[#allocation7 + $0xe0] sm:$0xf]
        %v2743 = vld [vmem:[#allocation7 + $0xe4] sm:$0xf]
        %v2744 = vld [vmem:[#allocation7 + $0xe8] sm:$0xf]
        %v2745 = vld [vmem:[#allocation7 + $0xec] sm:$0xf]
        %v2746 = vld [vmem:[#allocation7 + $0xf0] sm:$0xf]
        %v2747 = vld [vmem:[#allocation7 + $0xf4] sm:$0xf]
        %v2748 = vld [vmem:[#allocation7 + $0xf8] sm:$0xf]
        %v2749 = vld [vmem:[#allocation7 + $0xfc] sm:$0xf]
        %v2750 = vld [vmem:[%s3 + $0x4] sm:$0x1]
        %v2752 = vlaneseq
        %v2753 = vshrl.u32 %v2752, 7
        %v2754 = vsub.s32 0, %v2753
        %v2755 = vrot.slane %v2750, %v2754
        %v2821 = vunpack.c.l.b16 %v2686
        %v2822 = vunpack.c.l.b16 %v2687
        %v2823 = vunpack.c.l.b16 %v2688
        %v2824 = vunpack.c.l.b16 %v2689
        %v2825 = vunpack.c.l.b16 %v2690
        %v2826 = vunpack.c.l.b16 %v2691
        %v2827 = vunpack.c.l.b16 %v2692
        %v2828 = vunpack.c.l.b16 %v2693
        %v2829 = vunpack.c.l.b16 %v2694
        %v2830 = vunpack.c.l.b16 %v2695
        %v2831 = vunpack.c.l.b16 %v2696
        %v2832 = vunpack.c.l.b16 %v2697
        %v2833 = vunpack.c.l.b16 %v2698
        %v2834 = vunpack.c.l.b16 %v2699
        %v2835 = vunpack.c.l.b16 %v2700
        %v2836 = vunpack.c.l.b16 %v2701
        %v2837 = vunpack.c.l.b16 %v2702
        %v2838 = vunpack.c.l.b16 %v2703
        %v2839 = vunpack.c.l.b16 %v2704
        %v2840 = vunpack.c.l.b16 %v2705
        %v2841 = vunpack.c.l.b16 %v2706
        %v2842 = vunpack.c.l.b16 %v2707
        %v2843 = vunpack.c.l.b16 %v2708
        %v2844 = vunpack.c.l.b16 %v2709
        %v2845 = vunpack.c.l.b16 %v2710
        %v2846 = vunpack.c.l.b16 %v2711
        %v2847 = vunpack.c.l.b16 %v2712
        %v2848 = vunpack.c.l.b16 %v2713
        %v2849 = vunpack.c.l.b16 %v2714
        %v2850 = vunpack.c.l.b16 %v2715
        %v2851 = vunpack.c.l.b16 %v2716
        %v2852 = vunpack.c.l.b16 %v2717
        %v2853 = vunpack.c.l.b16 %v2718
        %v2854 = vunpack.c.l.b16 %v2719
        %v2855 = vunpack.c.l.b16 %v2720
        %v2856 = vunpack.c.l.b16 %v2721
        %v2857 = vunpack.c.l.b16 %v2722
        %v2858 = vunpack.c.l.b16 %v2723
        %v2859 = vunpack.c.l.b16 %v2724
        %v2860 = vunpack.c.l.b16 %v2725
        %v2861 = vunpack.c.l.b16 %v2726
        %v2862 = vunpack.c.l.b16 %v2727
        %v2863 = vunpack.c.l.b16 %v2728
        %v2864 = vunpack.c.l.b16 %v2729
        %v2865 = vunpack.c.l.b16 %v2730
        %v2866 = vunpack.c.l.b16 %v2731
        %v2867 = vunpack.c.l.b16 %v2732
        %v2868 = vunpack.c.l.b16 %v2733
        %v2869 = vunpack.c.l.b16 %v2734
        %v2870 = vunpack.c.l.b16 %v2735
        %v2871 = vunpack.c.l.b16 %v2736
        %v2872 = vunpack.c.l.b16 %v2737
        %v2873 = vunpack.c.l.b16 %v2738
        %v2874 = vunpack.c.l.b16 %v2739
        %v2875 = vunpack.c.l.b16 %v2740
        %v2876 = vunpack.c.l.b16 %v2741
        %v2877 = vunpack.c.l.b16 %v2742
        %v2878 = vunpack.c.l.b16 %v2743
        %v2879 = vunpack.c.l.b16 %v2744
        %v2880 = vunpack.c.l.b16 %v2745
        %v2881 = vunpack.c.l.b16 %v2746
        %v2882 = vunpack.c.l.b16 %v2747
        %v2883 = vunpack.c.l.b16 %v2748
        %v2884 = vunpack.c.l.b16 %v2749
        %v2885 = vpack.c.b16 %v2822, %v2821
        %v2886 = vpack.c.b16 %v2824, %v2823
        %v2887 = vpack.c.b16 %v2826, %v2825
        %v2888 = vpack.c.b16 %v2828, %v2827
        %v2889 = vpack.c.b16 %v2830, %v2829
        %v2890 = vpack.c.b16 %v2832, %v2831
        %v2891 = vpack.c.b16 %v2834, %v2833
        %v2892 = vpack.c.b16 %v2836, %v2835
        %v2893 = vpack.c.b16 %v2838, %v2837
        %v2894 = vpack.c.b16 %v2840, %v2839
        %v2895 = vpack.c.b16 %v2842, %v2841
        %v2896 = vpack.c.b16 %v2844, %v2843
        %v2897 = vpack.c.b16 %v2846, %v2845
        %v2898 = vpack.c.b16 %v2848, %v2847
        %v2899 = vpack.c.b16 %v2850, %v2849
        %v2900 = vpack.c.b16 %v2852, %v2851
        %v2901 = vpack.c.b16 %v2854, %v2853
        %v2902 = vpack.c.b16 %v2856, %v2855
        %v2903 = vpack.c.b16 %v2858, %v2857
        %v2904 = vpack.c.b16 %v2860, %v2859
        %v2905 = vpack.c.b16 %v2862, %v2861
        %v2906 = vpack.c.b16 %v2864, %v2863
        %v2907 = vpack.c.b16 %v2866, %v2865
        %v2908 = vpack.c.b16 %v2868, %v2867
        %v2909 = vpack.c.b16 %v2870, %v2869
        %v2910 = vpack.c.b16 %v2872, %v2871
        %v2911 = vpack.c.b16 %v2874, %v2873
        %v2912 = vpack.c.b16 %v2876, %v2875
        %v2913 = vpack.c.b16 %v2878, %v2877
        %v2914 = vpack.c.b16 %v2880, %v2879
        %v2915 = vpack.c.b16 %v2882, %v2881
        %v2916 = vpack.c.b16 %v2884, %v2883
        %2949 = vmatprep.subr.bf16.mxu0 0
        %2950 = vmatpush1.bf16.msra.mxu0 %v2885
        %2951 = vmatprep.subr.bf16.mxu0 0
        %2952 = vmatpush1.bf16.msra.mxu0 %v2886
        %2953 = vmatprep.subr.bf16.mxu0 0
        %2954 = vmatpush1.bf16.msra.mxu0 %v2887
        %2955 = vmatprep.subr.bf16.mxu0 0
        %2956 = vmatpush1.bf16.msra.mxu0 %v2888
        %2957 = vmatprep.subr.bf16.mxu0 0
        %2958 = vmatpush1.bf16.msra.mxu0 %v2889
        %2959 = vmatprep.subr.bf16.mxu0 0
        %2960 = vmatpush1.bf16.msra.mxu0 %v2890
        %2961 = vmatprep.subr.bf16.mxu0 0
        %2962 = vmatpush1.bf16.msra.mxu0 %v2891
        %2963 = vmatprep.subr.bf16.mxu0 0
        %2964 = vmatpush1.bf16.msra.mxu0 %v2892
        %2965 = vmatprep.subr.bf16.mxu0 0
        %2966 = vmatpush1.bf16.msra.mxu0 %v2893
        %2967 = vmatprep.subr.bf16.mxu0 0
        %2968 = vmatpush1.bf16.msra.mxu0 %v2894
        %2969 = vmatprep.subr.bf16.mxu0 0
        %2970 = vmatpush1.bf16.msra.mxu0 %v2895
        %2971 = vmatprep.subr.bf16.mxu0 0
        %2972 = vmatpush1.bf16.msra.mxu0 %v2896
        %2973 = vmatprep.subr.bf16.mxu0 0
        %2974 = vmatpush1.bf16.msra.mxu0 %v2897
        %2975 = vmatprep.subr.bf16.mxu0 0
        %2976 = vmatpush1.bf16.msra.mxu0 %v2898
        %2977 = vmatprep.subr.bf16.mxu0 0
        %2978 = vmatpush1.bf16.msra.mxu0 %v2899
        %2979 = vmatprep.subr.bf16.mxu0 0
        %2980 = vmatpush1.bf16.msra.mxu0 %v2900
        %2981 = vmatprep.mubr.bf16.mxu0 %v2559
        %2982 = vmatmul.mubr.bf16.gmra.mrb[0].mxu0 %v2558
        %v2983 = vpop.f32.mrb[0].mxu0
        %v2984 = vadd.f32 %v2755, %v2983
        %v2985 = vpop.f32.mrb[0].mxu0
        %v2986 = vpop.f32.mrb[0].mxu0
        %v2987 = vadd.f32 %v2755, %v2986
        %v2988 = vpop.f32.mrb[0].mxu0
        %2989 = vmatprep.mubr.bf16.mxu0 %v2563
        %2990 = vmatmul.mubr.bf16.gmra.mrb[0].mxu0 %v2562
        %v2991 = vpop.f32.mrb[0].mxu0
        %v2992 = vadd.f32 %v2755, %v2991
        %v2993 = vpop.f32.mrb[0].mxu0
        %v2994 = vpop.f32.mrb[0].mxu0
        %v2995 = vadd.f32 %v2755, %v2994
        %v2996 = vpop.f32.mrb[0].mxu0
        %2997 = vmatprep.mubr.bf16.mxu0 %v2567
        %2998 = vmatmul.mubr.bf16.gmra.mrb[0].mxu0 %v2566
        %v2999 = vpop.f32.mrb[0].mxu0
        %v3000 = vadd.f32 %v2755, %v2999
        %v3001 = vpop.f32.mrb[0].mxu0
        %v3002 = vpop.f32.mrb[0].mxu0
        %v3003 = vadd.f32 %v2755, %v3002
        %v3004 = vpop.f32.mrb[0].mxu0
        %3005 = vmatprep.mubr.bf16.mxu0 %v2571
        %3006 = vmatmul.mubr.bf16.gmra.mrb[0].mxu0 %v2570
        %v3007 = vpop.f32.mrb[0].mxu0
        %v3008 = vadd.f32 %v2755, %v3007
        %v3009 = vpop.f32.mrb[0].mxu0
        %v3010 = vpop.f32.mrb[0].mxu0
        %v3011 = vadd.f32 %v2755, %v3010
        %v3012 = vpop.f32.mrb[0].mxu0
        %3013 = vmatprep.mubr.bf16.mxu0 %v2575
        %3014 = vmatmul.mubr.bf16.gmra.mrb[0].mxu0 %v2574
        %v3015 = vpop.f32.mrb[0].mxu0
        %v3016 = vadd.f32 %v2755, %v3015
        %v3017 = vpop.f32.mrb[0].mxu0
        %v3018 = vpop.f32.mrb[0].mxu0
        %v3019 = vadd.f32 %v2755, %v3018
        %v3020 = vpop.f32.mrb[0].mxu0
        %3021 = vmatprep.mubr.bf16.mxu0 %v2579
        %3022 = vmatmul.mubr.bf16.gmra.mrb[0].mxu0 %v2578
        %v3023 = vpop.f32.mrb[0].mxu0
        %v3024 = vadd.f32 %v2755, %v3023
        %v3025 = vpop.f32.mrb[0].mxu0
        %v3026 = vpop.f32.mrb[0].mxu0
        %v3027 = vadd.f32 %v2755, %v3026
        %v3028 = vpop.f32.mrb[0].mxu0
        %3029 = vmatprep.mubr.bf16.mxu0 %v2583
        %3030 = vmatmul.mubr.bf16.gmra.mrb[0].mxu0 %v2582
        %v3031 = vpop.f32.mrb[0].mxu0
        %v3032 = vadd.f32 %v2755, %v3031
        %v3033 = vpop.f32.mrb[0].mxu0
        %v3034 = vpop.f32.mrb[0].mxu0
        %v3035 = vadd.f32 %v2755, %v3034
        %v3036 = vpop.f32.mrb[0].mxu0
        %3037 = vmatprep.mubr.bf16.mxu0 %v2587
        %3038 = vmatmul.mubr.bf16.gmra.mrb[0].mxu0 %v2586
        %v3039 = vpop.f32.mrb[0].mxu0
        %v3040 = vadd.f32 %v2755, %v3039
        %v3041 = vpop.f32.mrb[0].mxu0
        %v3042 = vpop.f32.mrb[0].mxu0
        %v3043 = vadd.f32 %v2755, %v3042
        %v3044 = vpop.f32.mrb[0].mxu0
        %3045 = vmatprep.mubr.bf16.mxu0 %v2591
        %3046 = vmatmul.mubr.bf16.gmra.mrb[0].mxu0 %v2590
        %v3047 = vpop.f32.mrb[0].mxu0
        %v3048 = vadd.f32 %v2755, %v3047
        %v3049 = vpop.f32.mrb[0].mxu0
        %v3050 = vpop.f32.mrb[0].mxu0
        %v3051 = vadd.f32 %v2755, %v3050
        %v3052 = vpop.f32.mrb[0].mxu0
        %3053 = vmatprep.mubr.bf16.mxu0 %v2595
        %3054 = vmatmul.mubr.bf16.gmra.mrb[0].mxu0 %v2594
        %v3055 = vpop.f32.mrb[0].mxu0
        %v3056 = vadd.f32 %v2755, %v3055
        %v3057 = vpop.f32.mrb[0].mxu0
        %v3058 = vpop.f32.mrb[0].mxu0
        %v3059 = vadd.f32 %v2755, %v3058
        %v3060 = vpop.f32.mrb[0].mxu0
        %3061 = vmatprep.mubr.bf16.mxu0 %v2599
        %3062 = vmatmul.mubr.bf16.gmra.mrb[0].mxu0 %v2598
        %v3063 = vpop.f32.mrb[0].mxu0
        %v3064 = vadd.f32 %v2755, %v3063
        %v3065 = vpop.f32.mrb[0].mxu0
        %v3066 = vpop.f32.mrb[0].mxu0
        %v3067 = vadd.f32 %v2755, %v3066
        %v3068 = vpop.f32.mrb[0].mxu0
        %3069 = vmatprep.mubr.bf16.mxu0 %v2603
        %3070 = vmatmul.mubr.bf16.gmra.mrb[0].mxu0 %v2602
        %v3071 = vpop.f32.mrb[0].mxu0
        %v3072 = vadd.f32 %v2755, %v3071
        %v3073 = vpop.f32.mrb[0].mxu0
        %v3074 = vpop.f32.mrb[0].mxu0
        %v3075 = vadd.f32 %v2755, %v3074
        %v3076 = vpop.f32.mrb[0].mxu0
        %3077 = vmatprep.mubr.bf16.mxu0 %v2607
        %3078 = vmatmul.mubr.bf16.gmra.mrb[0].mxu0 %v2606
        %v3079 = vpop.f32.mrb[0].mxu0
        %v3080 = vadd.f32 %v2755, %v3079
        %v3081 = vpop.f32.mrb[0].mxu0
        %v3082 = vpop.f32.mrb[0].mxu0
        %v3083 = vadd.f32 %v2755, %v3082
        %v3084 = vpop.f32.mrb[0].mxu0
        %3085 = vmatprep.mubr.bf16.mxu0 %v2611
        %3086 = vmatmul.mubr.bf16.gmra.mrb[0].mxu0 %v2610
        %v3087 = vpop.f32.mrb[0].mxu0
        %v3088 = vadd.f32 %v2755, %v3087
        %v3089 = vpop.f32.mrb[0].mxu0
        %v3090 = vpop.f32.mrb[0].mxu0
        %v3091 = vadd.f32 %v2755, %v3090
        %v3092 = vpop.f32.mrb[0].mxu0
        %3093 = vmatprep.mubr.bf16.mxu0 %v2615
        %3094 = vmatmul.mubr.bf16.gmra.mrb[0].mxu0 %v2614
        %v3095 = vpop.f32.mrb[0].mxu0
        %v3096 = vadd.f32 %v2755, %v3095
        %v3097 = vpop.f32.mrb[0].mxu0
        %v3098 = vpop.f32.mrb[0].mxu0
        %v3099 = vadd.f32 %v2755, %v3098
        %v3100 = vpop.f32.mrb[0].mxu0
        %3101 = vmatprep.mubr.bf16.mxu0 %v2619
        %3102 = vmatmul.mubr.bf16.gmra.mrb[0].mxu0 %v2618
        %v3103 = vpop.f32.mrb[0].mxu0
        %v3104 = vadd.f32 %v2755, %v3103
        %v3105 = vpop.f32.mrb[0].mxu0
        %v3106 = vpop.f32.mrb[0].mxu0
        %v3107 = vadd.f32 %v2755, %v3106
        %v3108 = vpop.f32.mrb[0].mxu0
        %3109 = vmatprep.mubr.bf16.mxu0 %v2623
        %3110 = vmatmul.mubr.bf16.gmra.mrb[0].mxu0 %v2622
        %v3111 = vpop.f32.mrb[0].mxu0
        %v3112 = vadd.f32 %v2755, %v3111
        %v3113 = vpop.f32.mrb[0].mxu0
        %v3114 = vpop.f32.mrb[0].mxu0
        %v3115 = vadd.f32 %v2755, %v3114
        %v3116 = vpop.f32.mrb[0].mxu0
        %3117 = vmatprep.mubr.bf16.mxu0 %v2627
        %3118 = vmatmul.mubr.bf16.gmra.mrb[0].mxu0 %v2626
        %v3119 = vpop.f32.mrb[0].mxu0
        %v3120 = vadd.f32 %v2755, %v3119
        %v3121 = vpop.f32.mrb[0].mxu0
        %v3122 = vpop.f32.mrb[0].mxu0
        %v3123 = vadd.f32 %v2755, %v3122
        %v3124 = vpop.f32.mrb[0].mxu0
        %3125 = vmatprep.mubr.bf16.mxu0 %v2631
        %3126 = vmatmul.mubr.bf16.gmra.mrb[0].mxu0 %v2630
        %v3127 = vpop.f32.mrb[0].mxu0
        %v3128 = vadd.f32 %v2755, %v3127
        %v3129 = vpop.f32.mrb[0].mxu0
        %v3130 = vpop.f32.mrb[0].mxu0
        %v3131 = vadd.f32 %v2755, %v3130
        %v3132 = vpop.f32.mrb[0].mxu0
        %3133 = vmatprep.mubr.bf16.mxu0 %v2635
        %3134 = vmatmul.mubr.bf16.gmra.mrb[0].mxu0 %v2634
        %v3135 = vpop.f32.mrb[0].mxu0
        %v3136 = vadd.f32 %v2755, %v3135
        %v3137 = vpop.f32.mrb[0].mxu0
        %v3138 = vpop.f32.mrb[0].mxu0
        %v3139 = vadd.f32 %v2755, %v3138
        %v3140 = vpop.f32.mrb[0].mxu0
        %3141 = vmatprep.mubr.bf16.mxu0 %v2639
        %3142 = vmatmul.mubr.bf16.gmra.mrb[0].mxu0 %v2638
        %v3143 = vpop.f32.mrb[0].mxu0
        %v3144 = vadd.f32 %v2755, %v3143
        %v3145 = vpop.f32.mrb[0].mxu0
        %v3146 = vpop.f32.mrb[0].mxu0
        %v3147 = vadd.f32 %v2755, %v3146
        %v3148 = vpop.f32.mrb[0].mxu0
        %3149 = vmatprep.mubr.bf16.mxu0 %v2643
        %3150 = vmatmul.mubr.bf16.gmra.mrb[0].mxu0 %v2642
        %v3151 = vpop.f32.mrb[0].mxu0
        %v3152 = vadd.f32 %v2755, %v3151
        %v3153 = vpop.f32.mrb[0].mxu0
        %v3154 = vpop.f32.mrb[0].mxu0
        %v3155 = vadd.f32 %v2755, %v3154
        %v3156 = vpop.f32.mrb[0].mxu0
        %3157 = vmatprep.mubr.bf16.mxu0 %v2647
        %3158 = vmatmul.mubr.bf16.gmra.mrb[0].mxu0 %v2646
        %v3159 = vpop.f32.mrb[0].mxu0
        %v3160 = vadd.f32 %v2755, %v3159
        %v3161 = vpop.f32.mrb[0].mxu0
        %v3162 = vpop.f32.mrb[0].mxu0
        %v3163 = vadd.f32 %v2755, %v3162
        %v3164 = vpop.f32.mrb[0].mxu0
        %3165 = vmatprep.mubr.bf16.mxu0 %v2651
        %3166 = vmatmul.mubr.bf16.gmra.mrb[0].mxu0 %v2650
        %v3167 = vpop.f32.mrb[0].mxu0
        %v3168 = vadd.f32 %v2755, %v3167
        %v3169 = vpop.f32.mrb[0].mxu0
        %v3170 = vpop.f32.mrb[0].mxu0
        %v3171 = vadd.f32 %v2755, %v3170
        %v3172 = vpop.f32.mrb[0].mxu0
        %3173 = vmatprep.mubr.bf16.mxu0 %v2655
        %3174 = vmatmul.mubr.bf16.gmra.mrb[0].mxu0 %v2654
        %v3175 = vpop.f32.mrb[0].mxu0
        %v3176 = vadd.f32 %v2755, %v3175
        %v3177 = vpop.f32.mrb[0].mxu0
        %v3178 = vpop.f32.mrb[0].mxu0
        %v3179 = vadd.f32 %v2755, %v3178
        %v3180 = vpop.f32.mrb[0].mxu0
        %3181 = vmatprep.mubr.bf16.mxu0 %v2659
        %3182 = vmatmul.mubr.bf16.gmra.mrb[0].mxu0 %v2658
        %v3183 = vpop.f32.mrb[0].mxu0
        %v3184 = vadd.f32 %v2755, %v3183
        %v3185 = vpop.f32.mrb[0].mxu0
        %v3186 = vpop.f32.mrb[0].mxu0
        %v3187 = vadd.f32 %v2755, %v3186
        %v3188 = vpop.f32.mrb[0].mxu0
        %3189 = vmatprep.mubr.bf16.mxu0 %v2663
        %3190 = vmatmul.mubr.bf16.gmra.mrb[0].mxu0 %v2662
        %v3191 = vpop.f32.mrb[0].mxu0
        %v3192 = vadd.f32 %v2755, %v3191
        %v3193 = vpop.f32.mrb[0].mxu0
        %v3194 = vpop.f32.mrb[0].mxu0
        %v3195 = vadd.f32 %v2755, %v3194
        %v3196 = vpop.f32.mrb[0].mxu0
        %3197 = vmatprep.mubr.bf16.mxu0 %v2667
        %3198 = vmatmul.mubr.bf16.gmra.mrb[0].mxu0 %v2666
        %v3199 = vpop.f32.mrb[0].mxu0
        %v3200 = vadd.f32 %v2755, %v3199
        %v3201 = vpop.f32.mrb[0].mxu0
        %v3202 = vpop.f32.mrb[0].mxu0
        %v3203 = vadd.f32 %v2755, %v3202
        %v3204 = vpop.f32.mrb[0].mxu0
        %3205 = vmatprep.mubr.bf16.mxu0 %v2671
        %3206 = vmatmul.mubr.bf16.gmra.mrb[0].mxu0 %v2670
        %v3207 = vpop.f32.mrb[0].mxu0
        %v3208 = vadd.f32 %v2755, %v3207
        %v3209 = vpop.f32.mrb[0].mxu0
        %v3210 = vpop.f32.mrb[0].mxu0
        %v3211 = vadd.f32 %v2755, %v3210
        %v3212 = vpop.f32.mrb[0].mxu0
        %3213 = vmatprep.mubr.bf16.mxu0 %v2675
        %3214 = vmatmul.mubr.bf16.gmra.mrb[0].mxu0 %v2674
        %v3215 = vpop.f32.mrb[0].mxu0
        %v3216 = vadd.f32 %v2755, %v3215
        %v3217 = vpop.f32.mrb[0].mxu0
        %v3218 = vpop.f32.mrb[0].mxu0
        %v3219 = vadd.f32 %v2755, %v3218
        %v3220 = vpop.f32.mrb[0].mxu0
        %3221 = vmatprep.mubr.bf16.mxu0 %v2679
        %3222 = vmatmul.mubr.bf16.gmra.mrb[0].mxu0 %v2678
        %v3223 = vpop.f32.mrb[0].mxu0
        %v3224 = vadd.f32 %v2755, %v3223
        %v3225 = vpop.f32.mrb[0].mxu0
        %v3226 = vpop.f32.mrb[0].mxu0
        %v3227 = vadd.f32 %v2755, %v3226
        %v3228 = vpop.f32.mrb[0].mxu0
        %3229 = vmatprep.mubr.bf16.mxu0 %v2683
        %3230 = vmatmul.mubr.bf16.gmra.mrb[0].mxu0 %v2682
        %v3231 = vpop.f32.mrb[0].mxu0
        %v3232 = vadd.f32 %v2755, %v3231
        %v3233 = vpop.f32.mrb[0].mxu0
        %v3234 = vpop.f32.mrb[0].mxu0
        %v3235 = vadd.f32 %v2755, %v3234
        %v3236 = vpop.f32.mrb[0].mxu0
        %3237 = vdwg.mxu0
        %3238 = vmatprep.subr.bf16.mxu0 0
        %3239 = vmatpush1.bf16.msra.mxu0 %v2901
        %3240 = vmatprep.subr.bf16.mxu0 0
        %3241 = vmatpush1.bf16.msra.mxu0 %v2902
        %3242 = vmatprep.subr.bf16.mxu0 0
        %3243 = vmatpush1.bf16.msra.mxu0 %v2903
        %3244 = vmatprep.subr.bf16.mxu0 0
        %3245 = vmatpush1.bf16.msra.mxu0 %v2904
        %3246 = vmatprep.subr.bf16.mxu0 0
        %3247 = vmatpush1.bf16.msra.mxu0 %v2905
        %3248 = vmatprep.subr.bf16.mxu0 0
        %3249 = vmatpush1.bf16.msra.mxu0 %v2906
        %3250 = vmatprep.subr.bf16.mxu0 0
        %3251 = vmatpush1.bf16.msra.mxu0 %v2907
        %3252 = vmatprep.subr.bf16.mxu0 0
        %3253 = vmatpush1.bf16.msra.mxu0 %v2908
        %3254 = vmatprep.subr.bf16.mxu0 0
        %3255 = vmatpush1.bf16.msra.mxu0 %v2909
        %3256 = vmatprep.subr.bf16.mxu0 0
        %3257 = vmatpush1.bf16.msra.mxu0 %v2910
        %3258 = vmatprep.subr.bf16.mxu0 0
        %3259 = vmatpush1.bf16.msra.mxu0 %v2911
        %3260 = vmatprep.subr.bf16.mxu0 0
        %3261 = vmatpush1.bf16.msra.mxu0 %v2912
        %3262 = vmatprep.subr.bf16.mxu0 0
        %3263 = vmatpush1.bf16.msra.mxu0 %v2913
        %3264 = vmatprep.subr.bf16.mxu0 0
        %3265 = vmatpush1.bf16.msra.mxu0 %v2914
        %3266 = vmatprep.subr.bf16.mxu0 0
        %3267 = vmatpush1.bf16.msra.mxu0 %v2915
        %3268 = vmatprep.subr.bf16.mxu0 0
        %3269 = vmatpush1.bf16.msra.mxu0 %v2916
        %3270 = vmatprep.mubr.bf16.mxu0 %v2561
        %3271 = vmatmul.mubr.bf16.gmra.mrb[0].mxu0 %v2560
        %v3272 = vpop.f32.mrb[0].mxu0
        %v3273 = vadd.f32 %v2984, %v3272
        %v3274 = vpop.f32.mrb[0].mxu0
        %v3275 = vpop.f32.mrb[0].mxu0
        %v3276 = vadd.f32 %v2987, %v3275
        %v3277 = vpop.f32.mrb[0].mxu0
        %3278 = vmatprep.mubr.bf16.mxu0 %v2565
        %3279 = vmatmul.mubr.bf16.gmra.mrb[0].mxu0 %v2564
        %v3280 = vpop.f32.mrb[0].mxu0
        %v3281 = vadd.f32 %v2992, %v3280
        %v3282 = vpop.f32.mrb[0].mxu0
        %v3283 = vpop.f32.mrb[0].mxu0
        %v3284 = vadd.f32 %v2995, %v3283
        %v3285 = vpop.f32.mrb[0].mxu0
        %3286 = vmatprep.mubr.bf16.mxu0 %v2569
        %3287 = vmatmul.mubr.bf16.gmra.mrb[0].mxu0 %v2568
        %v3288 = vpop.f32.mrb[0].mxu0
        %v3289 = vadd.f32 %v3000, %v3288
        %v3290 = vpop.f32.mrb[0].mxu0
        %v3291 = vpop.f32.mrb[0].mxu0
        %v3292 = vadd.f32 %v3003, %v3291
        %v3293 = vpop.f32.mrb[0].mxu0
        %3294 = vmatprep.mubr.bf16.mxu0 %v2573
        %3295 = vmatmul.mubr.bf16.gmra.mrb[0].mxu0 %v2572
        %v3296 = vpop.f32.mrb[0].mxu0
        %v3297 = vadd.f32 %v3008, %v3296
        %v3298 = vpop.f32.mrb[0].mxu0
        %v3299 = vpop.f32.mrb[0].mxu0
        %v3300 = vadd.f32 %v3011, %v3299
        %v3301 = vpop.f32.mrb[0].mxu0
        %3302 = vmatprep.mubr.bf16.mxu0 %v2577
        %3303 = vmatmul.mubr.bf16.gmra.mrb[0].mxu0 %v2576
        %v3304 = vpop.f32.mrb[0].mxu0
        %v3305 = vadd.f32 %v3016, %v3304
        %v3306 = vpop.f32.mrb[0].mxu0
        %v3307 = vpop.f32.mrb[0].mxu0
        %v3308 = vadd.f32 %v3019, %v3307
        %v3309 = vpop.f32.mrb[0].mxu0
        %3310 = vmatprep.mubr.bf16.mxu0 %v2581
        %3311 = vmatmul.mubr.bf16.gmra.mrb[0].mxu0 %v2580
        %v3312 = vpop.f32.mrb[0].mxu0
        %v3313 = vadd.f32 %v3024, %v3312
        %v3314 = vpop.f32.mrb[0].mxu0
        %v3315 = vpop.f32.mrb[0].mxu0
        %v3316 = vadd.f32 %v3027, %v3315
        %v3317 = vpop.f32.mrb[0].mxu0
        %3318 = vmatprep.mubr.bf16.mxu0 %v2585
        %3319 = vmatmul.mubr.bf16.gmra.mrb[0].mxu0 %v2584
        %v3320 = vpop.f32.mrb[0].mxu0
        %v3321 = vadd.f32 %v3032, %v3320
        %v3322 = vpop.f32.mrb[0].mxu0
        %v3323 = vpop.f32.mrb[0].mxu0
        %v3324 = vadd.f32 %v3035, %v3323
        %v3325 = vpop.f32.mrb[0].mxu0
        %3326 = vmatprep.mubr.bf16.mxu0 %v2589
        %3327 = vmatmul.mubr.bf16.gmra.mrb[0].mxu0 %v2588
        %v3328 = vpop.f32.mrb[0].mxu0
        %v3329 = vadd.f32 %v3040, %v3328
        %v3330 = vpop.f32.mrb[0].mxu0
        %v3331 = vpop.f32.mrb[0].mxu0
        %v3332 = vadd.f32 %v3043, %v3331
        %v3333 = vpop.f32.mrb[0].mxu0
        %3334 = vmatprep.mubr.bf16.mxu0 %v2593
        %3335 = vmatmul.mubr.bf16.gmra.mrb[0].mxu0 %v2592
        %v3336 = vpop.f32.mrb[0].mxu0
        %v3337 = vadd.f32 %v3048, %v3336
        %v3338 = vpop.f32.mrb[0].mxu0
        %v3339 = vpop.f32.mrb[0].mxu0
        %v3340 = vadd.f32 %v3051, %v3339
        %v3341 = vpop.f32.mrb[0].mxu0
        %3342 = vmatprep.mubr.bf16.mxu0 %v2597
        %3343 = vmatmul.mubr.bf16.gmra.mrb[0].mxu0 %v2596
        %v3344 = vpop.f32.mrb[0].mxu0
        %v3345 = vadd.f32 %v3056, %v3344
        %v3346 = vpop.f32.mrb[0].mxu0
        %v3347 = vpop.f32.mrb[0].mxu0
        %v3348 = vadd.f32 %v3059, %v3347
        %v3349 = vpop.f32.mrb[0].mxu0
        %3350 = vmatprep.mubr.bf16.mxu0 %v2601
        %3351 = vmatmul.mubr.bf16.gmra.mrb[0].mxu0 %v2600
        %v3352 = vpop.f32.mrb[0].mxu0
        %v3353 = vadd.f32 %v3064, %v3352
        %v3354 = vpop.f32.mrb[0].mxu0
        %v3355 = vpop.f32.mrb[0].mxu0
        %v3356 = vadd.f32 %v3067, %v3355
        %v3357 = vpop.f32.mrb[0].mxu0
        %3358 = vmatprep.mubr.bf16.mxu0 %v2605
        %3359 = vmatmul.mubr.bf16.gmra.mrb[0].mxu0 %v2604
        %v3360 = vpop.f32.mrb[0].mxu0
        %v3361 = vadd.f32 %v3072, %v3360
        %v3362 = vpop.f32.mrb[0].mxu0
        %v3363 = vpop.f32.mrb[0].mxu0
        %v3364 = vadd.f32 %v3075, %v3363
        %v3365 = vpop.f32.mrb[0].mxu0
        %3366 = vmatprep.mubr.bf16.mxu0 %v2609
        %3367 = vmatmul.mubr.bf16.gmra.mrb[0].mxu0 %v2608
        %v3368 = vpop.f32.mrb[0].mxu0
        %v3369 = vadd.f32 %v3080, %v3368
        %v3370 = vpop.f32.mrb[0].mxu0
        %v3371 = vpop.f32.mrb[0].mxu0
        %v3372 = vadd.f32 %v3083, %v3371
        %v3373 = vpop.f32.mrb[0].mxu0
        %3374 = vmatprep.mubr.bf16.mxu0 %v2613
        %3375 = vmatmul.mubr.bf16.gmra.mrb[0].mxu0 %v2612
        %v3376 = vpop.f32.mrb[0].mxu0
        %v3377 = vadd.f32 %v3088, %v3376
        %v3378 = vpop.f32.mrb[0].mxu0
        %v3379 = vpop.f32.mrb[0].mxu0
        %v3380 = vadd.f32 %v3091, %v3379
        %v3381 = vpop.f32.mrb[0].mxu0
        %3382 = vmatprep.mubr.bf16.mxu0 %v2617
        %3383 = vmatmul.mubr.bf16.gmra.mrb[0].mxu0 %v2616
        %v3384 = vpop.f32.mrb[0].mxu0
        %v3385 = vadd.f32 %v3096, %v3384
        %v3386 = vpop.f32.mrb[0].mxu0
        %v3387 = vpop.f32.mrb[0].mxu0
        %v3388 = vadd.f32 %v3099, %v3387
        %v3389 = vpop.f32.mrb[0].mxu0
        %3390 = vmatprep.mubr.bf16.mxu0 %v2621
        %3391 = vmatmul.mubr.bf16.gmra.mrb[0].mxu0 %v2620
        %v3392 = vpop.f32.mrb[0].mxu0
        %v3393 = vadd.f32 %v3104, %v3392
        %v3394 = vpop.f32.mrb[0].mxu0
        %v3395 = vpop.f32.mrb[0].mxu0
        %v3396 = vadd.f32 %v3107, %v3395
        %v3397 = vpop.f32.mrb[0].mxu0
        %3398 = vmatprep.mubr.bf16.mxu0 %v2625
        %3399 = vmatmul.mubr.bf16.gmra.mrb[0].mxu0 %v2624
        %v3400 = vpop.f32.mrb[0].mxu0
        %v3401 = vadd.f32 %v3112, %v3400
        %v3402 = vpop.f32.mrb[0].mxu0
        %v3403 = vpop.f32.mrb[0].mxu0
        %v3404 = vadd.f32 %v3115, %v3403
        %v3405 = vpop.f32.mrb[0].mxu0
        %3406 = vmatprep.mubr.bf16.mxu0 %v2629
        %3407 = vmatmul.mubr.bf16.gmra.mrb[0].mxu0 %v2628
        %v3408 = vpop.f32.mrb[0].mxu0
        %v3409 = vadd.f32 %v3120, %v3408
        %v3410 = vpop.f32.mrb[0].mxu0
        %v3411 = vpop.f32.mrb[0].mxu0
        %v3412 = vadd.f32 %v3123, %v3411
        %v3413 = vpop.f32.mrb[0].mxu0
        %3414 = vmatprep.mubr.bf16.mxu0 %v2633
        %3415 = vmatmul.mubr.bf16.gmra.mrb[0].mxu0 %v2632
        %v3416 = vpop.f32.mrb[0].mxu0
        %v3417 = vadd.f32 %v3128, %v3416
        %v3418 = vpop.f32.mrb[0].mxu0
        %v3419 = vpop.f32.mrb[0].mxu0
        %v3420 = vadd.f32 %v3131, %v3419
        %v3421 = vpop.f32.mrb[0].mxu0
        %3422 = vmatprep.mubr.bf16.mxu0 %v2637
        %3423 = vmatmul.mubr.bf16.gmra.mrb[0].mxu0 %v2636
        %v3424 = vpop.f32.mrb[0].mxu0
        %v3425 = vadd.f32 %v3136, %v3424
        %v3426 = vpop.f32.mrb[0].mxu0
        %v3427 = vpop.f32.mrb[0].mxu0
        %v3428 = vadd.f32 %v3139, %v3427
        %v3429 = vpop.f32.mrb[0].mxu0
        %3430 = vmatprep.mubr.bf16.mxu0 %v2641
        %3431 = vmatmul.mubr.bf16.gmra.mrb[0].mxu0 %v2640
        %v3432 = vpop.f32.mrb[0].mxu0
        %v3433 = vadd.f32 %v3144, %v3432
        %v3434 = vpop.f32.mrb[0].mxu0
        %v3435 = vpop.f32.mrb[0].mxu0
        %v3436 = vadd.f32 %v3147, %v3435
        %v3437 = vpop.f32.mrb[0].mxu0
        %3438 = vmatprep.mubr.bf16.mxu0 %v2645
        %3439 = vmatmul.mubr.bf16.gmra.mrb[0].mxu0 %v2644
        %v3440 = vpop.f32.mrb[0].mxu0
        %v3441 = vadd.f32 %v3152, %v3440
        %v3442 = vpop.f32.mrb[0].mxu0
        %v3443 = vpop.f32.mrb[0].mxu0
        %v3444 = vadd.f32 %v3155, %v3443
        %v3445 = vpop.f32.mrb[0].mxu0
        %3446 = vmatprep.mubr.bf16.mxu0 %v2649
        %3447 = vmatmul.mubr.bf16.gmra.mrb[0].mxu0 %v2648
        %v3448 = vpop.f32.mrb[0].mxu0
        %v3449 = vadd.f32 %v3160, %v3448
        %v3450 = vpop.f32.mrb[0].mxu0
        %v3451 = vpop.f32.mrb[0].mxu0
        %v3452 = vadd.f32 %v3163, %v3451
        %v3453 = vpop.f32.mrb[0].mxu0
        %3454 = vmatprep.mubr.bf16.mxu0 %v2653
        %3455 = vmatmul.mubr.bf16.gmra.mrb[0].mxu0 %v2652
        %v3456 = vpop.f32.mrb[0].mxu0
        %v3457 = vadd.f32 %v3168, %v3456
        %v3458 = vpop.f32.mrb[0].mxu0
        %v3459 = vpop.f32.mrb[0].mxu0
        %v3460 = vadd.f32 %v3171, %v3459
        %v3461 = vpop.f32.mrb[0].mxu0
        %3462 = vmatprep.mubr.bf16.mxu0 %v2657
        %3463 = vmatmul.mubr.bf16.gmra.mrb[0].mxu0 %v2656
        %v3464 = vpop.f32.mrb[0].mxu0
        %v3465 = vadd.f32 %v3176, %v3464
        %v3466 = vpop.f32.mrb[0].mxu0
        %v3467 = vpop.f32.mrb[0].mxu0
        %v3468 = vadd.f32 %v3179, %v3467
        %v3469 = vpop.f32.mrb[0].mxu0
        %3470 = vmatprep.mubr.bf16.mxu0 %v2661
        %3471 = vmatmul.mubr.bf16.gmra.mrb[0].mxu0 %v2660
        %v3472 = vpop.f32.mrb[0].mxu0
        %v3473 = vadd.f32 %v3184, %v3472
        %v3474 = vpop.f32.mrb[0].mxu0
        %v3475 = vpop.f32.mrb[0].mxu0
        %v3476 = vadd.f32 %v3187, %v3475
        %v3477 = vpop.f32.mrb[0].mxu0
        %3478 = vmatprep.mubr.bf16.mxu0 %v2665
        %3479 = vmatmul.mubr.bf16.gmra.mrb[0].mxu0 %v2664
        %v3480 = vpop.f32.mrb[0].mxu0
        %v3481 = vadd.f32 %v3192, %v3480
        %v3482 = vpop.f32.mrb[0].mxu0
        %v3483 = vpop.f32.mrb[0].mxu0
        %v3484 = vadd.f32 %v3195, %v3483
        %v3485 = vpop.f32.mrb[0].mxu0
        %3486 = vmatprep.mubr.bf16.mxu0 %v2669
        %3487 = vmatmul.mubr.bf16.gmra.mrb[0].mxu0 %v2668
        %v3488 = vpop.f32.mrb[0].mxu0
        %v3489 = vadd.f32 %v3200, %v3488
        %v3490 = vpop.f32.mrb[0].mxu0
        %v3491 = vpop.f32.mrb[0].mxu0
        %v3492 = vadd.f32 %v3203, %v3491
        %v3493 = vpop.f32.mrb[0].mxu0
        %3494 = vmatprep.mubr.bf16.mxu0 %v2673
        %3495 = vmatmul.mubr.bf16.gmra.mrb[0].mxu0 %v2672
        %v3496 = vpop.f32.mrb[0].mxu0
        %v3497 = vadd.f32 %v3208, %v3496
        %v3498 = vpop.f32.mrb[0].mxu0
        %v3499 = vpop.f32.mrb[0].mxu0
        %v3500 = vadd.f32 %v3211, %v3499
        %v3501 = vpop.f32.mrb[0].mxu0
        %3502 = vmatprep.mubr.bf16.mxu0 %v2677
        %3503 = vmatmul.mubr.bf16.gmra.mrb[0].mxu0 %v2676
        %v3504 = vpop.f32.mrb[0].mxu0
        %v3505 = vadd.f32 %v3216, %v3504
        %v3506 = vpop.f32.mrb[0].mxu0
        %v3507 = vpop.f32.mrb[0].mxu0
        %v3508 = vadd.f32 %v3219, %v3507
        %v3509 = vpop.f32.mrb[0].mxu0
        %3510 = vmatprep.mubr.bf16.mxu0 %v2681
        %3511 = vmatmul.mubr.bf16.gmra.mrb[0].mxu0 %v2680
        %v3512 = vpop.f32.mrb[0].mxu0
        %v3513 = vadd.f32 %v3224, %v3512
        %v3514 = vpop.f32.mrb[0].mxu0
        %v3515 = vpop.f32.mrb[0].mxu0
        %v3516 = vadd.f32 %v3227, %v3515
        %v3517 = vpop.f32.mrb[0].mxu0
        %3518 = vmatprep.mubr.bf16.mxu0 %v2685
        %3519 = vmatmul.mubr.bf16.gmra.mrb[0].mxu0 %v2684
        %v3520 = vpop.f32.mrb[0].mxu0
        %v3521 = vadd.f32 %v3232, %v3520
        %v3522 = vpop.f32.mrb[0].mxu0
        %v3523 = vpop.f32.mrb[0].mxu0
        %v3524 = vadd.f32 %v3235, %v3523
        %v3525 = vpop.f32.mrb[0].mxu0
        %3526 = vdwg.mxu0
        %3527 = vst [vmem:[%s250] sm:$0xff] %v3273
        %3528 = vst [vmem:[%s250 + $0x8] sm:$0xff] %v3276
        %3529 = vst [vmem:[%s250 + $0x10] sm:$0xff] %v3281
        %3530 = vst [vmem:[%s250 + $0x18] sm:$0xff] %v3284
        %3531 = vst [vmem:[%s250 + $0x20] sm:$0xff] %v3289
        %3532 = vst [vmem:[%s250 + $0x28] sm:$0xff] %v3292
        %3533 = vst [vmem:[%s250 + $0x30] sm:$0xff] %v3297
        %3534 = vst [vmem:[%s250 + $0x38] sm:$0xff] %v3300
        %3535 = vst [vmem:[%s250 + $0x40] sm:$0xff] %v3305
        %3536 = vst [vmem:[%s250 + $0x48] sm:$0xff] %v3308
        %3537 = vst [vmem:[%s250 + $0x50] sm:$0xff] %v3313
        %3538 = vst [vmem:[%s250 + $0x58] sm:$0xff] %v3316
        %3539 = vst [vmem:[%s250 + $0x60] sm:$0xff] %v3321
        %3540 = vst [vmem:[%s250 + $0x68] sm:$0xff] %v3324
        %3541 = vst [vmem:[%s250 + $0x70] sm:$0xff] %v3329
        %3542 = vst [vmem:[%s250 + $0x78] sm:$0xff] %v3332
        %3543 = vst [vmem:[%s250 + $0x80] sm:$0xff] %v3337
        %3544 = vst [vmem:[%s250 + $0x88] sm:$0xff] %v3340
        %3545 = vst [vmem:[%s250 + $0x90] sm:$0xff] %v3345
        %3546 = vst [vmem:[%s250 + $0x98] sm:$0xff] %v3348
        %3547 = vst [vmem:[%s250 + $0xa0] sm:$0xff] %v3353
        %3548 = vst [vmem:[%s250 + $0xa8] sm:$0xff] %v3356
        %3549 = vst [vmem:[%s250 + $0xb0] sm:$0xff] %v3361
        %3550 = vst [vmem:[%s250 + $0xb8] sm:$0xff] %v3364
        %3551 = vst [vmem:[%s250 + $0xc0] sm:$0xff] %v3369
        %3552 = vst [vmem:[%s250 + $0xc8] sm:$0xff] %v3372
        %3553 = vst [vmem:[%s250 + $0xd0] sm:$0xff] %v3377
        %3554 = vst [vmem:[%s250 + $0xd8] sm:$0xff] %v3380
        %3555 = vst [vmem:[%s250 + $0xe0] sm:$0xff] %v3385
        %3556 = vst [vmem:[%s250 + $0xe8] sm:$0xff] %v3388
        %3557 = vst [vmem:[%s250 + $0xf0] sm:$0xff] %v3393
        %3558 = vst [vmem:[%s250 + $0xf8] sm:$0xff] %v3396
        %3559 = vst [vmem:[%s250 + $0x100] sm:$0xff] %v3401
        %3560 = vst [vmem:[%s250 + $0x108] sm:$0xff] %v3404
        %3561 = vst [vmem:[%s250 + $0x110] sm:$0xff] %v3409
        %3562 = vst [vmem:[%s250 + $0x118] sm:$0xff] %v3412
        %3563 = vst [vmem:[%s250 + $0x120] sm:$0xff] %v3417
        %3564 = vst [vmem:[%s250 + $0x128] sm:$0xff] %v3420
        %3565 = vst [vmem:[%s250 + $0x130] sm:$0xff] %v3425
        %3566 = vst [vmem:[%s250 + $0x138] sm:$0xff] %v3428
        %3567 = vst [vmem:[%s250 + $0x140] sm:$0xff] %v3433
        %3568 = vst [vmem:[%s250 + $0x148] sm:$0xff] %v3436
        %3569 = vst [vmem:[%s250 + $0x150] sm:$0xff] %v3441
        %3570 = vst [vmem:[%s250 + $0x158] sm:$0xff] %v3444
        %3571 = vst [vmem:[%s250 + $0x160] sm:$0xff] %v3449
        %3572 = vst [vmem:[%s250 + $0x168] sm:$0xff] %v3452
        %3573 = vst [vmem:[%s250 + $0x170] sm:$0xff] %v3457
        %3574 = vst [vmem:[%s250 + $0x178] sm:$0xff] %v3460
        %3575 = vst [vmem:[%s250 + $0x180] sm:$0xff] %v3465
        %3576 = vst [vmem:[%s250 + $0x188] sm:$0xff] %v3468
        %3577 = vst [vmem:[%s250 + $0x190] sm:$0xff] %v3473
        %3578 = vst [vmem:[%s250 + $0x198] sm:$0xff] %v3476
        %3579 = vst [vmem:[%s250 + $0x1a0] sm:$0xff] %v3481
        %3580 = vst [vmem:[%s250 + $0x1a8] sm:$0xff] %v3484
        %3581 = vst [vmem:[%s250 + $0x1b0] sm:$0xff] %v3489
        %3582 = vst [vmem:[%s250 + $0x1b8] sm:$0xff] %v3492
        %3583 = vst [vmem:[%s250 + $0x1c0] sm:$0xff] %v3497
        %3584 = vst [vmem:[%s250 + $0x1c8] sm:$0xff] %v3500
        %3585 = vst [vmem:[%s250 + $0x1d0] sm:$0xff] %v3505
        %3586 = vst [vmem:[%s250 + $0x1d8] sm:$0xff] %v3508
        %3587 = vst [vmem:[%s250 + $0x1e0] sm:$0xff] %v3513
        %3588 = vst [vmem:[%s250 + $0x1e8] sm:$0xff] %v3516
        %3589 = vst [vmem:[%s250 + $0x1f0] sm:$0xff] %v3521
        %3590 = vst [vmem:[%s250 + $0x1f8] sm:$0xff] %v3524
        %s3591 = sand.u32 %s119, 1
        %s3592 = scalar_lea.sflag [#allocation4], %s3591
        %s3593 = sand.u32 %s119, 1
        %s3594 = smul.addr %s3593, 512
        %s3595 = scalar_lea.vmem [#allocation8], %s3594
        // Predicated region
        $region49: #{tpu_custom_call.1} parent=35 // pred_check
          %p3596 = pneg %p129
        $region50: #{tpu_custom_call.1} parent=35 // pred_check_branch
          %3598 = sbr.rel (%p3596) target = $region52
        $region51: #{tpu_custom_call.1} parent=35 // pred_region
          %s3599 = smul.u32 64, %s22
          %s3600 = ssub.s32 200, %s3599
          %p3601 = scmp.lt.s32.totalorder %s3600, 64
          %s3602 = scalar_select %p3601, %s3600, 64
          %s3603 = smul.u32 128, %s3602
          %s3605 = ssub.s32 8192, %s3603
          %3606 = vsyncadd %s3592, %s3605
          %p3607 = scmp.ne.s32.totalorder 0, %s3603
          %s3608 = smul.addr %s3599, 128
          %s3609 = scalar_lea.hbm %s4, %s3608
          %s3610 = smul.u32 8, %s3602
          %s3611 = sshll.u32 %s3595, 4
          %s3612 = int_to_ptr.vmem [resolvable:$true] %s3611
          %s3613 = sshll.u32 %s3610, 4
          %3617 = dma.vmem_to_hbm [thread:$0]  (%p3607), %s3612, %s3613, %s3609, %s3592, 128, 128, 8
        $region52: #{tpu_custom_call.1} parent=35 // pred_fallthru
          _
      $region36: #{tpu_custom_call.1} parent=5 // pred_fallthru
        _
      %p3618 = scmp.le.s32.totalorder 2, %s17
      // Predicated region
      $region53: #{tpu_custom_call.1} parent=5 // pred_check
        %p3619 = pneg %p3618
      $region54: #{tpu_custom_call.1} parent=5 // pred_check_branch
        %3621 = sbr.rel (%p3619) target = $region56
      $region55: #{tpu_custom_call.1} parent=5 // pred_region
        %s3622 = ssub.s32 %s17, 2
        // Predicated region
        $region57: #{tpu_custom_call.1} parent=55 // pred_check
          %p3623 = pneg %p135
        $region58: #{tpu_custom_call.1} parent=55 // pred_check_branch
          %3625 = sbr.rel (%p3623) target = $region60
        $region59: #{tpu_custom_call.1} parent=55 // pred_region
          %s3626 = sand.u32 %s120, 1
          %s3627 = scalar_lea.sflag [#allocation4], %s3626
          %s3628 = sand.u32 %s120, 1
          %s3629 = smul.addr %s3628, 512
          %s3630 = scalar_lea.vmem [#allocation8], %s3629
          %3631 = dma.done %s3627, 8192
        $region60: #{tpu_custom_call.1} parent=55 // pred_fallthru
          _
      $region56: #{tpu_custom_call.1} parent=5 // pred_fallthru
        _
    $region6: #{tpu_custom_call.1} parent=1 // loop_footer
      %s21 = sadd.s32 1, %s17
    $region7: #{tpu_custom_call.1} parent=1 // loop_footer_branch
      %16 = sbr.rel target = $region3
    $region8: #{tpu_custom_call.1} parent=1 // loop_exit
      _
    %3632 = vsyncpa [#allocation3], 1
    %s3633 = scalar_lea.sflag [#allocation3], 1
    %3634 = vsyncpa %s3633, 1
    %3635 = vsyncpa [#allocation6], 1
    %3636 = vsyncpa [#allocation4], 1
    %s3637 = scalar_lea.sflag [#allocation4], 1
    %3638 = vsyncpa %s3637, 1

</llo_original>
